<compile_context>
chip_gen: v7x
topology: tpu7x:2x2x1
jax: 0.10.0
libtpu: 0.0.40
codegen_flags: <defaults>
</compile_context>

<pallas_src>
import functools

import jax
import jax.numpy as jnp
from jax import lax
from jax.experimental import pallas as pl
from jax.experimental.pallas import tpu as pltpu

BN_EPS = 1e-5


def _vmem_limit_bytes():
    """96 MiB on 128-MiB-VMEM parts (v5e/v6e), 48 MiB on v7x (64 MiB/TC)."""
    try:
        cap = int(getattr(pltpu.get_tpu_info(), "vmem_capacity_bytes", 0))
    except Exception:  # best-effort hardware query
        cap = 0
    if cap >= 128 * 1024 * 1024:
        return 96 * 1024 * 1024
    return 48 * 1024 * 1024


def _pick_tile_h(Ho, Wo, Cout):
    """Output-row tile for pass 1: tile_h | Ho, and tile_h*Wo is a multiple of
    128 unless the block spans the whole Ho*Wo axis; largest block that keeps
    the pw block a few MiB (so double-buffering survives v7x's 64 MiB VMEM)."""
    cap_bytes = 4 * 1024 * 1024
    cands = [d for d in range(1, Ho + 1)
             if Ho % d == 0 and (d == Ho or (d * Wo) % 128 == 0)]
    fit = [d for d in cands if Cout * d * Wo * 2 <= cap_bytes]
    return max(fit) if fit else min(cands)


def _pick_tile_hw(HoWo, Cout):
    """Lane tile for pass 2 (pure HBM streaming): big, 128-aligned blocks."""
    cap_bytes = 8 * 1024 * 1024
    cands = [d for d in range(1, HoWo + 1)
             if HoWo % d == 0 and (d == HoWo or d % 128 == 0)]
    fit = [d for d in cands if Cout * d * 6 <= cap_bytes]
    return max(fit) if fit else min(cands)


def _make_dwpw_kernel(K, stride, padding, H, W, Cin, Cout, tile_h, Wo):
    Hp, Wp = H + 2 * padding, W + 2 * padding
    L = tile_h * Wo
    inv_cnt = 1.0 / float(L)

    def _ds(start, size):
        if stride == 1:
            return pl.ds(start, size)
        return pl.ds(start, size, stride)

    def kernel(x_ref, wdw_ref, wpw_ref, pw_ref, part_ref, dwf_ref, xpad_ref):
        # x_ref   : (Cin, H, W)    one NCHW sample (N squeezed), resident
        #                          across its h tiles.
        # wdw_ref : (Cin*K*K,)     depthwise taps (SMEM scalars).
        # wpw_ref : (Cout*Cin,)    pointwise taps (SMEM scalars).
        # pw_ref  : (Cout, L)      pre-BN tile, NCHW-flat, lane-dense, bf16.
        # part_ref: (Cout, 2)      [sum, centered M2] BN partials for the tile.
        # dwf_ref : (Cin, L)       depthwise result, flattened (VMEM scratch).
        # xpad_ref: (Cin, Hp, Wp)  zero-padded sample (VMEM scratch).
        ht = pl.program_id(1)
        h0 = pl.multiple_of(ht * (tile_h * stride), tile_h * stride)

        if padding > 0:
            # Zero-pad in VMEM: no jnp.pad HBM round trip in the wrapper.
            # (Refilled every step: cheap, and correct for any grid split.)
            xpad_ref[...] = jnp.zeros((Cin, Hp, Wp), jnp.float32)
            xpad_ref[:, padding:padding + H, padding:padding + W] = x_ref[...]
            src = xpad_ref
        else:
            src = x_ref

        # ---- depthwise KxK conv, one channel at a time.  Each tap is one
        # (strided) VMEM load; weights are SMEM scalars broadcast on the VPU.
        # The (tile_h, Wo) result is scattered row-by-row into dwf_ref, which
        # flattens it into a lane-dense (1, L) NCHW-flat row.
        for c in range(Cin):
            acc = None
            for kh in range(K):
                for kw in range(K):
                    taps = src[c, _ds(h0 + kh, tile_h), _ds(kw, Wo)]
                    term = taps * wdw_ref[(c * K + kh) * K + kw]
                    acc = term if acc is None else acc + term
            for i in range(tile_h):
                dwf_ref[c:c + 1, i * Wo:(i + 1) * Wo] = acc[i:i + 1, :]
        # Depthwise / pointwise conv biases are intentionally omitted: they add
        # per-output-channel constants which training-mode BatchNorm's mean
        # subtraction cancels exactly (see wrapper docstring).

        dw_rows = [dwf_ref[c:c + 1, :] for c in range(Cin)]   # Cin x (1, L)

        # ---- pointwise 1x1 conv as Cin broadcast-FMAs on lane-dense rows
        # (a (L,4)x(4,8) MXU matmul would use <1% of the array and force an
        # extra relayout), fused with per-tile centered BN partials (f32).
        for co in range(Cout):
            r = dw_rows[0] * wpw_ref[co * Cin]
            for c in range(1, Cin):
                r = r + dw_rows[c] * wpw_ref[co * Cin + c]
            s = jnp.sum(r, axis=1, keepdims=True)              # (1, 1)
            mu = s * inv_cnt
            d = r - mu
            m2 = jnp.sum(d * d, axis=1, keepdims=True)         # (1, 1)
            part_ref[co:co + 1, 0:1] = s
            part_ref[co:co + 1, 1:2] = m2
            pw_ref[co:co + 1, :] = r.astype(pw_ref.dtype)      # bf16, dense

    return kernel


def _bn_relu_kernel(pw_ref, scale_ref, shift_ref, o_ref):
    # Fused BN scale/shift + ReLU on the lane-dense NCHW-flat layout.
    x = pw_ref[...].astype(jnp.float32)
    o_ref[...] = jnp.maximum(x * scale_ref[...] + shift_ref[...], 0.0)


def depthwise_separable_conv2d(x_nchw, wdw, bdw, wpw, bpw, gamma, beta,
                               *, stride=1, padding=0):
    """Forward pass of the PyTorch DepthwiseSeparableConv2D module.

    x_nchw: (N, Cin, H, W); wdw: (Cin, 1, K, K); wpw: (Cout, Cin, 1, 1);
    gamma/beta: (Cout,).  Returns (N, Cout, Ho, Wo) float32.

    bdw / bpw are accepted for API parity but have no effect on the output:
    they are per-output-channel constants which training-mode BatchNorm's
    batch-mean subtraction cancels exactly, so they are not shipped to the
    kernels.  TODO(synk): eval-mode BN (running statistics) and the
    running_mean/running_var buffer updates are training-only state that never
    affects this forward output and are not emitted.
    """
    del bdw, bpw
    N, Cin, H, W = x_nchw.shape
    Cout = wpw.shape[0]
    K = wdw.shape[-1]
    Ho = (H + 2 * padding - K) // stride + 1
    Wo = (W + 2 * padding - K) // stride + 1
    HoWo = Ho * Wo

    x = x_nchw.astype(jnp.float32)                         # NCHW, no pad/transpose
    wdw_s = wdw.reshape(Cin * K * K).astype(jnp.float32)   # SMEM scalar taps
    wpw_s = wpw.reshape(Cout * Cin).astype(jnp.float32)    # SMEM scalar taps

    vmem_limit = _vmem_limit_bytes()
    tile_h = _pick_tile_h(Ho, Wo, Cout)
    n_h = Ho // tile_h
    L = tile_h * Wo
    Hp, Wp = H + 2 * padding, W + 2 * padding
    pad_shape = (Cin, Hp, Wp) if padding > 0 else (1, 1, 1)

    # ---- pass 1: depthwise + pointwise conv -> NCHW-flat lane-dense pw (bf16)
    #      plus per-tile centered BN partials.
    pw, partials = pl.pallas_call(
        _make_dwpw_kernel(K, stride, padding, H, W, Cin, Cout, tile_h, Wo),
        out_shape=(
            jax.ShapeDtypeStruct((N, Cout, HoWo), jnp.bfloat16),
            jax.ShapeDtypeStruct((N, n_h, Cout, 2), jnp.float32),
        ),
        grid=(N, n_h),
        in_specs=[
            # Whole sample resident across its h tiles (4 KiB here).
            # TODO(synk): halo-tiled H DMA (manual make_async_copy) for images
            # whose per-sample footprint threatens v7x's 64 MiB VMEM.
            pl.BlockSpec((None, Cin, H, W), lambda n, h: (n, 0, 0, 0)),
            pl.BlockSpec(memory_space=pltpu.MemorySpace.SMEM),
            pl.BlockSpec(memory_space=pltpu.MemorySpace.SMEM),
        ],
        out_specs=(
            pl.BlockSpec((None, Cout, L), lambda n, h: (n, 0, h)),
            pl.BlockSpec((None, None, Cout, 2), lambda n, h: (n, h, 0, 0)),
        ),
        scratch_shapes=[
            pltpu.VMEM((Cin, L), jnp.float32),
            pltpu.VMEM(pad_shape, jnp.float32),
        ],
        compiler_params=pltpu.CompilerParams(
            # h marked "arbitrary": any megacore split then lands on the batch
            # axis, so two v7x cores never DMA the same sample twice.
            dimension_semantics=("parallel", "arbitrary"),
            vmem_limit_bytes=vmem_limit),
    )(x, wdw_s, wpw_s)

    # ---- per-channel BN folding (training mode, biased variance), combining
    #      per-tile centered partials with Chan's parallel-variance rule.
    cnt_tile = jnp.float32(L)
    cnt_all = jnp.float32(N * HoWo)
    tile_sum = partials[..., 0]                            # (N, n_h, Cout)
    tile_m2 = partials[..., 1]                             # (N, n_h, Cout)
    mean = jnp.sum(tile_sum, axis=(0, 1)) / cnt_all        # (Cout,)
    tile_mean = tile_sum / cnt_tile
    m2 = (jnp.sum(tile_m2, axis=(0, 1))
          + jnp.sum(cnt_tile * (tile_mean - mean) ** 2, axis=(0, 1)))
    var = m2 / cnt_all
    scale = gamma.astype(jnp.float32) * lax.rsqrt(var + BN_EPS)
    shift = beta.astype(jnp.float32) - mean * scale

    # ---- pass 2: fused BN + ReLU, elementwise on the NCHW-flat layout; the
    #      final reshape to (N, Cout, Ho, Wo) is free (contiguous).
    #      (pw is bf16 and the output is f32, so input/output aliasing is not
    #      applicable here.)
    tile_hw = _pick_tile_hw(HoWo, Cout)
    n_hw = HoWo // tile_hw
    out_flat = pl.pallas_call(
        _bn_relu_kernel,
        out_shape=jax.ShapeDtypeStruct((N, Cout, HoWo), jnp.float32),
        grid=(N, n_hw),
        in_specs=[
            pl.BlockSpec((None, Cout, tile_hw), lambda n, t: (n, 0, t)),
            pl.BlockSpec((Cout, 1), lambda n, t: (0, 0)),
            pl.BlockSpec((Cout, 1), lambda n, t: (0, 0)),
        ],
        out_specs=pl.BlockSpec((None, Cout, tile_hw), lambda n, t: (n, 0, t)),
        compiler_params=pltpu.CompilerParams(
            dimension_semantics=("parallel", "parallel"),
            vmem_limit_bytes=vmem_limit),
    )(pw, scale.reshape(Cout, 1), shift.reshape(Cout, 1))

    return out_flat.reshape(N, Cout, Ho, Wo)


def _reference(x, wdw, bdw, wpw, bpw, gamma, beta, *, stride, padding):
    Cin = x.shape[1]
    dw = lax.conv_general_dilated(
        x, wdw, (stride, stride), [(padding, padding)] * 2,
        feature_group_count=Cin,
        dimension_numbers=("NCHW", "OIHW", "NCHW")) + bdw[None, :, None, None]
    pw = lax.conv_general_dilated(
        dw, wpw, (1, 1), [(0, 0), (0, 0)],
        dimension_numbers=("NCHW", "OIHW", "NCHW")) + bpw[None, :, None, None]
    mean = jnp.mean(pw, axis=(0, 2, 3), keepdims=True)
    var = jnp.mean((pw - mean) ** 2, axis=(0, 2, 3), keepdims=True)
    y = (pw - mean) * lax.rsqrt(var + BN_EPS) \
        * gamma[None, :, None, None] + beta[None, :, None, None]
    return jnp.maximum(y, 0.0)


if __name__ == "__main__":
    N, Cin, Cout, H, W = 2, 4, 8, 16, 16
    K, stride, padding = 3, 1, 1

    key = jax.random.PRNGKey(0)
    k1, k2, k3, k4, k5 = jax.random.split(key, 5)

    x = jax.random.normal(k1, (N, Cin, H, W), jnp.float32)
    # deterministic synthetic parameters (shapes match nn.Conv2d / BatchNorm2d)
    wdw = jax.random.normal(k2, (Cin, 1, K, K), jnp.float32) * 0.2
    bdw = jax.random.normal(k3, (Cin,), jnp.float32) * 0.1
    wpw = jax.random.normal(k4, (Cout, Cin, 1, 1), jnp.float32) * 0.2
    bpw = jax.random.normal(k5, (Cout,), jnp.float32) * 0.1
    gamma = jnp.ones((Cout,), jnp.float32)   # BatchNorm2d default weight
    beta = jnp.zeros((Cout,), jnp.float32)   # BatchNorm2d default bias

    fn = jax.jit(functools.partial(depthwise_separable_conv2d,
                                   stride=stride, padding=padding))
    out = jax.block_until_ready(fn(x, wdw, bdw, wpw, bpw, gamma, beta))

    ref = _reference(x, wdw, bdw, wpw, bpw, gamma, beta,
                     stride=stride, padding=padding)
    assert out.shape == (N, Cout, H, W), out.shape
    # Tolerance accounts for the bf16 pre-BN intermediate (stats stay f32).
    max_err = float(jnp.max(jnp.abs(out - ref)))
    assert jnp.allclose(out, ref, atol=3e-2, rtol=3e-2), max_err

    print("KERNEL_OK")
</pallas_src>

<mosaic_0001>
module attributes {stable_mosaic.version = 11 : i64} {
  func.func @_bn_relu_kernel(%arg0: i32, %arg1: i32, %arg2: memref<1x8x256xbf16, #tpu.memory_space<vmem>>, %arg3: memref<8x1xf32, #tpu.memory_space<vmem>>, %arg4: memref<8x1xf32, #tpu.memory_space<vmem>>, %arg5: memref<1x8x256xf32, #tpu.memory_space<vmem>>) attributes {dimension_semantics = [#tpu.dimension_semantics<parallel>, #tpu.dimension_semantics<parallel>], iteration_bounds = array<i64: 2, 1>, scalar_prefetch = 0 : i64, scratch_operands = 0 : i64, tpu.core_type = #tpu.core_type<tc>, window_params = [{transform_indices = @transform_0, window_bounds = array<i64: 1, 8, 256>}, {pipeline_mode = #tpu.pipeline_mode<synchronous>, transform_indices = @transform_1, window_bounds = array<i64: 8, 1>}, {pipeline_mode = #tpu.pipeline_mode<synchronous>, transform_indices = @transform_2, window_bounds = array<i64: 8, 1>}, {transform_indices = @transform_3, window_bounds = array<i64: 1, 8, 256>}]} {
    %c0 = arith.constant 0 : index
    %c0_0 = arith.constant 0 : index
    %c0_1 = arith.constant 0 : index
    %0 = vector.load %arg2[%c0, %c0_0, %c0_1] : memref<1x8x256xbf16, #tpu.memory_space<vmem>>, vector<1x8x256xbf16>
    %1 = vector.shape_cast %0 : vector<1x8x256xbf16> to vector<8x256xbf16>
    %2 = arith.extf %1 : vector<8x256xbf16> to vector<8x256xf32>
    %c0_2 = arith.constant 0 : index
    %c0_3 = arith.constant 0 : index
    %3 = vector.load %arg3[%c0_2, %c0_3] : memref<8x1xf32, #tpu.memory_space<vmem>>, vector<8x1xf32>
    %4 = vector.broadcast %3 : vector<8x1xf32> to vector<8x256xf32>
    %5 = arith.mulf %2, %4 : vector<8x256xf32>
    %c0_4 = arith.constant 0 : index
    %c0_5 = arith.constant 0 : index
    %6 = vector.load %arg4[%c0_4, %c0_5] : memref<8x1xf32, #tpu.memory_space<vmem>>, vector<8x1xf32>
    %7 = vector.broadcast %6 : vector<8x1xf32> to vector<8x256xf32>
    %8 = arith.addf %5, %7 : vector<8x256xf32>
    %cst = arith.constant 0.000000e+00 : f32
    %9 = vector.broadcast %cst : f32 to vector<8x256xf32>
    %10 = arith.maximumf %8, %9 : vector<8x256xf32>
    %c0_6 = arith.constant 0 : index
    %c0_7 = arith.constant 0 : index
    %c0_8 = arith.constant 0 : index
    %11 = vector.load %arg5[%c0_6, %c0_7, %c0_8] : memref<1x8x256xf32, #tpu.memory_space<vmem>>, vector<1x8x256xf32>
    %12 = vector.shape_cast %11 : vector<1x8x256xf32> to vector<8x256xf32>
    %13 = vector.shape_cast %10 : vector<8x256xf32> to vector<1x8x256xf32>
    tpu.vector_store %arg5[%c0_6, %c0_7, %c0_8], %13 {strides = array<i32>} : memref<1x8x256xf32, #tpu.memory_space<vmem>>, vector<1x8x256xf32>,
    return
  }
  func.func @transform_0(%arg0: i32, %arg1: i32) -> (i32, i32, i32) {
    %c0_i32 = arith.constant 0 : i32
    %c0_i32_0 = arith.constant 0 : i32
    return %arg0, %c0_i32, %arg1 : i32, i32, i32
  }
  func.func @transform_1(%arg0: i32, %arg1: i32) -> (i32, i32) {
    %c0_i32 = arith.constant 0 : i32
    %c0_i32_0 = arith.constant 0 : i32
    %c0_i32_1 = arith.constant 0 : i32
    return %c0_i32, %c0_i32_0 : i32, i32
  }
  func.func @transform_2(%arg0: i32, %arg1: i32) -> (i32, i32) {
    %c0_i32 = arith.constant 0 : i32
    %c0_i32_0 = arith.constant 0 : i32
    %c0_i32_1 = arith.constant 0 : i32
    return %c0_i32, %c0_i32_0 : i32, i32
  }
  func.func @transform_3(%arg0: i32, %arg1: i32) -> (i32, i32, i32) {
    %c0_i32 = arith.constant 0 : i32
    %c0_i32_0 = arith.constant 0 : i32
    return %arg0, %c0_i32, %arg1 : i32, i32, i32
  }
}

module attributes {stable_mosaic.version = 11 : i64} {
  func.func @kernel(%arg0: i32, %arg1: i32, %arg2: memref<1x4x16x16xf32, #tpu.memory_space<vmem>>, %arg3: memref<36xf32, #tpu.memory_space<smem>>, %arg4: memref<32xf32, #tpu.memory_space<smem>>, %arg5: memref<1x8x256xbf16, #tpu.memory_space<vmem>>, %arg6: memref<1x1x8x2xf32, #tpu.memory_space<vmem>>, %arg7: memref<4x256xf32, #tpu.memory_space<vmem>>, %arg8: memref<4x18x18xf32, #tpu.memory_space<vmem>>) attributes {dimension_semantics = [#tpu.dimension_semantics<parallel>, #tpu.dimension_semantics<arbitrary>], iteration_bounds = array<i64: 2, 1>, scalar_prefetch = 0 : i64, scratch_operands = 2 : i64, tpu.core_type = #tpu.core_type<tc>, window_params = [{transform_indices = @transform_0, window_bounds = array<i64: 1, 4, 16, 16>}, {transform_indices = @transform_1, window_bounds = array<i64: 36>}, {transform_indices = @transform_2, window_bounds = array<i64: 32>}, {transform_indices = @transform_3, window_bounds = array<i64: 1, 8, 256>}, {transform_indices = @transform_4, window_bounds = array<i64: 1, 1, 8, 2>}]} {
    %c16_i32 = arith.constant 16 : i32
    %0 = arith.muli %arg1, %c16_i32 : i32
    %1 = tpu.assume_multiple %0, 16 : i32
    %cst = arith.constant 0.000000e+00 : f32
    %2 = vector.broadcast %cst : f32 to vector<4x18x18xf32>
    %c0 = arith.constant 0 : index
    %c0_0 = arith.constant 0 : index
    %c0_1 = arith.constant 0 : index
    %3 = vector.load %arg8[%c0, %c0_0, %c0_1] : memref<4x18x18xf32, #tpu.memory_space<vmem>>, vector<4x18x18xf32>
    tpu.vector_store %arg8[%c0, %c0_0, %c0_1], %2 {strides = array<i32>} : memref<4x18x18xf32, #tpu.memory_space<vmem>>, vector<4x18x18xf32>,
    %c0_2 = arith.constant 0 : index
    %c0_3 = arith.constant 0 : index
    %c0_4 = arith.constant 0 : index
    %c0_5 = arith.constant 0 : index
    %4 = vector.load %arg2[%c0_2, %c0_3, %c0_4, %c0_5] : memref<1x4x16x16xf32, #tpu.memory_space<vmem>>, vector<1x4x16x16xf32>
    %5 = vector.shape_cast %4 : vector<1x4x16x16xf32> to vector<4x16x16xf32>
    %c0_6 = arith.constant 0 : index
    %c1 = arith.constant 1 : index
    %c1_7 = arith.constant 1 : index
    %6 = vector.load %arg8[%c0_6, %c1, %c1_7] : memref<4x18x18xf32, #tpu.memory_space<vmem>>, vector<4x16x16xf32>
    tpu.vector_store %arg8[%c0_6, %c1, %c1_7], %5 {strides = array<i32>} : memref<4x18x18xf32, #tpu.memory_space<vmem>>, vector<4x16x16xf32>,
    %c0_i32 = arith.constant 0 : i32
    %7 = arith.addi %1, %c0_i32 : i32
    %c0_8 = arith.constant 0 : index
    %8 = arith.index_cast %7 : i32 to index
    %c0_9 = arith.constant 0 : index
    %9 = vector.load %arg8[%c0_8, %8, %c0_9] : memref<4x18x18xf32, #tpu.memory_space<vmem>>, vector<1x16x16xf32>
    %10 = vector.shape_cast %9 : vector<1x16x16xf32> to vector<16x16xf32>
    %c0_10 = arith.constant 0 : index
    %11 = memref.load %arg3[%c0_10] : memref<36xf32, #tpu.memory_space<smem>>
    %12 = vector.broadcast %11 : f32 to vector<16x16xf32>
    %13 = arith.mulf %10, %12 : vector<16x16xf32>
    %c0_i32_11 = arith.constant 0 : i32
    %14 = arith.addi %1, %c0_i32_11 : i32
    %c0_12 = arith.constant 0 : index
    %15 = arith.index_cast %14 : i32 to index
    %c1_13 = arith.constant 1 : index
    %16 = vector.load %arg8[%c0_12, %15, %c1_13] : memref<4x18x18xf32, #tpu.memory_space<vmem>>, vector<1x16x16xf32>
    %17 = vector.shape_cast %16 : vector<1x16x16xf32> to vector<16x16xf32>
    %c1_14 = arith.constant 1 : index
    %18 = memref.load %arg3[%c1_14] : memref<36xf32, #tpu.memory_space<smem>>
    %19 = vector.broadcast %18 : f32 to vector<16x16xf32>
    %20 = arith.mulf %17, %19 : vector<16x16xf32>
    %21 = arith.addf %13, %20 : vector<16x16xf32>
    %c0_i32_15 = arith.constant 0 : i32
    %22 = arith.addi %1, %c0_i32_15 : i32
    %c0_16 = arith.constant 0 : index
    %23 = arith.index_cast %22 : i32 to index
    %c2 = arith.constant 2 : index
    %24 = vector.load %arg8[%c0_16, %23, %c2] : memref<4x18x18xf32, #tpu.memory_space<vmem>>, vector<1x16x16xf32>
    %25 = vector.shape_cast %24 : vector<1x16x16xf32> to vector<16x16xf32>
    %c2_17 = arith.constant 2 : index
    %26 = memref.load %arg3[%c2_17] : memref<36xf32, #tpu.memory_space<smem>>
    %27 = vector.broadcast %26 : f32 to vector<16x16xf32>
    %28 = arith.mulf %25, %27 : vector<16x16xf32>
    %29 = arith.addf %21, %28 : vector<16x16xf32>
    %c1_i32 = arith.constant 1 : i32
    %30 = arith.addi %1, %c1_i32 : i32
    %c0_18 = arith.constant 0 : index
    %31 = arith.index_cast %30 : i32 to index
    %c0_19 = arith.constant 0 : index
    %32 = vector.load %arg8[%c0_18, %31, %c0_19] : memref<4x18x18xf32, #tpu.memory_space<vmem>>, vector<1x16x16xf32>
    %33 = vector.shape_cast %32 : vector<1x16x16xf32> to vector<16x16xf32>
    %c3 = arith.constant 3 : index
    %34 = memref.load %arg3[%c3] : memref<36xf32, #tpu.memory_space<smem>>
    %35 = vector.broadcast %34 : f32 to vector<16x16xf32>
    %36 = arith.mulf %33, %35 : vector<16x16xf32>
    %37 = arith.addf %29, %36 : vector<16x16xf32>
    %c1_i32_20 = arith.constant 1 : i32
    %38 = arith.addi %1, %c1_i32_20 : i32
    %c0_21 = arith.constant 0 : index
    %39 = arith.index_cast %38 : i32 to index
    %c1_22 = arith.constant 1 : index
    %40 = vector.load %arg8[%c0_21, %39, %c1_22] : memref<4x18x18xf32, #tpu.memory_space<vmem>>, vector<1x16x16xf32>
    %41 = vector.shape_cast %40 : vector<1x16x16xf32> to vector<16x16xf32>
    %c4 = arith.constant 4 : index
    %42 = memref.load %arg3[%c4] : memref<36xf32, #tpu.memory_space<smem>>
    %43 = vector.broadcast %42 : f32 to vector<16x16xf32>
    %44 = arith.mulf %41, %43 : vector<16x16xf32>
    %45 = arith.addf %37, %44 : vector<16x16xf32>
    %c1_i32_23 = arith.constant 1 : i32
    %46 = arith.addi %1, %c1_i32_23 : i32
    %c0_24 = arith.constant 0 : index
    %47 = arith.index_cast %46 : i32 to index
    %c2_25 = arith.constant 2 : index
    %48 = vector.load %arg8[%c0_24, %47, %c2_25] : memref<4x18x18xf32, #tpu.memory_space<vmem>>, vector<1x16x16xf32>
    %49 = vector.shape_cast %48 : vector<1x16x16xf32> to vector<16x16xf32>
    %c5 = arith.constant 5 : index
    %50 = memref.load %arg3[%c5] : memref<36xf32, #tpu.memory_space<smem>>
    %51 = vector.broadcast %50 : f32 to vector<16x16xf32>
    %52 = arith.mulf %49, %51 : vector<16x16xf32>
    %53 = arith.addf %45, %52 : vector<16x16xf32>
    %c2_i32 = arith.constant 2 : i32
    %54 = arith.addi %1, %c2_i32 : i32
    %c0_26 = arith.constant 0 : index
    %55 = arith.index_cast %54 : i32 to index
    %c0_27 = arith.constant 0 : index
    %56 = vector.load %arg8[%c0_26, %55, %c0_27] : memref<4x18x18xf32, #tpu.memory_space<vmem>>, vector<1x16x16xf32>
    %57 = vector.shape_cast %56 : vector<1x16x16xf32> to vector<16x16xf32>
    %c6 = arith.constant 6 : index
    %58 = memref.load %arg3[%c6] : memref<36xf32, #tpu.memory_space<smem>>
    %59 = vector.broadcast %58 : f32 to vector<16x16xf32>
    %60 = arith.mulf %57, %59 : vector<16x16xf32>
    %61 = arith.addf %53, %60 : vector<16x16xf32>
    %c2_i32_28 = arith.constant 2 : i32
    %62 = arith.addi %1, %c2_i32_28 : i32
    %c0_29 = arith.constant 0 : index
    %63 = arith.index_cast %62 : i32 to index
    %c1_30 = arith.constant 1 : index
    %64 = vector.load %arg8[%c0_29, %63, %c1_30] : memref<4x18x18xf32, #tpu.memory_space<vmem>>, vector<1x16x16xf32>
    %65 = vector.shape_cast %64 : vector<1x16x16xf32> to vector<16x16xf32>
    %c7 = arith.constant 7 : index
    %66 = memref.load %arg3[%c7] : memref<36xf32, #tpu.memory_space<smem>>
    %67 = vector.broadcast %66 : f32 to vector<16x16xf32>
    %68 = arith.mulf %65, %67 : vector<16x16xf32>
    %69 = arith.addf %61, %68 : vector<16x16xf32>
    %c2_i32_31 = arith.constant 2 : i32
    %70 = arith.addi %1, %c2_i32_31 : i32
    %c0_32 = arith.constant 0 : index
    %71 = arith.index_cast %70 : i32 to index
    %c2_33 = arith.constant 2 : index
    %72 = vector.load %arg8[%c0_32, %71, %c2_33] : memref<4x18x18xf32, #tpu.memory_space<vmem>>, vector<1x16x16xf32>
    %73 = vector.shape_cast %72 : vector<1x16x16xf32> to vector<16x16xf32>
    %c8 = arith.constant 8 : index
    %74 = memref.load %arg3[%c8] : memref<36xf32, #tpu.memory_space<smem>>
    %75 = vector.broadcast %74 : f32 to vector<16x16xf32>
    %76 = arith.mulf %73, %75 : vector<16x16xf32>
    %77 = arith.addf %69, %76 : vector<16x16xf32>
    %78 = vector.extract_strided_slice %77 {offsets = [0, 0], sizes = [1, 16], strides = [1, 1]} : vector<16x16xf32> to vector<1x16xf32>
    %c0_34 = arith.constant 0 : index
    %c0_35 = arith.constant 0 : index
    %79 = vector.load %arg7[%c0_34, %c0_35] : memref<4x256xf32, #tpu.memory_space<vmem>>, vector<1x16xf32>
    tpu.vector_store %arg7[%c0_34, %c0_35], %78 {strides = array<i32>} : memref<4x256xf32, #tpu.memory_space<vmem>>, vector<1x16xf32>,
    %80 = vector.extract_strided_slice %77 {offsets = [1, 0], sizes = [1, 16], strides = [1, 1]} : vector<16x16xf32> to vector<1x16xf32>
    %c0_36 = arith.constant 0 : index
    %c16 = arith.constant 16 : index
    %81 = vector.load %arg7[%c0_36, %c16] : memref<4x256xf32, #tpu.memory_space<vmem>>, vector<1x16xf32>
    tpu.vector_store %arg7[%c0_36, %c16], %80 {strides = array<i32>} : memref<4x256xf32, #tpu.memory_space<vmem>>, vector<1x16xf32>,
    %82 = vector.extract_strided_slice %77 {offsets = [2, 0], sizes = [1, 16], strides = [1, 1]} : vector<16x16xf32> to vector<1x16xf32>
    %c0_37 = arith.constant 0 : index
    %c32 = arith.constant 32 : index
    %83 = vector.load %arg7[%c0_37, %c32] : memref<4x256xf32, #tpu.memory_space<vmem>>, vector<1x16xf32>
    tpu.vector_store %arg7[%c0_37, %c32], %82 {strides = array<i32>} : memref<4x256xf32, #tpu.memory_space<vmem>>, vector<1x16xf32>,
    %84 = vector.extract_strided_slice %77 {offsets = [3, 0], sizes = [1, 16], strides = [1, 1]} : vector<16x16xf32> to vector<1x16xf32>
    %c0_38 = arith.constant 0 : index
    %c48 = arith.constant 48 : index
    %85 = vector.load %arg7[%c0_38, %c48] : memref<4x256xf32, #tpu.memory_space<vmem>>, vector<1x16xf32>
    tpu.vector_store %arg7[%c0_38, %c48], %84 {strides = array<i32>} : memref<4x256xf32, #tpu.memory_space<vmem>>, vector<1x16xf32>,
    %86 = vector.extract_strided_slice %77 {offsets = [4, 0], sizes = [1, 16], strides = [1, 1]} : vector<16x16xf32> to vector<1x16xf32>
    %c0_39 = arith.constant 0 : index
    %c64 = arith.constant 64 : index
    %87 = vector.load %arg7[%c0_39, %c64] : memref<4x256xf32, #tpu.memory_space<vmem>>, vector<1x16xf32>
    tpu.vector_store %arg7[%c0_39, %c64], %86 {strides = array<i32>} : memref<4x256xf32, #tpu.memory_space<vmem>>, vector<1x16xf32>,
    %88 = vector.extract_strided_slice %77 {offsets = [5, 0], sizes = [1, 16], strides = [1, 1]} : vector<16x16xf32> to vector<1x16xf32>
    %c0_40 = arith.constant 0 : index
    %c80 = arith.constant 80 : index
    %89 = vector.load %arg7[%c0_40, %c80] : memref<4x256xf32, #tpu.memory_space<vmem>>, vector<1x16xf32>
    tpu.vector_store %arg7[%c0_40, %c80], %88 {strides = array<i32>} : memref<4x256xf32, #tpu.memory_space<vmem>>, vector<1x16xf32>,
    %90 = vector.extract_strided_slice %77 {offsets = [6, 0], sizes = [1, 16], strides = [1, 1]} : vector<16x16xf32> to vector<1x16xf32>
    %c0_41 = arith.constant 0 : index
    %c96 = arith.constant 96 : index
    %91 = vector.load %arg7[%c0_41, %c96] : memref<4x256xf32, #tpu.memory_space<vmem>>, vector<1x16xf32>
    tpu.vector_store %arg7[%c0_41, %c96], %90 {strides = array<i32>} : memref<4x256xf32, #tpu.memory_space<vmem>>, vector<1x16xf32>,
    %92 = vector.extract_strided_slice %77 {offsets = [7, 0], sizes = [1, 16], strides = [1, 1]} : vector<16x16xf32> to vector<1x16xf32>
    %c0_42 = arith.constant 0 : index
    %c112 = arith.constant 112 : index
    %93 = vector.load %arg7[%c0_42, %c112] : memref<4x256xf32, #tpu.memory_space<vmem>>, vector<1x16xf32>
    tpu.vector_store %arg7[%c0_42, %c112], %92 {strides = array<i32>} : memref<4x256xf32, #tpu.memory_space<vmem>>, vector<1x16xf32>,
    %94 = vector.extract_strided_slice %77 {offsets = [8, 0], sizes = [1, 16], strides = [1, 1]} : vector<16x16xf32> to vector<1x16xf32>
    %c0_43 = arith.constant 0 : index
    %c128 = arith.constant 128 : index
    %95 = vector.load %arg7[%c0_43, %c128] : memref<4x256xf32, #tpu.memory_space<vmem>>, vector<1x16xf32>
    tpu.vector_store %arg7[%c0_43, %c128], %94 {strides = array<i32>} : memref<4x256xf32, #tpu.memory_space<vmem>>, vector<1x16xf32>,
    %96 = vector.extract_strided_slice %77 {offsets = [9, 0], sizes = [1, 16], strides = [1, 1]} : vector<16x16xf32> to vector<1x16xf32>
    %c0_44 = arith.constant 0 : index
    %c144 = arith.constant 144 : index
    %97 = vector.load %arg7[%c0_44, %c144] : memref<4x256xf32, #tpu.memory_space<vmem>>, vector<1x16xf32>
    tpu.vector_store %arg7[%c0_44, %c144], %96 {strides = array<i32>} : memref<4x256xf32, #tpu.memory_space<vmem>>, vector<1x16xf32>,
    %98 = vector.extract_strided_slice %77 {offsets = [10, 0], sizes = [1, 16], strides = [1, 1]} : vector<16x16xf32> to vector<1x16xf32>
    %c0_45 = arith.constant 0 : index
    %c160 = arith.constant 160 : index
    %99 = vector.load %arg7[%c0_45, %c160] : memref<4x256xf32, #tpu.memory_space<vmem>>, vector<1x16xf32>
    tpu.vector_store %arg7[%c0_45, %c160], %98 {strides = array<i32>} : memref<4x256xf32, #tpu.memory_space<vmem>>, vector<1x16xf32>,
    %100 = vector.extract_strided_slice %77 {offsets = [11, 0], sizes = [1, 16], strides = [1, 1]} : vector<16x16xf32> to vector<1x16xf32>
    %c0_46 = arith.constant 0 : index
    %c176 = arith.constant 176 : index
    %101 = vector.load %arg7[%c0_46, %c176] : memref<4x256xf32, #tpu.memory_space<vmem>>, vector<1x16xf32>
    tpu.vector_store %arg7[%c0_46, %c176], %100 {strides = array<i32>} : memref<4x256xf32, #tpu.memory_space<vmem>>, vector<1x16xf32>,
    %102 = vector.extract_strided_slice %77 {offsets = [12, 0], sizes = [1, 16], strides = [1, 1]} : vector<16x16xf32> to vector<1x16xf32>
    %c0_47 = arith.constant 0 : index
    %c192 = arith.constant 192 : index
    %103 = vector.load %arg7[%c0_47, %c192] : memref<4x256xf32, #tpu.memory_space<vmem>>, vector<1x16xf32>
    tpu.vector_store %arg7[%c0_47, %c192], %102 {strides = array<i32>} : memref<4x256xf32, #tpu.memory_space<vmem>>, vector<1x16xf32>,
    %104 = vector.extract_strided_slice %77 {offsets = [13, 0], sizes = [1, 16], strides = [1, 1]} : vector<16x16xf32> to vector<1x16xf32>
    %c0_48 = arith.constant 0 : index
    %c208 = arith.constant 208 : index
    %105 = vector.load %arg7[%c0_48, %c208] : memref<4x256xf32, #tpu.memory_space<vmem>>, vector<1x16xf32>
    tpu.vector_store %arg7[%c0_48, %c208], %104 {strides = array<i32>} : memref<4x256xf32, #tpu.memory_space<vmem>>, vector<1x16xf32>,
    %106 = vector.extract_strided_slice %77 {offsets = [14, 0], sizes = [1, 16], strides = [1, 1]} : vector<16x16xf32> to vector<1x16xf32>
    %c0_49 = arith.constant 0 : index
    %c224 = arith.constant 224 : index
    %107 = vector.load %arg7[%c0_49, %c224] : memref<4x256xf32, #tpu.memory_space<vmem>>, vector<1x16xf32>
    tpu.vector_store %arg7[%c0_49, %c224], %106 {strides = array<i32>} : memref<4x256xf32, #tpu.memory_space<vmem>>, vector<1x16xf32>,
    %108 = vector.extract_strided_slice %77 {offsets = [15, 0], sizes = [1, 16], strides = [1, 1]} : vector<16x16xf32> to vector<1x16xf32>
    %c0_50 = arith.constant 0 : index
    %c240 = arith.constant 240 : index
    %109 = vector.load %arg7[%c0_50, %c240] : memref<4x256xf32, #tpu.memory_space<vmem>>, vector<1x16xf32>
    tpu.vector_store %arg7[%c0_50, %c240], %108 {strides = array<i32>} : memref<4x256xf32, #tpu.memory_space<vmem>>, vector<1x16xf32>,
    %c0_i32_51 = arith.constant 0 : i32
    %110 = arith.addi %1, %c0_i32_51 : i32
    %c1_52 = arith.constant 1 : index
    %111 = arith.index_cast %110 : i32 to index
    %c0_53 = arith.constant 0 : index
    %112 = vector.load %arg8[%c1_52, %111, %c0_53] : memref<4x18x18xf32, #tpu.memory_space<vmem>>, vector<1x16x16xf32>
    %113 = vector.shape_cast %112 : vector<1x16x16xf32> to vector<16x16xf32>
    %c9 = arith.constant 9 : index
    %114 = memref.load %arg3[%c9] : memref<36xf32, #tpu.memory_space<smem>>
    %115 = vector.broadcast %114 : f32 to vector<16x16xf32>
    %116 = arith.mulf %113, %115 : vector<16x16xf32>
    %c0_i32_54 = arith.constant 0 : i32
    %117 = arith.addi %1, %c0_i32_54 : i32
    %c1_55 = arith.constant 1 : index
    %118 = arith.index_cast %117 : i32 to index
    %c1_56 = arith.constant 1 : index
    %119 = vector.load %arg8[%c1_55, %118, %c1_56] : memref<4x18x18xf32, #tpu.memory_space<vmem>>, vector<1x16x16xf32>
    %120 = vector.shape_cast %119 : vector<1x16x16xf32> to vector<16x16xf32>
    %c10 = arith.constant 10 : index
    %121 = memref.load %arg3[%c10] : memref<36xf32, #tpu.memory_space<smem>>
    %122 = vector.broadcast %121 : f32 to vector<16x16xf32>
    %123 = arith.mulf %120, %122 : vector<16x16xf32>
    %124 = arith.addf %116, %123 : vector<16x16xf32>
    %c0_i32_57 = arith.constant 0 : i32
    %125 = arith.addi %1, %c0_i32_57 : i32
    %c1_58 = arith.constant 1 : index
    %126 = arith.index_cast %125 : i32 to index
    %c2_59 = arith.constant 2 : index
    %127 = vector.load %arg8[%c1_58, %126, %c2_59] : memref<4x18x18xf32, #tpu.memory_space<vmem>>, vector<1x16x16xf32>
    %128 = vector.shape_cast %127 : vector<1x16x16xf32> to vector<16x16xf32>
    %c11 = arith.constant 11 : index
    %129 = memref.load %arg3[%c11] : memref<36xf32, #tpu.memory_space<smem>>
    %130 = vector.broadcast %129 : f32 to vector<16x16xf32>
    %131 = arith.mulf %128, %130 : vector<16x16xf32>
    %132 = arith.addf %124, %131 : vector<16x16xf32>
    %c1_i32_60 = arith.constant 1 : i32
    %133 = arith.addi %1, %c1_i32_60 : i32
    %c1_61 = arith.constant 1 : index
    %134 = arith.index_cast %133 : i32 to index
    %c0_62 = arith.constant 0 : index
    %135 = vector.load %arg8[%c1_61, %134, %c0_62] : memref<4x18x18xf32, #tpu.memory_space<vmem>>, vector<1x16x16xf32>
    %136 = vector.shape_cast %135 : vector<1x16x16xf32> to vector<16x16xf32>
    %c12 = arith.constant 12 : index
    %137 = memref.load %arg3[%c12] : memref<36xf32, #tpu.memory_space<smem>>
    %138 = vector.broadcast %137 : f32 to vector<16x16xf32>
    %139 = arith.mulf %136, %138 : vector<16x16xf32>
    %140 = arith.addf %132, %139 : vector<16x16xf32>
    %c1_i32_63 = arith.constant 1 : i32
    %141 = arith.addi %1, %c1_i32_63 : i32
    %c1_64 = arith.constant 1 : index
    %142 = arith.index_cast %141 : i32 to index
    %c1_65 = arith.constant 1 : index
    %143 = vector.load %arg8[%c1_64, %142, %c1_65] : memref<4x18x18xf32, #tpu.memory_space<vmem>>, vector<1x16x16xf32>
    %144 = vector.shape_cast %143 : vector<1x16x16xf32> to vector<16x16xf32>
    %c13 = arith.constant 13 : index
    %145 = memref.load %arg3[%c13] : memref<36xf32, #tpu.memory_space<smem>>
    %146 = vector.broadcast %145 : f32 to vector<16x16xf32>
    %147 = arith.mulf %144, %146 : vector<16x16xf32>
    %148 = arith.addf %140, %147 : vector<16x16xf32>
    %c1_i32_66 = arith.constant 1 : i32
    %149 = arith.addi %1, %c1_i32_66 : i32
    %c1_67 = arith.constant 1 : index
    %150 = arith.index_cast %149 : i32 to index
    %c2_68 = arith.constant 2 : index
    %151 = vector.load %arg8[%c1_67, %150, %c2_68] : memref<4x18x18xf32, #tpu.memory_space<vmem>>, vector<1x16x16xf32>
    %152 = vector.shape_cast %151 : vector<1x16x16xf32> to vector<16x16xf32>
    %c14 = arith.constant 14 : index
    %153 = memref.load %arg3[%c14] : memref<36xf32, #tpu.memory_space<smem>>
    %154 = vector.broadcast %153 : f32 to vector<16x16xf32>
    %155 = arith.mulf %152, %154 : vector<16x16xf32>
    %156 = arith.addf %148, %155 : vector<16x16xf32>
    %c2_i32_69 = arith.constant 2 : i32
    %157 = arith.addi %1, %c2_i32_69 : i32
    %c1_70 = arith.constant 1 : index
    %158 = arith.index_cast %157 : i32 to index
    %c0_71 = arith.constant 0 : index
    %159 = vector.load %arg8[%c1_70, %158, %c0_71] : memref<4x18x18xf32, #tpu.memory_space<vmem>>, vector<1x16x16xf32>
    %160 = vector.shape_cast %159 : vector<1x16x16xf32> to vector<16x16xf32>
    %c15 = arith.constant 15 : index
    %161 = memref.load %arg3[%c15] : memref<36xf32, #tpu.memory_space<smem>>
    %162 = vector.broadcast %161 : f32 to vector<16x16xf32>
    %163 = arith.mulf %160, %162 : vector<16x16xf32>
    %164 = arith.addf %156, %163 : vector<16x16xf32>
    %c2_i32_72 = arith.constant 2 : i32
    %165 = arith.addi %1, %c2_i32_72 : i32
    %c1_73 = arith.constant 1 : index
    %166 = arith.index_cast %165 : i32 to index
    %c1_74 = arith.constant 1 : index
    %167 = vector.load %arg8[%c1_73, %166, %c1_74] : memref<4x18x18xf32, #tpu.memory_space<vmem>>, vector<1x16x16xf32>
    %168 = vector.shape_cast %167 : vector<1x16x16xf32> to vector<16x16xf32>
    %c16_75 = arith.constant 16 : index
    %169 = memref.load %arg3[%c16_75] : memref<36xf32, #tpu.memory_space<smem>>
    %170 = vector.broadcast %169 : f32 to vector<16x16xf32>
    %171 = arith.mulf %168, %170 : vector<16x16xf32>
    %172 = arith.addf %164, %171 : vector<16x16xf32>
    %c2_i32_76 = arith.constant 2 : i32
    %173 = arith.addi %1, %c2_i32_76 : i32
    %c1_77 = arith.constant 1 : index
    %174 = arith.index_cast %173 : i32 to index
    %c2_78 = arith.constant 2 : index
    %175 = vector.load %arg8[%c1_77, %174, %c2_78] : memref<4x18x18xf32, #tpu.memory_space<vmem>>, vector<1x16x16xf32>
    %176 = vector.shape_cast %175 : vector<1x16x16xf32> to vector<16x16xf32>
    %c17 = arith.constant 17 : index
    %177 = memref.load %arg3[%c17] : memref<36xf32, #tpu.memory_space<smem>>
    %178 = vector.broadcast %177 : f32 to vector<16x16xf32>
    %179 = arith.mulf %176, %178 : vector<16x16xf32>
    %180 = arith.addf %172, %179 : vector<16x16xf32>
    %181 = vector.extract_strided_slice %180 {offsets = [0, 0], sizes = [1, 16], strides = [1, 1]} : vector<16x16xf32> to vector<1x16xf32>
    %c1_79 = arith.constant 1 : index
    %c0_80 = arith.constant 0 : index
    %182 = vector.load %arg7[%c1_79, %c0_80] : memref<4x256xf32, #tpu.memory_space<vmem>>, vector<1x16xf32>
    tpu.vector_store %arg7[%c1_79, %c0_80], %181 {strides = array<i32>} : memref<4x256xf32, #tpu.memory_space<vmem>>, vector<1x16xf32>,
    %183 = vector.extract_strided_slice %180 {offsets = [1, 0], sizes = [1, 16], strides = [1, 1]} : vector<16x16xf32> to vector<1x16xf32>
    %c1_81 = arith.constant 1 : index
    %c16_82 = arith.constant 16 : index
    %184 = vector.load %arg7[%c1_81, %c16_82] : memref<4x256xf32, #tpu.memory_space<vmem>>, vector<1x16xf32>
    tpu.vector_store %arg7[%c1_81, %c16_82], %183 {strides = array<i32>} : memref<4x256xf32, #tpu.memory_space<vmem>>, vector<1x16xf32>,
    %185 = vector.extract_strided_slice %180 {offsets = [2, 0], sizes = [1, 16], strides = [1, 1]} : vector<16x16xf32> to vector<1x16xf32>
    %c1_83 = arith.constant 1 : index
    %c32_84 = arith.constant 32 : index
    %186 = vector.load %arg7[%c1_83, %c32_84] : memref<4x256xf32, #tpu.memory_space<vmem>>, vector<1x16xf32>
    tpu.vector_store %arg7[%c1_83, %c32_84], %185 {strides = array<i32>} : memref<4x256xf32, #tpu.memory_space<vmem>>, vector<1x16xf32>,
    %187 = vector.extract_strided_slice %180 {offsets = [3, 0], sizes = [1, 16], strides = [1, 1]} : vector<16x16xf32> to vector<1x16xf32>
    %c1_85 = arith.constant 1 : index
    %c48_86 = arith.constant 48 : index
    %188 = vector.load %arg7[%c1_85, %c48_86] : memref<4x256xf32, #tpu.memory_space<vmem>>, vector<1x16xf32>
    tpu.vector_store %arg7[%c1_85, %c48_86], %187 {strides = array<i32>} : memref<4x256xf32, #tpu.memory_space<vmem>>, vector<1x16xf32>,
    %189 = vector.extract_strided_slice %180 {offsets = [4, 0], sizes = [1, 16], strides = [1, 1]} : vector<16x16xf32> to vector<1x16xf32>
    %c1_87 = arith.constant 1 : index
    %c64_88 = arith.constant 64 : index
    %190 = vector.load %arg7[%c1_87, %c64_88] : memref<4x256xf32, #tpu.memory_space<vmem>>, vector<1x16xf32>
    tpu.vector_store %arg7[%c1_87, %c64_88], %189 {strides = array<i32>} : memref<4x256xf32, #tpu.memory_space<vmem>>, vector<1x16xf32>,
    %191 = vector.extract_strided_slice %180 {offsets = [5, 0], sizes = [1, 16], strides = [1, 1]} : vector<16x16xf32> to vector<1x16xf32>
    %c1_89 = arith.constant 1 : index
    %c80_90 = arith.constant 80 : index
    %192 = vector.load %arg7[%c1_89, %c80_90] : memref<4x256xf32, #tpu.memory_space<vmem>>, vector<1x16xf32>
    tpu.vector_store %arg7[%c1_89, %c80_90], %191 {strides = array<i32>} : memref<4x256xf32, #tpu.memory_space<vmem>>, vector<1x16xf32>,
    %193 = vector.extract_strided_slice %180 {offsets = [6, 0], sizes = [1, 16], strides = [1, 1]} : vector<16x16xf32> to vector<1x16xf32>
    %c1_91 = arith.constant 1 : index
    %c96_92 = arith.constant 96 : index
    %194 = vector.load %arg7[%c1_91, %c96_92] : memref<4x256xf32, #tpu.memory_space<vmem>>, vector<1x16xf32>
    tpu.vector_store %arg7[%c1_91, %c96_92], %193 {strides = array<i32>} : memref<4x256xf32, #tpu.memory_space<vmem>>, vector<1x16xf32>,
    %195 = vector.extract_strided_slice %180 {offsets = [7, 0], sizes = [1, 16], strides = [1, 1]} : vector<16x16xf32> to vector<1x16xf32>
    %c1_93 = arith.constant 1 : index
    %c112_94 = arith.constant 112 : index
    %196 = vector.load %arg7[%c1_93, %c112_94] : memref<4x256xf32, #tpu.memory_space<vmem>>, vector<1x16xf32>
    tpu.vector_store %arg7[%c1_93, %c112_94], %195 {strides = array<i32>} : memref<4x256xf32, #tpu.memory_space<vmem>>, vector<1x16xf32>,
    %197 = vector.extract_strided_slice %180 {offsets = [8, 0], sizes = [1, 16], strides = [1, 1]} : vector<16x16xf32> to vector<1x16xf32>
    %c1_95 = arith.constant 1 : index
    %c128_96 = arith.constant 128 : index
    %198 = vector.load %arg7[%c1_95, %c128_96] : memref<4x256xf32, #tpu.memory_space<vmem>>, vector<1x16xf32>
    tpu.vector_store %arg7[%c1_95, %c128_96], %197 {strides = array<i32>} : memref<4x256xf32, #tpu.memory_space<vmem>>, vector<1x16xf32>,
    %199 = vector.extract_strided_slice %180 {offsets = [9, 0], sizes = [1, 16], strides = [1, 1]} : vector<16x16xf32> to vector<1x16xf32>
    %c1_97 = arith.constant 1 : index
    %c144_98 = arith.constant 144 : index
    %200 = vector.load %arg7[%c1_97, %c144_98] : memref<4x256xf32, #tpu.memory_space<vmem>>, vector<1x16xf32>
    tpu.vector_store %arg7[%c1_97, %c144_98], %199 {strides = array<i32>} : memref<4x256xf32, #tpu.memory_space<vmem>>, vector<1x16xf32>,
    %201 = vector.extract_strided_slice %180 {offsets = [10, 0], sizes = [1, 16], strides = [1, 1]} : vector<16x16xf32> to vector<1x16xf32>
    %c1_99 = arith.constant 1 : index
    %c160_100 = arith.constant 160 : index
    %202 = vector.load %arg7[%c1_99, %c160_100] : memref<4x256xf32, #tpu.memory_space<vmem>>, vector<1x16xf32>
    tpu.vector_store %arg7[%c1_99, %c160_100], %201 {strides = array<i32>} : memref<4x256xf32, #tpu.memory_space<vmem>>, vector<1x16xf32>,
    %203 = vector.extract_strided_slice %180 {offsets = [11, 0], sizes = [1, 16], strides = [1, 1]} : vector<16x16xf32> to vector<1x16xf32>
    %c1_101 = arith.constant 1 : index
    %c176_102 = arith.constant 176 : index
    %204 = vector.load %arg7[%c1_101, %c176_102] : memref<4x256xf32, #tpu.memory_space<vmem>>, vector<1x16xf32>
    tpu.vector_store %arg7[%c1_101, %c176_102], %203 {strides = array<i32>} : memref<4x256xf32, #tpu.memory_space<vmem>>, vector<1x16xf32>,
    %205 = vector.extract_strided_slice %180 {offsets = [12, 0], sizes = [1, 16], strides = [1, 1]} : vector<16x16xf32> to vector<1x16xf32>
    %c1_103 = arith.constant 1 : index
    %c192_104 = arith.constant 192 : index
    %206 = vector.load %arg7[%c1_103, %c192_104] : memref<4x256xf32, #tpu.memory_space<vmem>>, vector<1x16xf32>
    tpu.vector_store %arg7[%c1_103, %c192_104], %205 {strides = array<i32>} : memref<4x256xf32, #tpu.memory_space<vmem>>, vector<1x16xf32>,
    %207 = vector.extract_strided_slice %180 {offsets = [13, 0], sizes = [1, 16], strides = [1, 1]} : vector<16x16xf32> to vector<1x16xf32>
    %c1_105 = arith.constant 1 : index
    %c208_106 = arith.constant 208 : index
    %208 = vector.load %arg7[%c1_105, %c208_106] : memref<4x256xf32, #tpu.memory_space<vmem>>, vector<1x16xf32>
    tpu.vector_store %arg7[%c1_105, %c208_106], %207 {strides = array<i32>} : memref<4x256xf32, #tpu.memory_space<vmem>>, vector<1x16xf32>,
    %209 = vector.extract_strided_slice %180 {offsets = [14, 0], sizes = [1, 16], strides = [1, 1]} : vector<16x16xf32> to vector<1x16xf32>
    %c1_107 = arith.constant 1 : index
    %c224_108 = arith.constant 224 : index
    %210 = vector.load %arg7[%c1_107, %c224_108] : memref<4x256xf32, #tpu.memory_space<vmem>>, vector<1x16xf32>
    tpu.vector_store %arg7[%c1_107, %c224_108], %209 {strides = array<i32>} : memref<4x256xf32, #tpu.memory_space<vmem>>, vector<1x16xf32>,
    %211 = vector.extract_strided_slice %180 {offsets = [15, 0], sizes = [1, 16], strides = [1, 1]} : vector<16x16xf32> to vector<1x16xf32>
    %c1_109 = arith.constant 1 : index
    %c240_110 = arith.constant 240 : index
    %212 = vector.load %arg7[%c1_109, %c240_110] : memref<4x256xf32, #tpu.memory_space<vmem>>, vector<1x16xf32>
    tpu.vector_store %arg7[%c1_109, %c240_110], %211 {strides = array<i32>} : memref<4x256xf32, #tpu.memory_space<vmem>>, vector<1x16xf32>,
    %c0_i32_111 = arith.constant 0 : i32
    %213 = arith.addi %1, %c0_i32_111 : i32
    %c2_112 = arith.constant 2 : index
    %214 = arith.index_cast %213 : i32 to index
    %c0_113 = arith.constant 0 : index
    %215 = vector.load %arg8[%c2_112, %214, %c0_113] : memref<4x18x18xf32, #tpu.memory_space<vmem>>, vector<1x16x16xf32>
    %216 = vector.shape_cast %215 : vector<1x16x16xf32> to vector<16x16xf32>
    %c18 = arith.constant 18 : index
    %217 = memref.load %arg3[%c18] : memref<36xf32, #tpu.memory_space<smem>>
    %218 = vector.broadcast %217 : f32 to vector<16x16xf32>
    %219 = arith.mulf %216, %218 : vector<16x16xf32>
    %c0_i32_114 = arith.constant 0 : i32
    %220 = arith.addi %1, %c0_i32_114 : i32
    %c2_115 = arith.constant 2 : index
    %221 = arith.index_cast %220 : i32 to index
    %c1_116 = arith.constant 1 : index
    %222 = vector.load %arg8[%c2_115, %221, %c1_116] : memref<4x18x18xf32, #tpu.memory_space<vmem>>, vector<1x16x16xf32>
    %223 = vector.shape_cast %222 : vector<1x16x16xf32> to vector<16x16xf32>
    %c19 = arith.constant 19 : index
    %224 = memref.load %arg3[%c19] : memref<36xf32, #tpu.memory_space<smem>>
    %225 = vector.broadcast %224 : f32 to vector<16x16xf32>
    %226 = arith.mulf %223, %225 : vector<16x16xf32>
    %227 = arith.addf %219, %226 : vector<16x16xf32>
    %c0_i32_117 = arith.constant 0 : i32
    %228 = arith.addi %1, %c0_i32_117 : i32
    %c2_118 = arith.constant 2 : index
    %229 = arith.index_cast %228 : i32 to index
    %c2_119 = arith.constant 2 : index
    %230 = vector.load %arg8[%c2_118, %229, %c2_119] : memref<4x18x18xf32, #tpu.memory_space<vmem>>, vector<1x16x16xf32>
    %231 = vector.shape_cast %230 : vector<1x16x16xf32> to vector<16x16xf32>
    %c20 = arith.constant 20 : index
    %232 = memref.load %arg3[%c20] : memref<36xf32, #tpu.memory_space<smem>>
    %233 = vector.broadcast %232 : f32 to vector<16x16xf32>
    %234 = arith.mulf %231, %233 : vector<16x16xf32>
    %235 = arith.addf %227, %234 : vector<16x16xf32>
    %c1_i32_120 = arith.constant 1 : i32
    %236 = arith.addi %1, %c1_i32_120 : i32
    %c2_121 = arith.constant 2 : index
    %237 = arith.index_cast %236 : i32 to index
    %c0_122 = arith.constant 0 : index
    %238 = vector.load %arg8[%c2_121, %237, %c0_122] : memref<4x18x18xf32, #tpu.memory_space<vmem>>, vector<1x16x16xf32>
    %239 = vector.shape_cast %238 : vector<1x16x16xf32> to vector<16x16xf32>
    %c21 = arith.constant 21 : index
    %240 = memref.load %arg3[%c21] : memref<36xf32, #tpu.memory_space<smem>>
    %241 = vector.broadcast %240 : f32 to vector<16x16xf32>
    %242 = arith.mulf %239, %241 : vector<16x16xf32>
    %243 = arith.addf %235, %242 : vector<16x16xf32>
    %c1_i32_123 = arith.constant 1 : i32
    %244 = arith.addi %1, %c1_i32_123 : i32
    %c2_124 = arith.constant 2 : index
    %245 = arith.index_cast %244 : i32 to index
    %c1_125 = arith.constant 1 : index
    %246 = vector.load %arg8[%c2_124, %245, %c1_125] : memref<4x18x18xf32, #tpu.memory_space<vmem>>, vector<1x16x16xf32>
    %247 = vector.shape_cast %246 : vector<1x16x16xf32> to vector<16x16xf32>
    %c22 = arith.constant 22 : index
    %248 = memref.load %arg3[%c22] : memref<36xf32, #tpu.memory_space<smem>>
    %249 = vector.broadcast %248 : f32 to vector<16x16xf32>
    %250 = arith.mulf %247, %249 : vector<16x16xf32>
    %251 = arith.addf %243, %250 : vector<16x16xf32>
    %c1_i32_126 = arith.constant 1 : i32
    %252 = arith.addi %1, %c1_i32_126 : i32
    %c2_127 = arith.constant 2 : index
    %253 = arith.index_cast %252 : i32 to index
    %c2_128 = arith.constant 2 : index
    %254 = vector.load %arg8[%c2_127, %253, %c2_128] : memref<4x18x18xf32, #tpu.memory_space<vmem>>, vector<1x16x16xf32>
    %255 = vector.shape_cast %254 : vector<1x16x16xf32> to vector<16x16xf32>
    %c23 = arith.constant 23 : index
    %256 = memref.load %arg3[%c23] : memref<36xf32, #tpu.memory_space<smem>>
    %257 = vector.broadcast %256 : f32 to vector<16x16xf32>
    %258 = arith.mulf %255, %257 : vector<16x16xf32>
    %259 = arith.addf %251, %258 : vector<16x16xf32>
    %c2_i32_129 = arith.constant 2 : i32
    %260 = arith.addi %1, %c2_i32_129 : i32
    %c2_130 = arith.constant 2 : index
    %261 = arith.index_cast %260 : i32 to index
    %c0_131 = arith.constant 0 : index
    %262 = vector.load %arg8[%c2_130, %261, %c0_131] : memref<4x18x18xf32, #tpu.memory_space<vmem>>, vector<1x16x16xf32>
    %263 = vector.shape_cast %262 : vector<1x16x16xf32> to vector<16x16xf32>
    %c24 = arith.constant 24 : index
    %264 = memref.load %arg3[%c24] : memref<36xf32, #tpu.memory_space<smem>>
    %265 = vector.broadcast %264 : f32 to vector<16x16xf32>
    %266 = arith.mulf %263, %265 : vector<16x16xf32>
    %267 = arith.addf %259, %266 : vector<16x16xf32>
    %c2_i32_132 = arith.constant 2 : i32
    %268 = arith.addi %1, %c2_i32_132 : i32
    %c2_133 = arith.constant 2 : index
    %269 = arith.index_cast %268 : i32 to index
    %c1_134 = arith.constant 1 : index
    %270 = vector.load %arg8[%c2_133, %269, %c1_134] : memref<4x18x18xf32, #tpu.memory_space<vmem>>, vector<1x16x16xf32>
    %271 = vector.shape_cast %270 : vector<1x16x16xf32> to vector<16x16xf32>
    %c25 = arith.constant 25 : index
    %272 = memref.load %arg3[%c25] : memref<36xf32, #tpu.memory_space<smem>>
    %273 = vector.broadcast %272 : f32 to vector<16x16xf32>
    %274 = arith.mulf %271, %273 : vector<16x16xf32>
    %275 = arith.addf %267, %274 : vector<16x16xf32>
    %c2_i32_135 = arith.constant 2 : i32
    %276 = arith.addi %1, %c2_i32_135 : i32
    %c2_136 = arith.constant 2 : index
    %277 = arith.index_cast %276 : i32 to index
    %c2_137 = arith.constant 2 : index
    %278 = vector.load %arg8[%c2_136, %277, %c2_137] : memref<4x18x18xf32, #tpu.memory_space<vmem>>, vector<1x16x16xf32>
    %279 = vector.shape_cast %278 : vector<1x16x16xf32> to vector<16x16xf32>
    %c26 = arith.constant 26 : index
    %280 = memref.load %arg3[%c26] : memref<36xf32, #tpu.memory_space<smem>>
    %281 = vector.broadcast %280 : f32 to vector<16x16xf32>
    %282 = arith.mulf %279, %281 : vector<16x16xf32>
    %283 = arith.addf %275, %282 : vector<16x16xf32>
    %284 = vector.extract_strided_slice %283 {offsets = [0, 0], sizes = [1, 16], strides = [1, 1]} : vector<16x16xf32> to vector<1x16xf32>
    %c2_138 = arith.constant 2 : index
    %c0_139 = arith.constant 0 : index
    %285 = vector.load %arg7[%c2_138, %c0_139] : memref<4x256xf32, #tpu.memory_space<vmem>>, vector<1x16xf32>
    tpu.vector_store %arg7[%c2_138, %c0_139], %284 {strides = array<i32>} : memref<4x256xf32, #tpu.memory_space<vmem>>, vector<1x16xf32>,
    %286 = vector.extract_strided_slice %283 {offsets = [1, 0], sizes = [1, 16], strides = [1, 1]} : vector<16x16xf32> to vector<1x16xf32>
    %c2_140 = arith.constant 2 : index
    %c16_141 = arith.constant 16 : index
    %287 = vector.load %arg7[%c2_140, %c16_141] : memref<4x256xf32, #tpu.memory_space<vmem>>, vector<1x16xf32>
    tpu.vector_store %arg7[%c2_140, %c16_141], %286 {strides = array<i32>} : memref<4x256xf32, #tpu.memory_space<vmem>>, vector<1x16xf32>,
    %288 = vector.extract_strided_slice %283 {offsets = [2, 0], sizes = [1, 16], strides = [1, 1]} : vector<16x16xf32> to vector<1x16xf32>
    %c2_142 = arith.constant 2 : index
    %c32_143 = arith.constant 32 : index
    %289 = vector.load %arg7[%c2_142, %c32_143] : memref<4x256xf32, #tpu.memory_space<vmem>>, vector<1x16xf32>
    tpu.vector_store %arg7[%c2_142, %c32_143], %288 {strides = array<i32>} : memref<4x256xf32, #tpu.memory_space<vmem>>, vector<1x16xf32>,
    %290 = vector.extract_strided_slice %283 {offsets = [3, 0], sizes = [1, 16], strides = [1, 1]} : vector<16x16xf32> to vector<1x16xf32>
    %c2_144 = arith.constant 2 : index
    %c48_145 = arith.constant 48 : index
    %291 = vector.load %arg7[%c2_144, %c48_145] : memref<4x256xf32, #tpu.memory_space<vmem>>, vector<1x16xf32>
    tpu.vector_store %arg7[%c2_144, %c48_145], %290 {strides = array<i32>} : memref<4x256xf32, #tpu.memory_space<vmem>>, vector<1x16xf32>,
    %292 = vector.extract_strided_slice %283 {offsets = [4, 0], sizes = [1, 16], strides = [1, 1]} : vector<16x16xf32> to vector<1x16xf32>
    %c2_146 = arith.constant 2 : index
    %c64_147 = arith.constant 64 : index
    %293 = vector.load %arg7[%c2_146, %c64_147] : memref<4x256xf32, #tpu.memory_space<vmem>>, vector<1x16xf32>
    tpu.vector_store %arg7[%c2_146, %c64_147], %292 {strides = array<i32>} : memref<4x256xf32, #tpu.memory_space<vmem>>, vector<1x16xf32>,
    %294 = vector.extract_strided_slice %283 {offsets = [5, 0], sizes = [1, 16], strides = [1, 1]} : vector<16x16xf32> to vector<1x16xf32>
    %c2_148 = arith.constant 2 : index
    %c80_149 = arith.constant 80 : index
    %295 = vector.load %arg7[%c2_148, %c80_149] : memref<4x256xf32, #tpu.memory_space<vmem>>, vector<1x16xf32>
    tpu.vector_store %arg7[%c2_148, %c80_149], %294 {strides = array<i32>} : memref<4x256xf32, #tpu.memory_space<vmem>>, vector<1x16xf32>,
    %296 = vector.extract_strided_slice %283 {offsets = [6, 0], sizes = [1, 16], strides = [1, 1]} : vector<16x16xf32> to vector<1x16xf32>
    %c2_150 = arith.constant 2 : index
    %c96_151 = arith.constant 96 : index
    %297 = vector.load %arg7[%c2_150, %c96_151] : memref<4x256xf32, #tpu.memory_space<vmem>>, vector<1x16xf32>
    tpu.vector_store %arg7[%c2_150, %c96_151], %296 {strides = array<i32>} : memref<4x256xf32, #tpu.memory_space<vmem>>, vector<1x16xf32>,
    %298 = vector.extract_strided_slice %283 {offsets = [7, 0], sizes = [1, 16], strides = [1, 1]} : vector<16x16xf32> to vector<1x16xf32>
    %c2_152 = arith.constant 2 : index
    %c112_153 = arith.constant 112 : index
    %299 = vector.load %arg7[%c2_152, %c112_153] : memref<4x256xf32, #tpu.memory_space<vmem>>, vector<1x16xf32>
    tpu.vector_store %arg7[%c2_152, %c112_153], %298 {strides = array<i32>} : memref<4x256xf32, #tpu.memory_space<vmem>>, vector<1x16xf32>,
    %300 = vector.extract_strided_slice %283 {offsets = [8, 0], sizes = [1, 16], strides = [1, 1]} : vector<16x16xf32> to vector<1x16xf32>
    %c2_154 = arith.constant 2 : index
    %c128_155 = arith.constant 128 : index
    %301 = vector.load %arg7[%c2_154, %c128_155] : memref<4x256xf32, #tpu.memory_space<vmem>>, vector<1x16xf32>
    tpu.vector_store %arg7[%c2_154, %c128_155], %300 {strides = array<i32>} : memref<4x256xf32, #tpu.memory_space<vmem>>, vector<1x16xf32>,
    %302 = vector.extract_strided_slice %283 {offsets = [9, 0], sizes = [1, 16], strides = [1, 1]} : vector<16x16xf32> to vector<1x16xf32>
    %c2_156 = arith.constant 2 : index
    %c144_157 = arith.constant 144 : index
    %303 = vector.load %arg7[%c2_156, %c144_157] : memref<4x256xf32, #tpu.memory_space<vmem>>, vector<1x16xf32>
    tpu.vector_store %arg7[%c2_156, %c144_157], %302 {strides = array<i32>} : memref<4x256xf32, #tpu.memory_space<vmem>>, vector<1x16xf32>,
    %304 = vector.extract_strided_slice %283 {offsets = [10, 0], sizes = [1, 16], strides = [1, 1]} : vector<16x16xf32> to vector<1x16xf32>
    %c2_158 = arith.constant 2 : index
    %c160_159 = arith.constant 160 : index
    %305 = vector.load %arg7[%c2_158, %c160_159] : memref<4x256xf32, #tpu.memory_space<vmem>>, vector<1x16xf32>
    tpu.vector_store %arg7[%c2_158, %c160_159], %304 {strides = array<i32>} : memref<4x256xf32, #tpu.memory_space<vmem>>, vector<1x16xf32>,
    %306 = vector.extract_strided_slice %283 {offsets = [11, 0], sizes = [1, 16], strides = [1, 1]} : vector<16x16xf32> to vector<1x16xf32>
    %c2_160 = arith.constant 2 : index
    %c176_161 = arith.constant 176 : index
    %307 = vector.load %arg7[%c2_160, %c176_161] : memref<4x256xf32, #tpu.memory_space<vmem>>, vector<1x16xf32>
    tpu.vector_store %arg7[%c2_160, %c176_161], %306 {strides = array<i32>} : memref<4x256xf32, #tpu.memory_space<vmem>>, vector<1x16xf32>,
    %308 = vector.extract_strided_slice %283 {offsets = [12, 0], sizes = [1, 16], strides = [1, 1]} : vector<16x16xf32> to vector<1x16xf32>
    %c2_162 = arith.constant 2 : index
    %c192_163 = arith.constant 192 : index
    %309 = vector.load %arg7[%c2_162, %c192_163] : memref<4x256xf32, #tpu.memory_space<vmem>>, vector<1x16xf32>
    tpu.vector_store %arg7[%c2_162, %c192_163], %308 {strides = array<i32>} : memref<4x256xf32, #tpu.memory_space<vmem>>, vector<1x16xf32>,
    %310 = vector.extract_strided_slice %283 {offsets = [13, 0], sizes = [1, 16], strides = [1, 1]} : vector<16x16xf32> to vector<1x16xf32>
    %c2_164 = arith.constant 2 : index
    %c208_165 = arith.constant 208 : index
    %311 = vector.load %arg7[%c2_164, %c208_165] : memref<4x256xf32, #tpu.memory_space<vmem>>, vector<1x16xf32>
    tpu.vector_store %arg7[%c2_164, %c208_165], %310 {strides = array<i32>} : memref<4x256xf32, #tpu.memory_space<vmem>>, vector<1x16xf32>,
    %312 = vector.extract_strided_slice %283 {offsets = [14, 0], sizes = [1, 16], strides = [1, 1]} : vector<16x16xf32> to vector<1x16xf32>
    %c2_166 = arith.constant 2 : index
    %c224_167 = arith.constant 224 : index
    %313 = vector.load %arg7[%c2_166, %c224_167] : memref<4x256xf32, #tpu.memory_space<vmem>>, vector<1x16xf32>
    tpu.vector_store %arg7[%c2_166, %c224_167], %312 {strides = array<i32>} : memref<4x256xf32, #tpu.memory_space<vmem>>, vector<1x16xf32>,
    %314 = vector.extract_strided_slice %283 {offsets = [15, 0], sizes = [1, 16], strides = [1, 1]} : vector<16x16xf32> to vector<1x16xf32>
    %c2_168 = arith.constant 2 : index
    %c240_169 = arith.constant 240 : index
    %315 = vector.load %arg7[%c2_168, %c240_169] : memref<4x256xf32, #tpu.memory_space<vmem>>, vector<1x16xf32>
    tpu.vector_store %arg7[%c2_168, %c240_169], %314 {strides = array<i32>} : memref<4x256xf32, #tpu.memory_space<vmem>>, vector<1x16xf32>,
    %c0_i32_170 = arith.constant 0 : i32
    %316 = arith.addi %1, %c0_i32_170 : i32
    %c3_171 = arith.constant 3 : index
    %317 = arith.index_cast %316 : i32 to index
    %c0_172 = arith.constant 0 : index
    %318 = vector.load %arg8[%c3_171, %317, %c0_172] : memref<4x18x18xf32, #tpu.memory_space<vmem>>, vector<1x16x16xf32>
    %319 = vector.shape_cast %318 : vector<1x16x16xf32> to vector<16x16xf32>
    %c27 = arith.constant 27 : index
    %320 = memref.load %arg3[%c27] : memref<36xf32, #tpu.memory_space<smem>>
    %321 = vector.broadcast %320 : f32 to vector<16x16xf32>
    %322 = arith.mulf %319, %321 : vector<16x16xf32>
    %c0_i32_173 = arith.constant 0 : i32
    %323 = arith.addi %1, %c0_i32_173 : i32
    %c3_174 = arith.constant 3 : index
    %324 = arith.index_cast %323 : i32 to index
    %c1_175 = arith.constant 1 : index
    %325 = vector.load %arg8[%c3_174, %324, %c1_175] : memref<4x18x18xf32, #tpu.memory_space<vmem>>, vector<1x16x16xf32>
    %326 = vector.shape_cast %325 : vector<1x16x16xf32> to vector<16x16xf32>
    %c28 = arith.constant 28 : index
    %327 = memref.load %arg3[%c28] : memref<36xf32, #tpu.memory_space<smem>>
    %328 = vector.broadcast %327 : f32 to vector<16x16xf32>
    %329 = arith.mulf %326, %328 : vector<16x16xf32>
    %330 = arith.addf %322, %329 : vector<16x16xf32>
    %c0_i32_176 = arith.constant 0 : i32
    %331 = arith.addi %1, %c0_i32_176 : i32
    %c3_177 = arith.constant 3 : index
    %332 = arith.index_cast %331 : i32 to index
    %c2_178 = arith.constant 2 : index
    %333 = vector.load %arg8[%c3_177, %332, %c2_178] : memref<4x18x18xf32, #tpu.memory_space<vmem>>, vector<1x16x16xf32>
    %334 = vector.shape_cast %333 : vector<1x16x16xf32> to vector<16x16xf32>
    %c29 = arith.constant 29 : index
    %335 = memref.load %arg3[%c29] : memref<36xf32, #tpu.memory_space<smem>>
    %336 = vector.broadcast %335 : f32 to vector<16x16xf32>
    %337 = arith.mulf %334, %336 : vector<16x16xf32>
    %338 = arith.addf %330, %337 : vector<16x16xf32>
    %c1_i32_179 = arith.constant 1 : i32
    %339 = arith.addi %1, %c1_i32_179 : i32
    %c3_180 = arith.constant 3 : index
    %340 = arith.index_cast %339 : i32 to index
    %c0_181 = arith.constant 0 : index
    %341 = vector.load %arg8[%c3_180, %340, %c0_181] : memref<4x18x18xf32, #tpu.memory_space<vmem>>, vector<1x16x16xf32>
    %342 = vector.shape_cast %341 : vector<1x16x16xf32> to vector<16x16xf32>
    %c30 = arith.constant 30 : index
    %343 = memref.load %arg3[%c30] : memref<36xf32, #tpu.memory_space<smem>>
    %344 = vector.broadcast %343 : f32 to vector<16x16xf32>
    %345 = arith.mulf %342, %344 : vector<16x16xf32>
    %346 = arith.addf %338, %345 : vector<16x16xf32>
    %c1_i32_182 = arith.constant 1 : i32
    %347 = arith.addi %1, %c1_i32_182 : i32
    %c3_183 = arith.constant 3 : index
    %348 = arith.index_cast %347 : i32 to index
    %c1_184 = arith.constant 1 : index
    %349 = vector.load %arg8[%c3_183, %348, %c1_184] : memref<4x18x18xf32, #tpu.memory_space<vmem>>, vector<1x16x16xf32>
    %350 = vector.shape_cast %349 : vector<1x16x16xf32> to vector<16x16xf32>
    %c31 = arith.constant 31 : index
    %351 = memref.load %arg3[%c31] : memref<36xf32, #tpu.memory_space<smem>>
    %352 = vector.broadcast %351 : f32 to vector<16x16xf32>
    %353 = arith.mulf %350, %352 : vector<16x16xf32>
    %354 = arith.addf %346, %353 : vector<16x16xf32>
    %c1_i32_185 = arith.constant 1 : i32
    %355 = arith.addi %1, %c1_i32_185 : i32
    %c3_186 = arith.constant 3 : index
    %356 = arith.index_cast %355 : i32 to index
    %c2_187 = arith.constant 2 : index
    %357 = vector.load %arg8[%c3_186, %356, %c2_187] : memref<4x18x18xf32, #tpu.memory_space<vmem>>, vector<1x16x16xf32>
    %358 = vector.shape_cast %357 : vector<1x16x16xf32> to vector<16x16xf32>
    %c32_188 = arith.constant 32 : index
    %359 = memref.load %arg3[%c32_188] : memref<36xf32, #tpu.memory_space<smem>>
    %360 = vector.broadcast %359 : f32 to vector<16x16xf32>
    %361 = arith.mulf %358, %360 : vector<16x16xf32>
    %362 = arith.addf %354, %361 : vector<16x16xf32>
    %c2_i32_189 = arith.constant 2 : i32
    %363 = arith.addi %1, %c2_i32_189 : i32
    %c3_190 = arith.constant 3 : index
    %364 = arith.index_cast %363 : i32 to index
    %c0_191 = arith.constant 0 : index
    %365 = vector.load %arg8[%c3_190, %364, %c0_191] : memref<4x18x18xf32, #tpu.memory_space<vmem>>, vector<1x16x16xf32>
    %366 = vector.shape_cast %365 : vector<1x16x16xf32> to vector<16x16xf32>
    %c33 = arith.constant 33 : index
    %367 = memref.load %arg3[%c33] : memref<36xf32, #tpu.memory_space<smem>>
    %368 = vector.broadcast %367 : f32 to vector<16x16xf32>
    %369 = arith.mulf %366, %368 : vector<16x16xf32>
    %370 = arith.addf %362, %369 : vector<16x16xf32>
    %c2_i32_192 = arith.constant 2 : i32
    %371 = arith.addi %1, %c2_i32_192 : i32
    %c3_193 = arith.constant 3 : index
    %372 = arith.index_cast %371 : i32 to index
    %c1_194 = arith.constant 1 : index
    %373 = vector.load %arg8[%c3_193, %372, %c1_194] : memref<4x18x18xf32, #tpu.memory_space<vmem>>, vector<1x16x16xf32>
    %374 = vector.shape_cast %373 : vector<1x16x16xf32> to vector<16x16xf32>
    %c34 = arith.constant 34 : index
    %375 = memref.load %arg3[%c34] : memref<36xf32, #tpu.memory_space<smem>>
    %376 = vector.broadcast %375 : f32 to vector<16x16xf32>
    %377 = arith.mulf %374, %376 : vector<16x16xf32>
    %378 = arith.addf %370, %377 : vector<16x16xf32>
    %c2_i32_195 = arith.constant 2 : i32
    %379 = arith.addi %1, %c2_i32_195 : i32
    %c3_196 = arith.constant 3 : index
    %380 = arith.index_cast %379 : i32 to index
    %c2_197 = arith.constant 2 : index
    %381 = vector.load %arg8[%c3_196, %380, %c2_197] : memref<4x18x18xf32, #tpu.memory_space<vmem>>, vector<1x16x16xf32>
    %382 = vector.shape_cast %381 : vector<1x16x16xf32> to vector<16x16xf32>
    %c35 = arith.constant 35 : index
    %383 = memref.load %arg3[%c35] : memref<36xf32, #tpu.memory_space<smem>>
    %384 = vector.broadcast %383 : f32 to vector<16x16xf32>
    %385 = arith.mulf %382, %384 : vector<16x16xf32>
    %386 = arith.addf %378, %385 : vector<16x16xf32>
    %387 = vector.extract_strided_slice %386 {offsets = [0, 0], sizes = [1, 16], strides = [1, 1]} : vector<16x16xf32> to vector<1x16xf32>
    %c3_198 = arith.constant 3 : index
    %c0_199 = arith.constant 0 : index
    %388 = vector.load %arg7[%c3_198, %c0_199] : memref<4x256xf32, #tpu.memory_space<vmem>>, vector<1x16xf32>
    tpu.vector_store %arg7[%c3_198, %c0_199], %387 {strides = array<i32>} : memref<4x256xf32, #tpu.memory_space<vmem>>, vector<1x16xf32>,
    %389 = vector.extract_strided_slice %386 {offsets = [1, 0], sizes = [1, 16], strides = [1, 1]} : vector<16x16xf32> to vector<1x16xf32>
    %c3_200 = arith.constant 3 : index
    %c16_201 = arith.constant 16 : index
    %390 = vector.load %arg7[%c3_200, %c16_201] : memref<4x256xf32, #tpu.memory_space<vmem>>, vector<1x16xf32>
    tpu.vector_store %arg7[%c3_200, %c16_201], %389 {strides = array<i32>} : memref<4x256xf32, #tpu.memory_space<vmem>>, vector<1x16xf32>,
    %391 = vector.extract_strided_slice %386 {offsets = [2, 0], sizes = [1, 16], strides = [1, 1]} : vector<16x16xf32> to vector<1x16xf32>
    %c3_202 = arith.constant 3 : index
    %c32_203 = arith.constant 32 : index
    %392 = vector.load %arg7[%c3_202, %c32_203] : memref<4x256xf32, #tpu.memory_space<vmem>>, vector<1x16xf32>
    tpu.vector_store %arg7[%c3_202, %c32_203], %391 {strides = array<i32>} : memref<4x256xf32, #tpu.memory_space<vmem>>, vector<1x16xf32>,
    %393 = vector.extract_strided_slice %386 {offsets = [3, 0], sizes = [1, 16], strides = [1, 1]} : vector<16x16xf32> to vector<1x16xf32>
    %c3_204 = arith.constant 3 : index
    %c48_205 = arith.constant 48 : index
    %394 = vector.load %arg7[%c3_204, %c48_205] : memref<4x256xf32, #tpu.memory_space<vmem>>, vector<1x16xf32>
    tpu.vector_store %arg7[%c3_204, %c48_205], %393 {strides = array<i32>} : memref<4x256xf32, #tpu.memory_space<vmem>>, vector<1x16xf32>,
    %395 = vector.extract_strided_slice %386 {offsets = [4, 0], sizes = [1, 16], strides = [1, 1]} : vector<16x16xf32> to vector<1x16xf32>
    %c3_206 = arith.constant 3 : index
    %c64_207 = arith.constant 64 : index
    %396 = vector.load %arg7[%c3_206, %c64_207] : memref<4x256xf32, #tpu.memory_space<vmem>>, vector<1x16xf32>
    tpu.vector_store %arg7[%c3_206, %c64_207], %395 {strides = array<i32>} : memref<4x256xf32, #tpu.memory_space<vmem>>, vector<1x16xf32>,
    %397 = vector.extract_strided_slice %386 {offsets = [5, 0], sizes = [1, 16], strides = [1, 1]} : vector<16x16xf32> to vector<1x16xf32>
    %c3_208 = arith.constant 3 : index
    %c80_209 = arith.constant 80 : index
    %398 = vector.load %arg7[%c3_208, %c80_209] : memref<4x256xf32, #tpu.memory_space<vmem>>, vector<1x16xf32>
    tpu.vector_store %arg7[%c3_208, %c80_209], %397 {strides = array<i32>} : memref<4x256xf32, #tpu.memory_space<vmem>>, vector<1x16xf32>,
    %399 = vector.extract_strided_slice %386 {offsets = [6, 0], sizes = [1, 16], strides = [1, 1]} : vector<16x16xf32> to vector<1x16xf32>
    %c3_210 = arith.constant 3 : index
    %c96_211 = arith.constant 96 : index
    %400 = vector.load %arg7[%c3_210, %c96_211] : memref<4x256xf32, #tpu.memory_space<vmem>>, vector<1x16xf32>
    tpu.vector_store %arg7[%c3_210, %c96_211], %399 {strides = array<i32>} : memref<4x256xf32, #tpu.memory_space<vmem>>, vector<1x16xf32>,
    %401 = vector.extract_strided_slice %386 {offsets = [7, 0], sizes = [1, 16], strides = [1, 1]} : vector<16x16xf32> to vector<1x16xf32>
    %c3_212 = arith.constant 3 : index
    %c112_213 = arith.constant 112 : index
    %402 = vector.load %arg7[%c3_212, %c112_213] : memref<4x256xf32, #tpu.memory_space<vmem>>, vector<1x16xf32>
    tpu.vector_store %arg7[%c3_212, %c112_213], %401 {strides = array<i32>} : memref<4x256xf32, #tpu.memory_space<vmem>>, vector<1x16xf32>,
    %403 = vector.extract_strided_slice %386 {offsets = [8, 0], sizes = [1, 16], strides = [1, 1]} : vector<16x16xf32> to vector<1x16xf32>
    %c3_214 = arith.constant 3 : index
    %c128_215 = arith.constant 128 : index
    %404 = vector.load %arg7[%c3_214, %c128_215] : memref<4x256xf32, #tpu.memory_space<vmem>>, vector<1x16xf32>
    tpu.vector_store %arg7[%c3_214, %c128_215], %403 {strides = array<i32>} : memref<4x256xf32, #tpu.memory_space<vmem>>, vector<1x16xf32>,
    %405 = vector.extract_strided_slice %386 {offsets = [9, 0], sizes = [1, 16], strides = [1, 1]} : vector<16x16xf32> to vector<1x16xf32>
    %c3_216 = arith.constant 3 : index
    %c144_217 = arith.constant 144 : index
    %406 = vector.load %arg7[%c3_216, %c144_217] : memref<4x256xf32, #tpu.memory_space<vmem>>, vector<1x16xf32>
    tpu.vector_store %arg7[%c3_216, %c144_217], %405 {strides = array<i32>} : memref<4x256xf32, #tpu.memory_space<vmem>>, vector<1x16xf32>,
    %407 = vector.extract_strided_slice %386 {offsets = [10, 0], sizes = [1, 16], strides = [1, 1]} : vector<16x16xf32> to vector<1x16xf32>
    %c3_218 = arith.constant 3 : index
    %c160_219 = arith.constant 160 : index
    %408 = vector.load %arg7[%c3_218, %c160_219] : memref<4x256xf32, #tpu.memory_space<vmem>>, vector<1x16xf32>
    tpu.vector_store %arg7[%c3_218, %c160_219], %407 {strides = array<i32>} : memref<4x256xf32, #tpu.memory_space<vmem>>, vector<1x16xf32>,
    %409 = vector.extract_strided_slice %386 {offsets = [11, 0], sizes = [1, 16], strides = [1, 1]} : vector<16x16xf32> to vector<1x16xf32>
    %c3_220 = arith.constant 3 : index
    %c176_221 = arith.constant 176 : index
    %410 = vector.load %arg7[%c3_220, %c176_221] : memref<4x256xf32, #tpu.memory_space<vmem>>, vector<1x16xf32>
    tpu.vector_store %arg7[%c3_220, %c176_221], %409 {strides = array<i32>} : memref<4x256xf32, #tpu.memory_space<vmem>>, vector<1x16xf32>,
    %411 = vector.extract_strided_slice %386 {offsets = [12, 0], sizes = [1, 16], strides = [1, 1]} : vector<16x16xf32> to vector<1x16xf32>
    %c3_222 = arith.constant 3 : index
    %c192_223 = arith.constant 192 : index
    %412 = vector.load %arg7[%c3_222, %c192_223] : memref<4x256xf32, #tpu.memory_space<vmem>>, vector<1x16xf32>
    tpu.vector_store %arg7[%c3_222, %c192_223], %411 {strides = array<i32>} : memref<4x256xf32, #tpu.memory_space<vmem>>, vector<1x16xf32>,
    %413 = vector.extract_strided_slice %386 {offsets = [13, 0], sizes = [1, 16], strides = [1, 1]} : vector<16x16xf32> to vector<1x16xf32>
    %c3_224 = arith.constant 3 : index
    %c208_225 = arith.constant 208 : index
    %414 = vector.load %arg7[%c3_224, %c208_225] : memref<4x256xf32, #tpu.memory_space<vmem>>, vector<1x16xf32>
    tpu.vector_store %arg7[%c3_224, %c208_225], %413 {strides = array<i32>} : memref<4x256xf32, #tpu.memory_space<vmem>>, vector<1x16xf32>,
    %415 = vector.extract_strided_slice %386 {offsets = [14, 0], sizes = [1, 16], strides = [1, 1]} : vector<16x16xf32> to vector<1x16xf32>
    %c3_226 = arith.constant 3 : index
    %c224_227 = arith.constant 224 : index
    %416 = vector.load %arg7[%c3_226, %c224_227] : memref<4x256xf32, #tpu.memory_space<vmem>>, vector<1x16xf32>
    tpu.vector_store %arg7[%c3_226, %c224_227], %415 {strides = array<i32>} : memref<4x256xf32, #tpu.memory_space<vmem>>, vector<1x16xf32>,
    %417 = vector.extract_strided_slice %386 {offsets = [15, 0], sizes = [1, 16], strides = [1, 1]} : vector<16x16xf32> to vector<1x16xf32>
    %c3_228 = arith.constant 3 : index
    %c240_229 = arith.constant 240 : index
    %418 = vector.load %arg7[%c3_228, %c240_229] : memref<4x256xf32, #tpu.memory_space<vmem>>, vector<1x16xf32>
    tpu.vector_store %arg7[%c3_228, %c240_229], %417 {strides = array<i32>} : memref<4x256xf32, #tpu.memory_space<vmem>>, vector<1x16xf32>,
    %c0_230 = arith.constant 0 : index
    %c0_231 = arith.constant 0 : index
    %419 = vector.load %arg7[%c0_230, %c0_231] : memref<4x256xf32, #tpu.memory_space<vmem>>, vector<1x256xf32>
    %c1_232 = arith.constant 1 : index
    %c0_233 = arith.constant 0 : index
    %420 = vector.load %arg7[%c1_232, %c0_233] : memref<4x256xf32, #tpu.memory_space<vmem>>, vector<1x256xf32>
    %c2_234 = arith.constant 2 : index
    %c0_235 = arith.constant 0 : index
    %421 = vector.load %arg7[%c2_234, %c0_235] : memref<4x256xf32, #tpu.memory_space<vmem>>, vector<1x256xf32>
    %c3_236 = arith.constant 3 : index
    %c0_237 = arith.constant 0 : index
    %422 = vector.load %arg7[%c3_236, %c0_237] : memref<4x256xf32, #tpu.memory_space<vmem>>, vector<1x256xf32>
    %c0_238 = arith.constant 0 : index
    %423 = memref.load %arg4[%c0_238] : memref<32xf32, #tpu.memory_space<smem>>
    %424 = vector.broadcast %423 : f32 to vector<1x256xf32>
    %425 = arith.mulf %419, %424 : vector<1x256xf32>
    %c1_239 = arith.constant 1 : index
    %426 = memref.load %arg4[%c1_239] : memref<32xf32, #tpu.memory_space<smem>>
    %427 = vector.broadcast %426 : f32 to vector<1x256xf32>
    %428 = arith.mulf %420, %427 : vector<1x256xf32>
    %429 = arith.addf %425, %428 : vector<1x256xf32>
    %c2_240 = arith.constant 2 : index
    %430 = memref.load %arg4[%c2_240] : memref<32xf32, #tpu.memory_space<smem>>
    %431 = vector.broadcast %430 : f32 to vector<1x256xf32>
    %432 = arith.mulf %421, %431 : vector<1x256xf32>
    %433 = arith.addf %429, %432 : vector<1x256xf32>
    %c3_241 = arith.constant 3 : index
    %434 = memref.load %arg4[%c3_241] : memref<32xf32, #tpu.memory_space<smem>>
    %435 = vector.broadcast %434 : f32 to vector<1x256xf32>
    %436 = arith.mulf %422, %435 : vector<1x256xf32>
    %437 = arith.addf %433, %436 : vector<1x256xf32>
    %cst_242 = arith.constant dense<0.000000e+00> : vector<1xf32>
    %438 = vector.multi_reduction <add>, %437, %cst_242 [1] : vector<1x256xf32> to vector<1xf32>
    %439 = vector.shape_cast %438 : vector<1xf32> to vector<1x1xf32>
    %cst_243 = arith.constant 3.906250e-03 : f32
    %440 = vector.broadcast %cst_243 : f32 to vector<1x1xf32>
    %441 = arith.mulf %439, %440 : vector<1x1xf32>
    %442 = vector.broadcast %441 : vector<1x1xf32> to vector<1x256xf32>
    %443 = arith.subf %437, %442 : vector<1x256xf32>
    %444 = arith.mulf %443, %443 : vector<1x256xf32>
    %cst_244 = arith.constant dense<0.000000e+00> : vector<1xf32>
    %445 = vector.multi_reduction <add>, %444, %cst_244 [1] : vector<1x256xf32> to vector<1xf32>
    %446 = vector.shape_cast %445 : vector<1xf32> to vector<1x1xf32>
    %c0_245 = arith.constant 0 : index
    %c0_246 = arith.constant 0 : index
    %c0_247 = arith.constant 0 : index
    %c0_248 = arith.constant 0 : index
    %447 = vector.load %arg6[%c0_245, %c0_246, %c0_247, %c0_248] : memref<1x1x8x2xf32, #tpu.memory_space<vmem>>, vector<1x1x1x1xf32>
    %448 = vector.shape_cast %447 : vector<1x1x1x1xf32> to vector<1x1xf32>
    %449 = vector.shape_cast %439 : vector<1x1xf32> to vector<1x1x1x1xf32>
    tpu.vector_store %arg6[%c0_245, %c0_246, %c0_247, %c0_248], %449 {strides = array<i32>} : memref<1x1x8x2xf32, #tpu.memory_space<vmem>>, vector<1x1x1x1xf32>,
    %c0_249 = arith.constant 0 : index
    %c0_250 = arith.constant 0 : index
    %c0_251 = arith.constant 0 : index
    %c1_252 = arith.constant 1 : index
    %450 = vector.load %arg6[%c0_249, %c0_250, %c0_251, %c1_252] : memref<1x1x8x2xf32, #tpu.memory_space<vmem>>, vector<1x1x1x1xf32>
    %451 = vector.shape_cast %450 : vector<1x1x1x1xf32> to vector<1x1xf32>
    %452 = vector.shape_cast %446 : vector<1x1xf32> to vector<1x1x1x1xf32>
    tpu.vector_store %arg6[%c0_249, %c0_250, %c0_251, %c1_252], %452 {strides = array<i32>} : memref<1x1x8x2xf32, #tpu.memory_space<vmem>>, vector<1x1x1x1xf32>,
    %453 = arith.truncf %437 : vector<1x256xf32> to vector<1x256xbf16>
    %c0_253 = arith.constant 0 : index
    %c0_254 = arith.constant 0 : index
    %c0_255 = arith.constant 0 : index
    %454 = vector.load %arg5[%c0_253, %c0_254, %c0_255] : memref<1x8x256xbf16, #tpu.memory_space<vmem>>, vector<1x1x256xbf16>
    %455 = vector.shape_cast %454 : vector<1x1x256xbf16> to vector<1x256xbf16>
    %456 = vector.shape_cast %453 : vector<1x256xbf16> to vector<1x1x256xbf16>
    tpu.vector_store %arg5[%c0_253, %c0_254, %c0_255], %456 {strides = array<i32>} : memref<1x8x256xbf16, #tpu.memory_space<vmem>>, vector<1x1x256xbf16>,
    %c4_256 = arith.constant 4 : index
    %457 = memref.load %arg4[%c4_256] : memref<32xf32, #tpu.memory_space<smem>>
    %458 = vector.broadcast %457 : f32 to vector<1x256xf32>
    %459 = arith.mulf %419, %458 : vector<1x256xf32>
    %c5_257 = arith.constant 5 : index
    %460 = memref.load %arg4[%c5_257] : memref<32xf32, #tpu.memory_space<smem>>
    %461 = vector.broadcast %460 : f32 to vector<1x256xf32>
    %462 = arith.mulf %420, %461 : vector<1x256xf32>
    %463 = arith.addf %459, %462 : vector<1x256xf32>
    %c6_258 = arith.constant 6 : index
    %464 = memref.load %arg4[%c6_258] : memref<32xf32, #tpu.memory_space<smem>>
    %465 = vector.broadcast %464 : f32 to vector<1x256xf32>
    %466 = arith.mulf %421, %465 : vector<1x256xf32>
    %467 = arith.addf %463, %466 : vector<1x256xf32>
    %c7_259 = arith.constant 7 : index
    %468 = memref.load %arg4[%c7_259] : memref<32xf32, #tpu.memory_space<smem>>
    %469 = vector.broadcast %468 : f32 to vector<1x256xf32>
    %470 = arith.mulf %422, %469 : vector<1x256xf32>
    %471 = arith.addf %467, %470 : vector<1x256xf32>
    %cst_260 = arith.constant dense<0.000000e+00> : vector<1xf32>
    %472 = vector.multi_reduction <add>, %471, %cst_260 [1] : vector<1x256xf32> to vector<1xf32>
    %473 = vector.shape_cast %472 : vector<1xf32> to vector<1x1xf32>
    %cst_261 = arith.constant 3.906250e-03 : f32
    %474 = vector.broadcast %cst_261 : f32 to vector<1x1xf32>
    %475 = arith.mulf %473, %474 : vector<1x1xf32>
    %476 = vector.broadcast %475 : vector<1x1xf32> to vector<1x256xf32>
    %477 = arith.subf %471, %476 : vector<1x256xf32>
    %478 = arith.mulf %477, %477 : vector<1x256xf32>
    %cst_262 = arith.constant dense<0.000000e+00> : vector<1xf32>
    %479 = vector.multi_reduction <add>, %478, %cst_262 [1] : vector<1x256xf32> to vector<1xf32>
    %480 = vector.shape_cast %479 : vector<1xf32> to vector<1x1xf32>
    %c0_263 = arith.constant 0 : index
    %c0_264 = arith.constant 0 : index
    %c1_265 = arith.constant 1 : index
    %c0_266 = arith.constant 0 : index
    %481 = vector.load %arg6[%c0_263, %c0_264, %c1_265, %c0_266] : memref<1x1x8x2xf32, #tpu.memory_space<vmem>>, vector<1x1x1x1xf32>
    %482 = vector.shape_cast %481 : vector<1x1x1x1xf32> to vector<1x1xf32>
    %483 = vector.shape_cast %473 : vector<1x1xf32> to vector<1x1x1x1xf32>
    tpu.vector_store %arg6[%c0_263, %c0_264, %c1_265, %c0_266], %483 {strides = array<i32>} : memref<1x1x8x2xf32, #tpu.memory_space<vmem>>, vector<1x1x1x1xf32>,
    %c0_267 = arith.constant 0 : index
    %c0_268 = arith.constant 0 : index
    %c1_269 = arith.constant 1 : index
    %c1_270 = arith.constant 1 : index
    %484 = vector.load %arg6[%c0_267, %c0_268, %c1_269, %c1_270] : memref<1x1x8x2xf32, #tpu.memory_space<vmem>>, vector<1x1x1x1xf32>
    %485 = vector.shape_cast %484 : vector<1x1x1x1xf32> to vector<1x1xf32>
    %486 = vector.shape_cast %480 : vector<1x1xf32> to vector<1x1x1x1xf32>
    tpu.vector_store %arg6[%c0_267, %c0_268, %c1_269, %c1_270], %486 {strides = array<i32>} : memref<1x1x8x2xf32, #tpu.memory_space<vmem>>, vector<1x1x1x1xf32>,
    %487 = arith.truncf %471 : vector<1x256xf32> to vector<1x256xbf16>
    %c0_271 = arith.constant 0 : index
    %c1_272 = arith.constant 1 : index
    %c0_273 = arith.constant 0 : index
    %488 = vector.load %arg5[%c0_271, %c1_272, %c0_273] : memref<1x8x256xbf16, #tpu.memory_space<vmem>>, vector<1x1x256xbf16>
    %489 = vector.shape_cast %488 : vector<1x1x256xbf16> to vector<1x256xbf16>
    %490 = vector.shape_cast %487 : vector<1x256xbf16> to vector<1x1x256xbf16>
    tpu.vector_store %arg5[%c0_271, %c1_272, %c0_273], %490 {strides = array<i32>} : memref<1x8x256xbf16, #tpu.memory_space<vmem>>, vector<1x1x256xbf16>,
    %c8_274 = arith.constant 8 : index
    %491 = memref.load %arg4[%c8_274] : memref<32xf32, #tpu.memory_space<smem>>
    %492 = vector.broadcast %491 : f32 to vector<1x256xf32>
    %493 = arith.mulf %419, %492 : vector<1x256xf32>
    %c9_275 = arith.constant 9 : index
    %494 = memref.load %arg4[%c9_275] : memref<32xf32, #tpu.memory_space<smem>>
    %495 = vector.broadcast %494 : f32 to vector<1x256xf32>
    %496 = arith.mulf %420, %495 : vector<1x256xf32>
    %497 = arith.addf %493, %496 : vector<1x256xf32>
    %c10_276 = arith.constant 10 : index
    %498 = memref.load %arg4[%c10_276] : memref<32xf32, #tpu.memory_space<smem>>
    %499 = vector.broadcast %498 : f32 to vector<1x256xf32>
    %500 = arith.mulf %421, %499 : vector<1x256xf32>
    %501 = arith.addf %497, %500 : vector<1x256xf32>
    %c11_277 = arith.constant 11 : index
    %502 = memref.load %arg4[%c11_277] : memref<32xf32, #tpu.memory_space<smem>>
    %503 = vector.broadcast %502 : f32 to vector<1x256xf32>
    %504 = arith.mulf %422, %503 : vector<1x256xf32>
    %505 = arith.addf %501, %504 : vector<1x256xf32>
    %cst_278 = arith.constant dense<0.000000e+00> : vector<1xf32>
    %506 = vector.multi_reduction <add>, %505, %cst_278 [1] : vector<1x256xf32> to vector<1xf32>
    %507 = vector.shape_cast %506 : vector<1xf32> to vector<1x1xf32>
    %cst_279 = arith.constant 3.906250e-03 : f32
    %508 = vector.broadcast %cst_279 : f32 to vector<1x1xf32>
    %509 = arith.mulf %507, %508 : vector<1x1xf32>
    %510 = vector.broadcast %509 : vector<1x1xf32> to vector<1x256xf32>
    %511 = arith.subf %505, %510 : vector<1x256xf32>
    %512 = arith.mulf %511, %511 : vector<1x256xf32>
    %cst_280 = arith.constant dense<0.000000e+00> : vector<1xf32>
    %513 = vector.multi_reduction <add>, %512, %cst_280 [1] : vector<1x256xf32> to vector<1xf32>
    %514 = vector.shape_cast %513 : vector<1xf32> to vector<1x1xf32>
    %c0_281 = arith.constant 0 : index
    %c0_282 = arith.constant 0 : index
    %c2_283 = arith.constant 2 : index
    %c0_284 = arith.constant 0 : index
    %515 = vector.load %arg6[%c0_281, %c0_282, %c2_283, %c0_284] : memref<1x1x8x2xf32, #tpu.memory_space<vmem>>, vector<1x1x1x1xf32>
    %516 = vector.shape_cast %515 : vector<1x1x1x1xf32> to vector<1x1xf32>
    %517 = vector.shape_cast %507 : vector<1x1xf32> to vector<1x1x1x1xf32>
    tpu.vector_store %arg6[%c0_281, %c0_282, %c2_283, %c0_284], %517 {strides = array<i32>} : memref<1x1x8x2xf32, #tpu.memory_space<vmem>>, vector<1x1x1x1xf32>,
    %c0_285 = arith.constant 0 : index
    %c0_286 = arith.constant 0 : index
    %c2_287 = arith.constant 2 : index
    %c1_288 = arith.constant 1 : index
    %518 = vector.load %arg6[%c0_285, %c0_286, %c2_287, %c1_288] : memref<1x1x8x2xf32, #tpu.memory_space<vmem>>, vector<1x1x1x1xf32>
    %519 = vector.shape_cast %518 : vector<1x1x1x1xf32> to vector<1x1xf32>
    %520 = vector.shape_cast %514 : vector<1x1xf32> to vector<1x1x1x1xf32>
    tpu.vector_store %arg6[%c0_285, %c0_286, %c2_287, %c1_288], %520 {strides = array<i32>} : memref<1x1x8x2xf32, #tpu.memory_space<vmem>>, vector<1x1x1x1xf32>,
    %521 = arith.truncf %505 : vector<1x256xf32> to vector<1x256xbf16>
    %c0_289 = arith.constant 0 : index
    %c2_290 = arith.constant 2 : index
    %c0_291 = arith.constant 0 : index
    %522 = vector.load %arg5[%c0_289, %c2_290, %c0_291] : memref<1x8x256xbf16, #tpu.memory_space<vmem>>, vector<1x1x256xbf16>
    %523 = vector.shape_cast %522 : vector<1x1x256xbf16> to vector<1x256xbf16>
    %524 = vector.shape_cast %521 : vector<1x256xbf16> to vector<1x1x256xbf16>
    tpu.vector_store %arg5[%c0_289, %c2_290, %c0_291], %524 {strides = array<i32>} : memref<1x8x256xbf16, #tpu.memory_space<vmem>>, vector<1x1x256xbf16>,
    %c12_292 = arith.constant 12 : index
    %525 = memref.load %arg4[%c12_292] : memref<32xf32, #tpu.memory_space<smem>>
    %526 = vector.broadcast %525 : f32 to vector<1x256xf32>
    %527 = arith.mulf %419, %526 : vector<1x256xf32>
    %c13_293 = arith.constant 13 : index
    %528 = memref.load %arg4[%c13_293] : memref<32xf32, #tpu.memory_space<smem>>
    %529 = vector.broadcast %528 : f32 to vector<1x256xf32>
    %530 = arith.mulf %420, %529 : vector<1x256xf32>
    %531 = arith.addf %527, %530 : vector<1x256xf32>
    %c14_294 = arith.constant 14 : index
    %532 = memref.load %arg4[%c14_294] : memref<32xf32, #tpu.memory_space<smem>>
    %533 = vector.broadcast %532 : f32 to vector<1x256xf32>
    %534 = arith.mulf %421, %533 : vector<1x256xf32>
    %535 = arith.addf %531, %534 : vector<1x256xf32>
    %c15_295 = arith.constant 15 : index
    %536 = memref.load %arg4[%c15_295] : memref<32xf32, #tpu.memory_space<smem>>
    %537 = vector.broadcast %536 : f32 to vector<1x256xf32>
    %538 = arith.mulf %422, %537 : vector<1x256xf32>
    %539 = arith.addf %535, %538 : vector<1x256xf32>
    %cst_296 = arith.constant dense<0.000000e+00> : vector<1xf32>
    %540 = vector.multi_reduction <add>, %539, %cst_296 [1] : vector<1x256xf32> to vector<1xf32>
    %541 = vector.shape_cast %540 : vector<1xf32> to vector<1x1xf32>
    %cst_297 = arith.constant 3.906250e-03 : f32
    %542 = vector.broadcast %cst_297 : f32 to vector<1x1xf32>
    %543 = arith.mulf %541, %542 : vector<1x1xf32>
    %544 = vector.broadcast %543 : vector<1x1xf32> to vector<1x256xf32>
    %545 = arith.subf %539, %544 : vector<1x256xf32>
    %546 = arith.mulf %545, %545 : vector<1x256xf32>
    %cst_298 = arith.constant dense<0.000000e+00> : vector<1xf32>
    %547 = vector.multi_reduction <add>, %546, %cst_298 [1] : vector<1x256xf32> to vector<1xf32>
    %548 = vector.shape_cast %547 : vector<1xf32> to vector<1x1xf32>
    %c0_299 = arith.constant 0 : index
    %c0_300 = arith.constant 0 : index
    %c3_301 = arith.constant 3 : index
    %c0_302 = arith.constant 0 : index
    %549 = vector.load %arg6[%c0_299, %c0_300, %c3_301, %c0_302] : memref<1x1x8x2xf32, #tpu.memory_space<vmem>>, vector<1x1x1x1xf32>
    %550 = vector.shape_cast %549 : vector<1x1x1x1xf32> to vector<1x1xf32>
    %551 = vector.shape_cast %541 : vector<1x1xf32> to vector<1x1x1x1xf32>
    tpu.vector_store %arg6[%c0_299, %c0_300, %c3_301, %c0_302], %551 {strides = array<i32>} : memref<1x1x8x2xf32, #tpu.memory_space<vmem>>, vector<1x1x1x1xf32>,
    %c0_303 = arith.constant 0 : index
    %c0_304 = arith.constant 0 : index
    %c3_305 = arith.constant 3 : index
    %c1_306 = arith.constant 1 : index
    %552 = vector.load %arg6[%c0_303, %c0_304, %c3_305, %c1_306] : memref<1x1x8x2xf32, #tpu.memory_space<vmem>>, vector<1x1x1x1xf32>
    %553 = vector.shape_cast %552 : vector<1x1x1x1xf32> to vector<1x1xf32>
    %554 = vector.shape_cast %548 : vector<1x1xf32> to vector<1x1x1x1xf32>
    tpu.vector_store %arg6[%c0_303, %c0_304, %c3_305, %c1_306], %554 {strides = array<i32>} : memref<1x1x8x2xf32, #tpu.memory_space<vmem>>, vector<1x1x1x1xf32>,
    %555 = arith.truncf %539 : vector<1x256xf32> to vector<1x256xbf16>
    %c0_307 = arith.constant 0 : index
    %c3_308 = arith.constant 3 : index
    %c0_309 = arith.constant 0 : index
    %556 = vector.load %arg5[%c0_307, %c3_308, %c0_309] : memref<1x8x256xbf16, #tpu.memory_space<vmem>>, vector<1x1x256xbf16>
    %557 = vector.shape_cast %556 : vector<1x1x256xbf16> to vector<1x256xbf16>
    %558 = vector.shape_cast %555 : vector<1x256xbf16> to vector<1x1x256xbf16>
    tpu.vector_store %arg5[%c0_307, %c3_308, %c0_309], %558 {strides = array<i32>} : memref<1x8x256xbf16, #tpu.memory_space<vmem>>, vector<1x1x256xbf16>,
    %c16_310 = arith.constant 16 : index
    %559 = memref.load %arg4[%c16_310] : memref<32xf32, #tpu.memory_space<smem>>
    %560 = vector.broadcast %559 : f32 to vector<1x256xf32>
    %561 = arith.mulf %419, %560 : vector<1x256xf32>
    %c17_311 = arith.constant 17 : index
    %562 = memref.load %arg4[%c17_311] : memref<32xf32, #tpu.memory_space<smem>>
    %563 = vector.broadcast %562 : f32 to vector<1x256xf32>
    %564 = arith.mulf %420, %563 : vector<1x256xf32>
    %565 = arith.addf %561, %564 : vector<1x256xf32>
    %c18_312 = arith.constant 18 : index
    %566 = memref.load %arg4[%c18_312] : memref<32xf32, #tpu.memory_space<smem>>
    %567 = vector.broadcast %566 : f32 to vector<1x256xf32>
    %568 = arith.mulf %421, %567 : vector<1x256xf32>
    %569 = arith.addf %565, %568 : vector<1x256xf32>
    %c19_313 = arith.constant 19 : index
    %570 = memref.load %arg4[%c19_313] : memref<32xf32, #tpu.memory_space<smem>>
    %571 = vector.broadcast %570 : f32 to vector<1x256xf32>
    %572 = arith.mulf %422, %571 : vector<1x256xf32>
    %573 = arith.addf %569, %572 : vector<1x256xf32>
    %cst_314 = arith.constant dense<0.000000e+00> : vector<1xf32>
    %574 = vector.multi_reduction <add>, %573, %cst_314 [1] : vector<1x256xf32> to vector<1xf32>
    %575 = vector.shape_cast %574 : vector<1xf32> to vector<1x1xf32>
    %cst_315 = arith.constant 3.906250e-03 : f32
    %576 = vector.broadcast %cst_315 : f32 to vector<1x1xf32>
    %577 = arith.mulf %575, %576 : vector<1x1xf32>
    %578 = vector.broadcast %577 : vector<1x1xf32> to vector<1x256xf32>
    %579 = arith.subf %573, %578 : vector<1x256xf32>
    %580 = arith.mulf %579, %579 : vector<1x256xf32>
    %cst_316 = arith.constant dense<0.000000e+00> : vector<1xf32>
    %581 = vector.multi_reduction <add>, %580, %cst_316 [1] : vector<1x256xf32> to vector<1xf32>
    %582 = vector.shape_cast %581 : vector<1xf32> to vector<1x1xf32>
    %c0_317 = arith.constant 0 : index
    %c0_318 = arith.constant 0 : index
    %c4_319 = arith.constant 4 : index
    %c0_320 = arith.constant 0 : index
    %583 = vector.load %arg6[%c0_317, %c0_318, %c4_319, %c0_320] : memref<1x1x8x2xf32, #tpu.memory_space<vmem>>, vector<1x1x1x1xf32>
    %584 = vector.shape_cast %583 : vector<1x1x1x1xf32> to vector<1x1xf32>
    %585 = vector.shape_cast %575 : vector<1x1xf32> to vector<1x1x1x1xf32>
    tpu.vector_store %arg6[%c0_317, %c0_318, %c4_319, %c0_320], %585 {strides = array<i32>} : memref<1x1x8x2xf32, #tpu.memory_space<vmem>>, vector<1x1x1x1xf32>,
    %c0_321 = arith.constant 0 : index
    %c0_322 = arith.constant 0 : index
    %c4_323 = arith.constant 4 : index
    %c1_324 = arith.constant 1 : index
    %586 = vector.load %arg6[%c0_321, %c0_322, %c4_323, %c1_324] : memref<1x1x8x2xf32, #tpu.memory_space<vmem>>, vector<1x1x1x1xf32>
    %587 = vector.shape_cast %586 : vector<1x1x1x1xf32> to vector<1x1xf32>
    %588 = vector.shape_cast %582 : vector<1x1xf32> to vector<1x1x1x1xf32>
    tpu.vector_store %arg6[%c0_321, %c0_322, %c4_323, %c1_324], %588 {strides = array<i32>} : memref<1x1x8x2xf32, #tpu.memory_space<vmem>>, vector<1x1x1x1xf32>,
    %589 = arith.truncf %573 : vector<1x256xf32> to vector<1x256xbf16>
    %c0_325 = arith.constant 0 : index
    %c4_326 = arith.constant 4 : index
    %c0_327 = arith.constant 0 : index
    %590 = vector.load %arg5[%c0_325, %c4_326, %c0_327] : memref<1x8x256xbf16, #tpu.memory_space<vmem>>, vector<1x1x256xbf16>
    %591 = vector.shape_cast %590 : vector<1x1x256xbf16> to vector<1x256xbf16>
    %592 = vector.shape_cast %589 : vector<1x256xbf16> to vector<1x1x256xbf16>
    tpu.vector_store %arg5[%c0_325, %c4_326, %c0_327], %592 {strides = array<i32>} : memref<1x8x256xbf16, #tpu.memory_space<vmem>>, vector<1x1x256xbf16>,
    %c20_328 = arith.constant 20 : index
    %593 = memref.load %arg4[%c20_328] : memref<32xf32, #tpu.memory_space<smem>>
    %594 = vector.broadcast %593 : f32 to vector<1x256xf32>
    %595 = arith.mulf %419, %594 : vector<1x256xf32>
    %c21_329 = arith.constant 21 : index
    %596 = memref.load %arg4[%c21_329] : memref<32xf32, #tpu.memory_space<smem>>
    %597 = vector.broadcast %596 : f32 to vector<1x256xf32>
    %598 = arith.mulf %420, %597 : vector<1x256xf32>
    %599 = arith.addf %595, %598 : vector<1x256xf32>
    %c22_330 = arith.constant 22 : index
    %600 = memref.load %arg4[%c22_330] : memref<32xf32, #tpu.memory_space<smem>>
    %601 = vector.broadcast %600 : f32 to vector<1x256xf32>
    %602 = arith.mulf %421, %601 : vector<1x256xf32>
    %603 = arith.addf %599, %602 : vector<1x256xf32>
    %c23_331 = arith.constant 23 : index
    %604 = memref.load %arg4[%c23_331] : memref<32xf32, #tpu.memory_space<smem>>
    %605 = vector.broadcast %604 : f32 to vector<1x256xf32>
    %606 = arith.mulf %422, %605 : vector<1x256xf32>
    %607 = arith.addf %603, %606 : vector<1x256xf32>
    %cst_332 = arith.constant dense<0.000000e+00> : vector<1xf32>
    %608 = vector.multi_reduction <add>, %607, %cst_332 [1] : vector<1x256xf32> to vector<1xf32>
    %609 = vector.shape_cast %608 : vector<1xf32> to vector<1x1xf32>
    %cst_333 = arith.constant 3.906250e-03 : f32
    %610 = vector.broadcast %cst_333 : f32 to vector<1x1xf32>
    %611 = arith.mulf %609, %610 : vector<1x1xf32>
    %612 = vector.broadcast %611 : vector<1x1xf32> to vector<1x256xf32>
    %613 = arith.subf %607, %612 : vector<1x256xf32>
    %614 = arith.mulf %613, %613 : vector<1x256xf32>
    %cst_334 = arith.constant dense<0.000000e+00> : vector<1xf32>
    %615 = vector.multi_reduction <add>, %614, %cst_334 [1] : vector<1x256xf32> to vector<1xf32>
    %616 = vector.shape_cast %615 : vector<1xf32> to vector<1x1xf32>
    %c0_335 = arith.constant 0 : index
    %c0_336 = arith.constant 0 : index
    %c5_337 = arith.constant 5 : index
    %c0_338 = arith.constant 0 : index
    %617 = vector.load %arg6[%c0_335, %c0_336, %c5_337, %c0_338] : memref<1x1x8x2xf32, #tpu.memory_space<vmem>>, vector<1x1x1x1xf32>
    %618 = vector.shape_cast %617 : vector<1x1x1x1xf32> to vector<1x1xf32>
    %619 = vector.shape_cast %609 : vector<1x1xf32> to vector<1x1x1x1xf32>
    tpu.vector_store %arg6[%c0_335, %c0_336, %c5_337, %c0_338], %619 {strides = array<i32>} : memref<1x1x8x2xf32, #tpu.memory_space<vmem>>, vector<1x1x1x1xf32>,
    %c0_339 = arith.constant 0 : index
    %c0_340 = arith.constant 0 : index
    %c5_341 = arith.constant 5 : index
    %c1_342 = arith.constant 1 : index
    %620 = vector.load %arg6[%c0_339, %c0_340, %c5_341, %c1_342] : memref<1x1x8x2xf32, #tpu.memory_space<vmem>>, vector<1x1x1x1xf32>
    %621 = vector.shape_cast %620 : vector<1x1x1x1xf32> to vector<1x1xf32>
    %622 = vector.shape_cast %616 : vector<1x1xf32> to vector<1x1x1x1xf32>
    tpu.vector_store %arg6[%c0_339, %c0_340, %c5_341, %c1_342], %622 {strides = array<i32>} : memref<1x1x8x2xf32, #tpu.memory_space<vmem>>, vector<1x1x1x1xf32>,
    %623 = arith.truncf %607 : vector<1x256xf32> to vector<1x256xbf16>
    %c0_343 = arith.constant 0 : index
    %c5_344 = arith.constant 5 : index
    %c0_345 = arith.constant 0 : index
    %624 = vector.load %arg5[%c0_343, %c5_344, %c0_345] : memref<1x8x256xbf16, #tpu.memory_space<vmem>>, vector<1x1x256xbf16>
    %625 = vector.shape_cast %624 : vector<1x1x256xbf16> to vector<1x256xbf16>
    %626 = vector.shape_cast %623 : vector<1x256xbf16> to vector<1x1x256xbf16>
    tpu.vector_store %arg5[%c0_343, %c5_344, %c0_345], %626 {strides = array<i32>} : memref<1x8x256xbf16, #tpu.memory_space<vmem>>, vector<1x1x256xbf16>,
    %c24_346 = arith.constant 24 : index
    %627 = memref.load %arg4[%c24_346] : memref<32xf32, #tpu.memory_space<smem>>
    %628 = vector.broadcast %627 : f32 to vector<1x256xf32>
    %629 = arith.mulf %419, %628 : vector<1x256xf32>
    %c25_347 = arith.constant 25 : index
    %630 = memref.load %arg4[%c25_347] : memref<32xf32, #tpu.memory_space<smem>>
    %631 = vector.broadcast %630 : f32 to vector<1x256xf32>
    %632 = arith.mulf %420, %631 : vector<1x256xf32>
    %633 = arith.addf %629, %632 : vector<1x256xf32>
    %c26_348 = arith.constant 26 : index
    %634 = memref.load %arg4[%c26_348] : memref<32xf32, #tpu.memory_space<smem>>
    %635 = vector.broadcast %634 : f32 to vector<1x256xf32>
    %636 = arith.mulf %421, %635 : vector<1x256xf32>
    %637 = arith.addf %633, %636 : vector<1x256xf32>
    %c27_349 = arith.constant 27 : index
    %638 = memref.load %arg4[%c27_349] : memref<32xf32, #tpu.memory_space<smem>>
    %639 = vector.broadcast %638 : f32 to vector<1x256xf32>
    %640 = arith.mulf %422, %639 : vector<1x256xf32>
    %641 = arith.addf %637, %640 : vector<1x256xf32>
    %cst_350 = arith.constant dense<0.000000e+00> : vector<1xf32>
    %642 = vector.multi_reduction <add>, %641, %cst_350 [1] : vector<1x256xf32> to vector<1xf32>
    %643 = vector.shape_cast %642 : vector<1xf32> to vector<1x1xf32>
    %cst_351 = arith.constant 3.906250e-03 : f32
    %644 = vector.broadcast %cst_351 : f32 to vector<1x1xf32>
    %645 = arith.mulf %643, %644 : vector<1x1xf32>
    %646 = vector.broadcast %645 : vector<1x1xf32> to vector<1x256xf32>
    %647 = arith.subf %641, %646 : vector<1x256xf32>
    %648 = arith.mulf %647, %647 : vector<1x256xf32>
    %cst_352 = arith.constant dense<0.000000e+00> : vector<1xf32>
    %649 = vector.multi_reduction <add>, %648, %cst_352 [1] : vector<1x256xf32> to vector<1xf32>
    %650 = vector.shape_cast %649 : vector<1xf32> to vector<1x1xf32>
    %c0_353 = arith.constant 0 : index
    %c0_354 = arith.constant 0 : index
    %c6_355 = arith.constant 6 : index
    %c0_356 = arith.constant 0 : index
    %651 = vector.load %arg6[%c0_353, %c0_354, %c6_355, %c0_356] : memref<1x1x8x2xf32, #tpu.memory_space<vmem>>, vector<1x1x1x1xf32>
    %652 = vector.shape_cast %651 : vector<1x1x1x1xf32> to vector<1x1xf32>
    %653 = vector.shape_cast %643 : vector<1x1xf32> to vector<1x1x1x1xf32>
    tpu.vector_store %arg6[%c0_353, %c0_354, %c6_355, %c0_356], %653 {strides = array<i32>} : memref<1x1x8x2xf32, #tpu.memory_space<vmem>>, vector<1x1x1x1xf32>,
    %c0_357 = arith.constant 0 : index
    %c0_358 = arith.constant 0 : index
    %c6_359 = arith.constant 6 : index
    %c1_360 = arith.constant 1 : index
    %654 = vector.load %arg6[%c0_357, %c0_358, %c6_359, %c1_360] : memref<1x1x8x2xf32, #tpu.memory_space<vmem>>, vector<1x1x1x1xf32>
    %655 = vector.shape_cast %654 : vector<1x1x1x1xf32> to vector<1x1xf32>
    %656 = vector.shape_cast %650 : vector<1x1xf32> to vector<1x1x1x1xf32>
    tpu.vector_store %arg6[%c0_357, %c0_358, %c6_359, %c1_360], %656 {strides = array<i32>} : memref<1x1x8x2xf32, #tpu.memory_space<vmem>>, vector<1x1x1x1xf32>,
    %657 = arith.truncf %641 : vector<1x256xf32> to vector<1x256xbf16>
    %c0_361 = arith.constant 0 : index
    %c6_362 = arith.constant 6 : index
    %c0_363 = arith.constant 0 : index
    %658 = vector.load %arg5[%c0_361, %c6_362, %c0_363] : memref<1x8x256xbf16, #tpu.memory_space<vmem>>, vector<1x1x256xbf16>
    %659 = vector.shape_cast %658 : vector<1x1x256xbf16> to vector<1x256xbf16>
    %660 = vector.shape_cast %657 : vector<1x256xbf16> to vector<1x1x256xbf16>
    tpu.vector_store %arg5[%c0_361, %c6_362, %c0_363], %660 {strides = array<i32>} : memref<1x8x256xbf16, #tpu.memory_space<vmem>>, vector<1x1x256xbf16>,
    %c28_364 = arith.constant 28 : index
    %661 = memref.load %arg4[%c28_364] : memref<32xf32, #tpu.memory_space<smem>>
    %662 = vector.broadcast %661 : f32 to vector<1x256xf32>
    %663 = arith.mulf %419, %662 : vector<1x256xf32>
    %c29_365 = arith.constant 29 : index
    %664 = memref.load %arg4[%c29_365] : memref<32xf32, #tpu.memory_space<smem>>
    %665 = vector.broadcast %664 : f32 to vector<1x256xf32>
    %666 = arith.mulf %420, %665 : vector<1x256xf32>
    %667 = arith.addf %663, %666 : vector<1x256xf32>
    %c30_366 = arith.constant 30 : index
    %668 = memref.load %arg4[%c30_366] : memref<32xf32, #tpu.memory_space<smem>>
    %669 = vector.broadcast %668 : f32 to vector<1x256xf32>
    %670 = arith.mulf %421, %669 : vector<1x256xf32>
    %671 = arith.addf %667, %670 : vector<1x256xf32>
    %c31_367 = arith.constant 31 : index
    %672 = memref.load %arg4[%c31_367] : memref<32xf32, #tpu.memory_space<smem>>
    %673 = vector.broadcast %672 : f32 to vector<1x256xf32>
    %674 = arith.mulf %422, %673 : vector<1x256xf32>
    %675 = arith.addf %671, %674 : vector<1x256xf32>
    %cst_368 = arith.constant dense<0.000000e+00> : vector<1xf32>
    %676 = vector.multi_reduction <add>, %675, %cst_368 [1] : vector<1x256xf32> to vector<1xf32>
    %677 = vector.shape_cast %676 : vector<1xf32> to vector<1x1xf32>
    %cst_369 = arith.constant 3.906250e-03 : f32
    %678 = vector.broadcast %cst_369 : f32 to vector<1x1xf32>
    %679 = arith.mulf %677, %678 : vector<1x1xf32>
    %680 = vector.broadcast %679 : vector<1x1xf32> to vector<1x256xf32>
    %681 = arith.subf %675, %680 : vector<1x256xf32>
    %682 = arith.mulf %681, %681 : vector<1x256xf32>
    %cst_370 = arith.constant dense<0.000000e+00> : vector<1xf32>
    %683 = vector.multi_reduction <add>, %682, %cst_370 [1] : vector<1x256xf32> to vector<1xf32>
    %684 = vector.shape_cast %683 : vector<1xf32> to vector<1x1xf32>
    %c0_371 = arith.constant 0 : index
    %c0_372 = arith.constant 0 : index
    %c7_373 = arith.constant 7 : index
    %c0_374 = arith.constant 0 : index
    %685 = vector.load %arg6[%c0_371, %c0_372, %c7_373, %c0_374] : memref<1x1x8x2xf32, #tpu.memory_space<vmem>>, vector<1x1x1x1xf32>
    %686 = vector.shape_cast %685 : vector<1x1x1x1xf32> to vector<1x1xf32>
    %687 = vector.shape_cast %677 : vector<1x1xf32> to vector<1x1x1x1xf32>
    tpu.vector_store %arg6[%c0_371, %c0_372, %c7_373, %c0_374], %687 {strides = array<i32>} : memref<1x1x8x2xf32, #tpu.memory_space<vmem>>, vector<1x1x1x1xf32>,
    %c0_375 = arith.constant 0 : index
    %c0_376 = arith.constant 0 : index
    %c7_377 = arith.constant 7 : index
    %c1_378 = arith.constant 1 : index
    %688 = vector.load %arg6[%c0_375, %c0_376, %c7_377, %c1_378] : memref<1x1x8x2xf32, #tpu.memory_space<vmem>>, vector<1x1x1x1xf32>
    %689 = vector.shape_cast %688 : vector<1x1x1x1xf32> to vector<1x1xf32>
    %690 = vector.shape_cast %684 : vector<1x1xf32> to vector<1x1x1x1xf32>
    tpu.vector_store %arg6[%c0_375, %c0_376, %c7_377, %c1_378], %690 {strides = array<i32>} : memref<1x1x8x2xf32, #tpu.memory_space<vmem>>, vector<1x1x1x1xf32>,
    %691 = arith.truncf %675 : vector<1x256xf32> to vector<1x256xbf16>
    %c0_379 = arith.constant 0 : index
    %c7_380 = arith.constant 7 : index
    %c0_381 = arith.constant 0 : index
    %692 = vector.load %arg5[%c0_379, %c7_380, %c0_381] : memref<1x8x256xbf16, #tpu.memory_space<vmem>>, vector<1x1x256xbf16>
    %693 = vector.shape_cast %692 : vector<1x1x256xbf16> to vector<1x256xbf16>
    %694 = vector.shape_cast %691 : vector<1x256xbf16> to vector<1x1x256xbf16>
    tpu.vector_store %arg5[%c0_379, %c7_380, %c0_381], %694 {strides = array<i32>} : memref<1x8x256xbf16, #tpu.memory_space<vmem>>, vector<1x1x256xbf16>,
    return
  }
  func.func @transform_0(%arg0: i32, %arg1: i32) -> (i32, i32, i32, i32) {
    %c0_i32 = arith.constant 0 : i32
    %c0_i32_0 = arith.constant 0 : i32
    %c0_i32_1 = arith.constant 0 : i32
    %c0_i32_2 = arith.constant 0 : i32
    return %arg0, %c0_i32, %c0_i32_0, %c0_i32_1 : i32, i32, i32, i32
  }
  func.func @transform_1(%arg0: i32, %arg1: i32) -> i32 {
    %c0_i32 = arith.constant 0 : i32
    %c0_i32_0 = arith.constant 0 : i32
    return %c0_i32 : i32
  }
  func.func @transform_2(%arg0: i32, %arg1: i32) -> i32 {
    %c0_i32 = arith.constant 0 : i32
    %c0_i32_0 = arith.constant 0 : i32
    return %c0_i32 : i32
  }
  func.func @transform_3(%arg0: i32, %arg1: i32) -> (i32, i32, i32) {
    %c0_i32 = arith.constant 0 : i32
    %c0_i32_0 = arith.constant 0 : i32
    return %arg0, %c0_i32, %arg1 : i32, i32, i32
  }
  func.func @transform_4(%arg0: i32, %arg1: i32) -> (i32, i32, i32, i32) {
    %c0_i32 = arith.constant 0 : i32
    %c0_i32_0 = arith.constant 0 : i32
    %c0_i32_1 = arith.constant 0 : i32
    return %arg0, %arg1, %c0_i32, %c0_i32_0 : i32, i32, i32, i32
  }
}

</mosaic_0001>

<llo_original>
// kernel: depthwise_separable_conv2d.3
$region0: #{depthwise_separable_conv2d.3}
  #allocation0 [shape = 'u32[]', space=smem, size = 0x4, offset = 0x4, fixed_abs, tag = 'smem constant byte address 0x4 - core index']
  #allocation1 [shape = 'u32[144,128]{1,0:T(1,128)}', space=vmem, size = 0x12000, scoped, tag = 'internal scratch']
  %s0 = inlined_call_operand.vmem [shape: bf16[2,8,256], index: 0, kind: input, shape index: {}]
  %s1 = inlined_call_operand.vmem [shape: f32[8,1], index: 1, kind: input, shape index: {}]
  %s2 = inlined_call_operand.vmem [shape: f32[8,1], index: 2, kind: input, shape index: {}]
  %s3 = inlined_call_operand.vmem [shape: f32[2,8,256], index: 3, kind: output, shape index: {}]
  %s4 = sld [smem:[#allocation0]]
  $region45: #{depthwise_separable_conv2d.3} parent=0
    _
  %s6 = ssub.s32 1, %s4
  %s7 = scalar_select 0, %s6, %s4
  loop: start=0, step=1, limit=4
  $region2: #{depthwise_separable_conv2d.3} parent=0 // loop_pre_header
    _
  $region3: #{depthwise_separable_conv2d.3} parent=0 // loop_header
    %s9 = sphi 0, %s13
    %p10 = scmp.ge.s32.totalorder %s9, 4
    %s16 = sphi 0, %s28
    %s17 = sphi 0, %s24
    %s18 = sphi 0, %s16
    %s19 = sphi 0, %s17
    %s20 = sphi 0, %s18
    %s21 = sphi 0, %s19
    %s33 = sphi 0, %s35
    %s36 = sphi 0, %s33
    %s37 = sphi 0, %s36
    %s53 = sphi 0, %s37
    %s57 = sphi 0, %s57
    %s59 = sphi 0, %s57
    %s60 = sphi 0, %s59
    %s74 = sphi 0, %s60
    %s78 = sphi 0, %s78
    %s80 = sphi 0, %s78
    %s81 = sphi 0, %s80
    %s95 = sphi 0, %s81
    %s103 = sphi 0, %s105
    %s106 = sphi 0, %s103
    %s107 = sphi 0, %s106
    %s123 = sphi 0, %s107
  $region4: #{depthwise_separable_conv2d.3} parent=0 // loop_header_branch
    %12 = sbr.rel (%p10) target = $region8
  $region5: #{depthwise_separable_conv2d.3} parent=0 // loop_body
    %s14 = ssub.s32 %s9, 1
    %s15 = ssub.s32 %s9, 2
    %s22 = sadd.s32 1, %s17
    %p23 = scmp.ge.s32.totalorder %s22, 1
    %s24 = scalar_select %p23, 0, %s22
    %s25 = sadd.s32 1, %s16
    %s26 = scalar_select %p23, %s25, %s16
    %p27 = scmp.ge.s32.totalorder %s26, 2
    %s28 = scalar_select %p27, 0, %s26
    %s29 = ssub.s32 %s16, %s28
    %s30 = ssub.s32 %s17, %s24
    %s31 = sor.u32 %s29, %s30
    %p32 = scmp.eq.s32.totalorder %s31, 0
    %s34 = sadd.s32 %s33, 1
    %s35 = scalar_select %p32, %s33, %s34
    %p38 = pneg %p32
    %p39 = scmp.eq.s32.totalorder %s9, 1
    %p40 = por %p38, %p39
    %p41 = scmp.ne.s32.totalorder %s33, %s36
    %p42 = scmp.eq.s32.totalorder %s9, 0
    %p43 = por %p41, %p42
    %p44 = scmp.ne.s32.totalorder %s33, %s36
    %p45 = scmp.eq.s32.totalorder %s14, 1
    %p46 = por %p44, %p45
    %p47 = scmp.ne.s32.totalorder %s36, %s37
    %p48 = scmp.eq.s32.totalorder %s14, 0
    %p49 = por %p47, %p48
    %p50 = scmp.ne.s32.totalorder %s36, %s37
    %p51 = scmp.eq.s32.totalorder %s15, 1
    %p52 = por %p50, %p51
    %p54 = scmp.ne.s32.totalorder %s37, %s53
    %p55 = scmp.eq.s32.totalorder %s15, 0
    %p56 = por %p54, %p55
    %s58 = sadd.s32 %s57, 1
    %p61 = scmp.eq.s32.totalorder %s9, 1
    %p62 = scmp.ne.s32.totalorder %s57, %s59
    %p63 = scmp.eq.s32.totalorder %s9, 0
    %p64 = por %p62, %p63
    %p65 = scmp.ne.s32.totalorder %s57, %s59
    %p66 = scmp.eq.s32.totalorder %s14, 1
    %p67 = por %p65, %p66
    %p68 = scmp.ne.s32.totalorder %s59, %s60
    %p69 = scmp.eq.s32.totalorder %s14, 0
    %p70 = por %p68, %p69
    %p71 = scmp.ne.s32.totalorder %s59, %s60
    %p72 = scmp.eq.s32.totalorder %s15, 1
    %p73 = por %p71, %p72
    %p75 = scmp.ne.s32.totalorder %s60, %s74
    %p76 = scmp.eq.s32.totalorder %s15, 0
    %p77 = por %p75, %p76
    %s79 = sadd.s32 %s78, 1
    %p82 = scmp.eq.s32.totalorder %s9, 1
    %p83 = scmp.ne.s32.totalorder %s78, %s80
    %p84 = scmp.eq.s32.totalorder %s9, 0
    %p85 = por %p83, %p84
    %p86 = scmp.ne.s32.totalorder %s78, %s80
    %p87 = scmp.eq.s32.totalorder %s14, 1
    %p88 = por %p86, %p87
    %p89 = scmp.ne.s32.totalorder %s80, %s81
    %p90 = scmp.eq.s32.totalorder %s14, 0
    %p91 = por %p89, %p90
    %p92 = scmp.ne.s32.totalorder %s80, %s81
    %p93 = scmp.eq.s32.totalorder %s15, 1
    %p94 = por %p92, %p93
    %p96 = scmp.ne.s32.totalorder %s81, %s95
    %p97 = scmp.eq.s32.totalorder %s15, 0
    %p98 = por %p96, %p97
    %s99 = ssub.s32 %s16, %s28
    %s100 = ssub.s32 %s17, %s24
    %s101 = sor.u32 %s99, %s100
    %p102 = scmp.eq.s32.totalorder %s101, 0
    %s104 = sadd.s32 %s103, 1
    %s105 = scalar_select %p102, %s103, %s104
    %p108 = pneg %p102
    %p109 = scmp.eq.s32.totalorder %s9, 1
    %p110 = por %p108, %p109
    %p111 = scmp.ne.s32.totalorder %s103, %s106
    %p112 = scmp.eq.s32.totalorder %s9, 0
    %p113 = por %p111, %p112
    %p114 = scmp.ne.s32.totalorder %s103, %s106
    %p115 = scmp.eq.s32.totalorder %s14, 1
    %p116 = por %p114, %p115
    %p117 = scmp.ne.s32.totalorder %s106, %s107
    %p118 = scmp.eq.s32.totalorder %s14, 0
    %p119 = por %p117, %p118
    %p120 = scmp.ne.s32.totalorder %s106, %s107
    %p121 = scmp.eq.s32.totalorder %s15, 1
    %p122 = por %p120, %p121
    %p124 = scmp.ne.s32.totalorder %s107, %s123
    %p125 = scmp.eq.s32.totalorder %s15, 0
    %p126 = por %p124, %p125
    %p127 = scmp.le.s32.totalorder 1, %s9
    %p128 = scmp.lt.s32.totalorder %s9, 3
    %p129 = pnand %p127, %p128
    %p130 = pneg %p129
    // Predicated region
    $region9: #{depthwise_separable_conv2d.3} parent=5 // pred_check
      _
    $region10: #{depthwise_separable_conv2d.3} parent=5 // pred_check_branch
      %132 = sbr.rel (%p129) target = $region12
    $region11: #{depthwise_separable_conv2d.3} parent=5 // pred_region
      %s133 = ssub.s32 %s9, 1
      // Predicated region
      $region13: #{depthwise_separable_conv2d.3} parent=11 // pred_check
        %p134 = pneg %p70
      $region14: #{depthwise_separable_conv2d.3} parent=11 // pred_check_branch
        %136 = sbr.rel (%p134) target = $region16
      $region15: #{depthwise_separable_conv2d.3} parent=11 // pred_region
        _
      $region16: #{depthwise_separable_conv2d.3} parent=11 // pred_fallthru
        _
      // Predicated region
      $region17: #{depthwise_separable_conv2d.3} parent=11 // pred_check
        %p137 = pneg %p91
      $region18: #{depthwise_separable_conv2d.3} parent=11 // pred_check_branch
        %139 = sbr.rel (%p137) target = $region20
      $region19: #{depthwise_separable_conv2d.3} parent=11 // pred_region
        _
      $region20: #{depthwise_separable_conv2d.3} parent=11 // pred_fallthru
        _
    $region12: #{depthwise_separable_conv2d.3} parent=5 // pred_fallthru
      _
    %p140 = scmp.lt.s32.totalorder %s9, 2
    // Predicated region
    $region21: #{depthwise_separable_conv2d.3} parent=5 // pred_check
      %p141 = pneg %p140
    $region22: #{depthwise_separable_conv2d.3} parent=5 // pred_check_branch
      %143 = sbr.rel (%p141) target = $region24
    $region23: #{depthwise_separable_conv2d.3} parent=5 // pred_region
      // Predicated region
      $region25: #{depthwise_separable_conv2d.3} parent=23 // pred_check
        %p144 = pneg %p43
      $region26: #{depthwise_separable_conv2d.3} parent=23 // pred_check_branch
        %146 = sbr.rel (%p144) target = $region28
      $region27: #{depthwise_separable_conv2d.3} parent=23 // pred_region
        %s147 = smul.u32 2, %s17
        %p148 = scmp.lt.s32.totalorder %s16, 1
        %s149 = scalar_select %p148, %s16, 1
        %p150 = scmp.lt.s32.totalorder %s147, 1
        %s151 = scalar_select %p150, %s147, 1
        %s152 = smul.addr %s149, 2
        %s153 = sadd.s32 %s151, %s152
        %s154 = smul.addr %s153, 4
        %s155 = scalar_lea.vmem %s0, %s154
        %s156 = smul.u32 2, %s17
      $region28: #{depthwise_separable_conv2d.3} parent=23 // pred_fallthru
        _
    $region24: #{depthwise_separable_conv2d.3} parent=5 // pred_fallthru
      _
    %p157 = scmp.le.s32.totalorder 1, %s9
    %p158 = scmp.lt.s32.totalorder %s9, 3
    %p159 = pnand %p157, %p158
    %p160 = pneg %p159
    // Predicated region
    $region29: #{depthwise_separable_conv2d.3} parent=5 // pred_check
      _
    $region30: #{depthwise_separable_conv2d.3} parent=5 // pred_check_branch
      %162 = sbr.rel (%p159) target = $region32
    $region31: #{depthwise_separable_conv2d.3} parent=5 // pred_region
      %s163 = ssub.s32 %s9, 1
      %s164 = smul.u32 2, %s19
      %p165 = scmp.lt.s32.totalorder %s18, 1
      %s166 = scalar_select %p165, %s18, 1
      %p167 = scmp.lt.s32.totalorder %s164, 1
      %s168 = scalar_select %p167, %s164, 1
      %s169 = smul.addr %s166, 2
      %s170 = sadd.s32 %s168, %s169
      %s171 = smul.addr %s170, 4
      %s172 = scalar_lea.vmem %s0, %s171
      %p173 = pneg %p49
      %p174 = pneg %p46
      %p175 = pneg %p70
      %p176 = pneg %p67
      %p177 = pneg %p91
      %p178 = pneg %p88
      %p179 = pneg %p119
      %p180 = pneg %p116
      %s181 = smul.u32 2, %s19
      %p182 = scmp.lt.s32.totalorder %s18, 1
      %s183 = scalar_select %p182, %s18, 1
      %p184 = scmp.lt.s32.totalorder %s181, 1
      %s185 = scalar_select %p184, %s181, 1
      %s186 = smul.addr %s183, 2
      %s187 = sadd.s32 %s185, %s186
      %s188 = smul.addr %s187, 8
      %s189 = scalar_lea.vmem %s3, %s188
      %s190 = smul.u32 2, %s19
      %p191 = scmp.lt.s32.totalorder %s18, 1
      %s192 = scalar_select %p191, %s18, 1
      %p193 = scmp.lt.s32.totalorder %s190, 1
      %s194 = scalar_select %p193, %s190, 1
      %s195 = smul.addr %s192, 2
      %s196 = sadd.s32 %s194, %s195
      %s197 = smul.addr %s196, 4
      %s198 = scalar_lea.vmem %s0, %s197
      %s199 = smul.u32 2, %s19
      %s200 = smul.u32 2, %s19
      %p201 = scmp.lt.s32.totalorder %s18, 1
      %s202 = scalar_select %p201, %s18, 1
      %p203 = scmp.lt.s32.totalorder %s200, 1
      %s204 = scalar_select %p203, %s200, 1
      %s205 = smul.addr %s202, 2
      %s206 = sadd.s32 %s204, %s205
      %s207 = smul.addr %s206, 8
      %s208 = scalar_lea.vmem %s3, %s207
      %s209 = smul.u32 2, %s19
      %v210 = vld [vmem:[%s198] sm:$0xff]
      %v211 = vunpack.c.l.bf16 %v210
      %v212 = vunpack.c.h.bf16 %v210
      %v213 = vld [vmem:[%s1] sm:$0xff]
      %215 = vset.pattern.permute.xlu0 0
      %216 = vperm.xlu0 %215, %v213
      %v217 = vpop.permute.xlu0 %216
      %v219 = vmul.f32 %v211, %v217
      %v220 = vmul.f32 %v212, %v217
      %v221 = vld [vmem:[%s2] sm:$0xff]
      %223 = vset.pattern.permute.xlu0 0
      %224 = vperm.xlu0 %223, %v221
      %v225 = vpop.permute.xlu0 %224
      %v227 = vadd.f32 %v219, %v225
      %v228 = vadd.f32 %v220, %v225
      %v229 = vmax.f32 %v227, 0.0
      %v230 = vmax.f32 %v228, 0.0
      %231 = vst [vmem:[%s208] sm:$0xff] %v229
      %232 = vst [vmem:[%s208 + $0x8] sm:$0xff] %v230
      %s233 = smul.u32 2, %s19
      %p234 = scmp.lt.s32.totalorder %s18, 1
      %s235 = scalar_select %p234, %s18, 1
      %p236 = scmp.lt.s32.totalorder %s233, 1
      %s237 = scalar_select %p236, %s233, 1
      %s238 = smul.addr %s235, 2
      %s239 = sadd.s32 %s237, %s238
      %s240 = smul.addr %s239, 8
      %s241 = scalar_lea.vmem %s3, %s240
      // Predicated region
      $region33: #{depthwise_separable_conv2d.3} parent=31 // pred_check
        %p242 = pneg %p116
      $region34: #{depthwise_separable_conv2d.3} parent=31 // pred_check_branch
        %244 = sbr.rel (%p242) target = $region36
      $region35: #{depthwise_separable_conv2d.3} parent=31 // pred_region
        %s245 = smul.u32 2, %s19
      $region36: #{depthwise_separable_conv2d.3} parent=31 // pred_fallthru
        _
    $region32: #{depthwise_separable_conv2d.3} parent=5 // pred_fallthru
      _
    %p246 = scmp.le.s32.totalorder 2, %s9
    // Predicated region
    $region37: #{depthwise_separable_conv2d.3} parent=5 // pred_check
      %p247 = pneg %p246
    $region38: #{depthwise_separable_conv2d.3} parent=5 // pred_check_branch
      %249 = sbr.rel (%p247) target = $region40
    $region39: #{depthwise_separable_conv2d.3} parent=5 // pred_region
      %s250 = ssub.s32 %s9, 2
      // Predicated region
      $region41: #{depthwise_separable_conv2d.3} parent=39 // pred_check
        %p251 = pneg %p122
      $region42: #{depthwise_separable_conv2d.3} parent=39 // pred_check_branch
        %253 = sbr.rel (%p251) target = $region44
      $region43: #{depthwise_separable_conv2d.3} parent=39 // pred_region
        %s254 = smul.u32 2, %s21
        %p255 = scmp.lt.s32.totalorder %s20, 1
        %s256 = scalar_select %p255, %s20, 1
        %p257 = scmp.lt.s32.totalorder %s254, 1
        %s258 = scalar_select %p257, %s254, 1
        %s259 = smul.addr %s256, 2
        %s260 = sadd.s32 %s258, %s259
        %s261 = smul.addr %s260, 8
        %s262 = scalar_lea.vmem %s3, %s261
      $region44: #{depthwise_separable_conv2d.3} parent=39 // pred_fallthru
        _
    $region40: #{depthwise_separable_conv2d.3} parent=5 // pred_fallthru
      _
  $region6: #{depthwise_separable_conv2d.3} parent=0 // loop_footer
    %s13 = sadd.s32 1, %s9
  $region7: #{depthwise_separable_conv2d.3} parent=0 // loop_footer_branch
    %8 = sbr.rel target = $region3
  $region8: #{depthwise_separable_conv2d.3} parent=0 // loop_exit
    _

// kernel: depthwise_separable_conv2d.2
$region0: #{depthwise_separable_conv2d.2}
  #allocation0 [shape = 'u32[]', space=smem, size = 0x4, offset = 0x4, fixed_abs, tag = 'smem constant byte address 0x4 - core index']
  #allocation1 [shape = 'u32[144,128]{1,0:T(1,128)}', space=vmem, size = 0x12000, scoped, tag = 'internal scratch']
  #allocation2 [shape = 'f32[4,256]{1,0:T(4,128)}', space=vmem, size = 0x1000, scoped, tag = 'scratch operand']
  #allocation3 [shape = 'f32[4,18,18]{2,1,0:T(8,128)}', space=vmem, size = 0xc000, scoped, tag = 'scratch operand']
  %s0 = inlined_call_operand.hbm [shape: f32[2,4,16,16], index: 0, kind: input, shape index: {}]
  %s1 = inlined_call_operand.vmem [shape: f32[36], index: 1, kind: input, shape index: {}]
  %s2 = inlined_call_operand.vmem [shape: f32[32], index: 2, kind: input, shape index: {}]
  %s3 = inlined_call_operand.vmem [shape: bf16[2,8,256], index: 3, kind: output, shape index: {0}]
  %s4 = inlined_call_operand.vmem [shape: f32[2,1,8,2], index: 4, kind: output, shape index: {1}]
  %5 = xla_tuple %s3, %s4
  %s6 = sld [smem:[#allocation0]]
  $region65: #{depthwise_separable_conv2d.2} parent=0
    _
  %s8 = ssub.s32 1, %s6
  %s9 = scalar_select 0, %s8, %s6
  $region1: #{depthwise_separable_conv2d.2} parent=0
    #allocation4 [shape = 'u8[65536]{0}', space=vmem, size = 0x10000, scoped, tag = 'input window, operand 0']
    #allocation5 [shape = 's32[2]{0}', space=sflag, size = 0x8, scoped, tag = 'scoped memory for depthwise_separable_conv2d.2']
    #allocation6 [shape = 's32[2]{0}', space=sflag, size = 0x8, scoped, tag = 'scoped memory for depthwise_separable_conv2d.2']
    #allocation7 [shape = 'u8[512]{0}', space=smem, size = 0x200, scoped, tag = 'input window, operand 1, single buffered']
    #allocation8 [shape = 'u8[512]{0}', space=smem, size = 0x200, scoped, tag = 'input window, operand 2, single buffered']
    #allocation9 [shape = 's32[1]{0}', space=sflag, size = 0x4, scoped, tag = 'scoped memory for depthwise_separable_conv2d.2']
    %10 = vsyncpa [#allocation5], 0
    %s11 = scalar_lea.sflag [#allocation5], 1
    %12 = vsyncpa %s11, 0
    %13 = vsyncpa [#allocation6], 0
    %14 = vsyncpa [#allocation9], 0
    loop: start=0, step=1, limit=4
    $region2: #{depthwise_separable_conv2d.2} parent=1 // loop_pre_header
      _
    $region3: #{depthwise_separable_conv2d.2} parent=1 // loop_header
      %s16 = sphi 0, %s20
      %p17 = scmp.ge.s32.totalorder %s16, 4
      %s23 = sphi 0, %s35
      %s24 = sphi 0, %s31
      %s25 = sphi 0, %s23
      %s26 = sphi 0, %s24
      %s27 = sphi 0, %s25
      %s28 = sphi 0, %s26
      %s38 = sphi 0, %s40
      %s41 = sphi 0, %s38
      %s42 = sphi 0, %s41
      %s58 = sphi 0, %s42
      %s62 = sphi 0, %s62
      %s64 = sphi 0, %s62
      %s65 = sphi 0, %s64
      %s79 = sphi 0, %s65
      %s83 = sphi 0, %s83
      %s85 = sphi 0, %s83
      %s86 = sphi 0, %s85
      %s100 = sphi 0, %s86
      %s108 = sphi 0, %s110
      %s111 = sphi 0, %s108
      %s112 = sphi 0, %s111
      %s128 = sphi 0, %s112
      %s136 = sphi 0, %s138
      %s139 = sphi 0, %s136
      %s140 = sphi 0, %s139
      %s156 = sphi 0, %s140
    $region4: #{depthwise_separable_conv2d.2} parent=1 // loop_header_branch
      %19 = sbr.rel (%p17) target = $region8
    $region5: #{depthwise_separable_conv2d.2} parent=1 // loop_body
      %s21 = ssub.s32 %s16, 1
      %s22 = ssub.s32 %s16, 2
      %s29 = sadd.s32 1, %s24
      %p30 = scmp.ge.s32.totalorder %s29, 1
      %s31 = scalar_select %p30, 0, %s29
      %s32 = sadd.s32 1, %s23
      %s33 = scalar_select %p30, %s32, %s23
      %p34 = scmp.ge.s32.totalorder %s33, 2
      %s35 = scalar_select %p34, 0, %s33
      %s36 = ssub.s32 %s23, %s35
      %p37 = scmp.eq.s32.totalorder %s36, 0
      %s39 = sadd.s32 %s38, 1
      %s40 = scalar_select %p37, %s38, %s39
      %p43 = pneg %p37
      %p44 = scmp.eq.s32.totalorder %s16, 1
      %p45 = por %p43, %p44
      %p46 = scmp.ne.s32.totalorder %s38, %s41
      %p47 = scmp.eq.s32.totalorder %s16, 0
      %p48 = por %p46, %p47
      %p49 = scmp.ne.s32.totalorder %s38, %s41
      %p50 = scmp.eq.s32.totalorder %s21, 1
      %p51 = por %p49, %p50
      %p52 = scmp.ne.s32.totalorder %s41, %s42
      %p53 = scmp.eq.s32.totalorder %s21, 0
      %p54 = por %p52, %p53
      %p55 = scmp.ne.s32.totalorder %s41, %s42
      %p56 = scmp.eq.s32.totalorder %s22, 1
      %p57 = por %p55, %p56
      %p59 = scmp.ne.s32.totalorder %s42, %s58
      %p60 = scmp.eq.s32.totalorder %s22, 0
      %p61 = por %p59, %p60
      %s63 = sadd.s32 %s62, 1
      %p66 = scmp.eq.s32.totalorder %s16, 1
      %p67 = scmp.ne.s32.totalorder %s62, %s64
      %p68 = scmp.eq.s32.totalorder %s16, 0
      %p69 = por %p67, %p68
      %p70 = scmp.ne.s32.totalorder %s62, %s64
      %p71 = scmp.eq.s32.totalorder %s21, 1
      %p72 = por %p70, %p71
      %p73 = scmp.ne.s32.totalorder %s64, %s65
      %p74 = scmp.eq.s32.totalorder %s21, 0
      %p75 = por %p73, %p74
      %p76 = scmp.ne.s32.totalorder %s64, %s65
      %p77 = scmp.eq.s32.totalorder %s22, 1
      %p78 = por %p76, %p77
      %p80 = scmp.ne.s32.totalorder %s65, %s79
      %p81 = scmp.eq.s32.totalorder %s22, 0
      %p82 = por %p80, %p81
      %s84 = sadd.s32 %s83, 1
      %p87 = scmp.eq.s32.totalorder %s16, 1
      %p88 = scmp.ne.s32.totalorder %s83, %s85
      %p89 = scmp.eq.s32.totalorder %s16, 0
      %p90 = por %p88, %p89
      %p91 = scmp.ne.s32.totalorder %s83, %s85
      %p92 = scmp.eq.s32.totalorder %s21, 1
      %p93 = por %p91, %p92
      %p94 = scmp.ne.s32.totalorder %s85, %s86
      %p95 = scmp.eq.s32.totalorder %s21, 0
      %p96 = por %p94, %p95
      %p97 = scmp.ne.s32.totalorder %s85, %s86
      %p98 = scmp.eq.s32.totalorder %s22, 1
      %p99 = por %p97, %p98
      %p101 = scmp.ne.s32.totalorder %s86, %s100
      %p102 = scmp.eq.s32.totalorder %s22, 0
      %p103 = por %p101, %p102
      %s104 = ssub.s32 %s23, %s35
      %s105 = ssub.s32 %s24, %s31
      %s106 = sor.u32 %s104, %s105
      %p107 = scmp.eq.s32.totalorder %s106, 0
      %s109 = sadd.s32 %s108, 1
      %s110 = scalar_select %p107, %s108, %s109
      %p113 = pneg %p107
      %p114 = scmp.eq.s32.totalorder %s16, 1
      %p115 = por %p113, %p114
      %p116 = scmp.ne.s32.totalorder %s108, %s111
      %p117 = scmp.eq.s32.totalorder %s16, 0
      %p118 = por %p116, %p117
      %p119 = scmp.ne.s32.totalorder %s108, %s111
      %p120 = scmp.eq.s32.totalorder %s21, 1
      %p121 = por %p119, %p120
      %p122 = scmp.ne.s32.totalorder %s111, %s112
      %p123 = scmp.eq.s32.totalorder %s21, 0
      %p124 = por %p122, %p123
      %p125 = scmp.ne.s32.totalorder %s111, %s112
      %p126 = scmp.eq.s32.totalorder %s22, 1
      %p127 = por %p125, %p126
      %p129 = scmp.ne.s32.totalorder %s112, %s128
      %p130 = scmp.eq.s32.totalorder %s22, 0
      %p131 = por %p129, %p130
      %s132 = ssub.s32 %s23, %s35
      %s133 = ssub.s32 %s24, %s31
      %s134 = sor.u32 %s132, %s133
      %p135 = scmp.eq.s32.totalorder %s134, 0
      %s137 = sadd.s32 %s136, 1
      %s138 = scalar_select %p135, %s136, %s137
      %p141 = pneg %p135
      %p142 = scmp.eq.s32.totalorder %s16, 1
      %p143 = por %p141, %p142
      %p144 = scmp.ne.s32.totalorder %s136, %s139
      %p145 = scmp.eq.s32.totalorder %s16, 0
      %p146 = por %p144, %p145
      %p147 = scmp.ne.s32.totalorder %s136, %s139
      %p148 = scmp.eq.s32.totalorder %s21, 1
      %p149 = por %p147, %p148
      %p150 = scmp.ne.s32.totalorder %s139, %s140
      %p151 = scmp.eq.s32.totalorder %s21, 0
      %p152 = por %p150, %p151
      %p153 = scmp.ne.s32.totalorder %s139, %s140
      %p154 = scmp.eq.s32.totalorder %s22, 1
      %p155 = por %p153, %p154
      %p157 = scmp.ne.s32.totalorder %s140, %s156
      %p158 = scmp.eq.s32.totalorder %s22, 0
      %p159 = por %p157, %p158
      %p160 = scmp.le.s32.totalorder 1, %s16
      %p161 = scmp.lt.s32.totalorder %s16, 3
      %p162 = pnand %p160, %p161
      %p163 = pneg %p162
      // Predicated region
      $region9: #{depthwise_separable_conv2d.2} parent=5 // pred_check
        _
      $region10: #{depthwise_separable_conv2d.2} parent=5 // pred_check_branch
        %165 = sbr.rel (%p162) target = $region12
      $region11: #{depthwise_separable_conv2d.2} parent=5 // pred_region
        %s166 = ssub.s32 %s16, 1
        // Predicated region
        $region13: #{depthwise_separable_conv2d.2} parent=11 // pred_check
          %p167 = pneg %p75
        $region14: #{depthwise_separable_conv2d.2} parent=11 // pred_check_branch
          %169 = sbr.rel (%p167) target = $region16
        $region15: #{depthwise_separable_conv2d.2} parent=11 // pred_region
          %s171 = ssub.s32 16, 16
          %172 = vsyncadd [#allocation6], %s171
          %s174 = sshll.u32 %s1, 4
          %s175 = int_to_ptr.vmem [resolvable:$true] %s174
          %177 = dma.vmem_to_smem %s175, 16, [#allocation7], [#allocation6]
        $region16: #{depthwise_separable_conv2d.2} parent=11 // pred_fallthru
          _
        // Predicated region
        $region17: #{depthwise_separable_conv2d.2} parent=11 // pred_check
          %p178 = pneg %p96
        $region18: #{depthwise_separable_conv2d.2} parent=11 // pred_check_branch
          %180 = sbr.rel (%p178) target = $region20
        $region19: #{depthwise_separable_conv2d.2} parent=11 // pred_region
          %s182 = ssub.s32 16, 16
          %183 = vsyncadd [#allocation9], %s182
          %s185 = sshll.u32 %s2, 4
          %s186 = int_to_ptr.vmem [resolvable:$true] %s185
          %188 = dma.vmem_to_smem %s186, 16, [#allocation8], [#allocation9]
        $region20: #{depthwise_separable_conv2d.2} parent=11 // pred_fallthru
          _
      $region12: #{depthwise_separable_conv2d.2} parent=5 // pred_fallthru
        _
      %p189 = scmp.lt.s32.totalorder %s16, 2
      // Predicated region
      $region21: #{depthwise_separable_conv2d.2} parent=5 // pred_check
        %p190 = pneg %p189
      $region22: #{depthwise_separable_conv2d.2} parent=5 // pred_check_branch
        %192 = sbr.rel (%p190) target = $region24
      $region23: #{depthwise_separable_conv2d.2} parent=5 // pred_region
        // Predicated region
        $region25: #{depthwise_separable_conv2d.2} parent=23 // pred_check
          %p193 = pneg %p48
        $region26: #{depthwise_separable_conv2d.2} parent=23 // pred_check_branch
          %195 = sbr.rel (%p193) target = $region28
        $region27: #{depthwise_separable_conv2d.2} parent=23 // pred_region
          %s196 = sand.u32 %s38, 1
          %s197 = scalar_lea.sflag [#allocation5], %s196
          %s198 = sand.u32 %s38, 1
          %s199 = smul.addr %s198, 64
          %s200 = scalar_lea.vmem [#allocation4], %s199
          %s202 = ssub.s32 1024, 1024
          %203 = vsyncadd %s197, %s202
          %s204 = smul.addr %s23, 8
          %s205 = smul.addr %s204, 128
          %s206 = scalar_lea.hbm %s0, %s205
          %s207 = sshll.u32 %s200, 4
          %s208 = int_to_ptr.vmem [resolvable:$true] %s207
          %213 = dma.hbm_to_vmem [thread:$0]  %s206, 1024, %s208, %s197, 128, 128, 8
        $region28: #{depthwise_separable_conv2d.2} parent=23 // pred_fallthru
          _
      $region24: #{depthwise_separable_conv2d.2} parent=5 // pred_fallthru
        _
      %p214 = scmp.le.s32.totalorder 1, %s16
      %p215 = scmp.lt.s32.totalorder %s16, 3
      %p216 = pnand %p214, %p215
      %p217 = pneg %p216
      // Predicated region
      $region29: #{depthwise_separable_conv2d.2} parent=5 // pred_check
        _
      $region30: #{depthwise_separable_conv2d.2} parent=5 // pred_check_branch
        %219 = sbr.rel (%p216) target = $region32
      $region31: #{depthwise_separable_conv2d.2} parent=5 // pred_region
        %s220 = ssub.s32 %s16, 1
        %s221 = sand.u32 %s41, 1
        %s222 = scalar_lea.sflag [#allocation5], %s221
        %s223 = sand.u32 %s41, 1
        %s224 = smul.addr %s223, 64
        %s225 = scalar_lea.vmem [#allocation4], %s224
        // Predicated region
        $region33: #{depthwise_separable_conv2d.2} parent=31 // pred_check
          %p226 = pneg %p54
        $region34: #{depthwise_separable_conv2d.2} parent=31 // pred_check_branch
          %228 = sbr.rel (%p226) target = $region36
        $region35: #{depthwise_separable_conv2d.2} parent=31 // pred_region
          %229 = dma.done %s222, 1024
        $region36: #{depthwise_separable_conv2d.2} parent=31 // pred_fallthru
          _
        // Predicated region
        $region37: #{depthwise_separable_conv2d.2} parent=31 // pred_check
          %p230 = pneg %p75
        $region38: #{depthwise_separable_conv2d.2} parent=31 // pred_check_branch
          %232 = sbr.rel (%p230) target = $region40
        $region39: #{depthwise_separable_conv2d.2} parent=31 // pred_region
          %233 = dma.done [#allocation6], 16
        $region40: #{depthwise_separable_conv2d.2} parent=31 // pred_fallthru
          _
        // Predicated region
        $region41: #{depthwise_separable_conv2d.2} parent=31 // pred_check
          %p234 = pneg %p96
        $region42: #{depthwise_separable_conv2d.2} parent=31 // pred_check_branch
          %236 = sbr.rel (%p234) target = $region44
        $region43: #{depthwise_separable_conv2d.2} parent=31 // pred_region
          %237 = dma.done [#allocation9], 16
        $region44: #{depthwise_separable_conv2d.2} parent=31 // pred_fallthru
          _
        %238 = sfence
        %s239 = sand.u32 %s41, 1
        %s240 = scalar_lea.sflag [#allocation5], %s239
        %s241 = sand.u32 %s41, 1
        %s242 = smul.addr %s241, 64
        %s243 = scalar_lea.vmem [#allocation4], %s242
        %p244 = pneg %p54
        %p245 = pneg %p51
        %p246 = pneg %p75
        %p247 = pneg %p72
        %p248 = pneg %p96
        %p249 = pneg %p93
        %p250 = pneg %p124
        %p251 = pneg %p121
        %s252 = smul.u32 2, %s26
        %p253 = scmp.lt.s32.totalorder %s25, 1
        %s254 = scalar_select %p253, %s25, 1
        %p255 = scmp.lt.s32.totalorder %s252, 1
        %s256 = scalar_select %p255, %s252, 1
        %s257 = smul.addr %s254, 2
        %s258 = sadd.s32 %s256, %s257
        %s259 = smul.addr %s258, 4
        %s260 = scalar_lea.vmem %s3, %s259
        %p261 = pneg %p152
        %p262 = pneg %p149
        %p263 = scmp.lt.s32.totalorder %s25, 1
        %s264 = scalar_select %p263, %s25, 1
        %p265 = scmp.lt.s32.totalorder %s26, 0
        %s266 = scalar_select %p265, %s26, 0
        %s267 = sadd.s32 %s266, %s264
        %s268 = smul.addr %s267, 8
        %s269 = scalar_lea.vmem %s4, %s268
        %s270 = smul.u32 2, %s26
        %p271 = scmp.lt.s32.totalorder %s25, 1
        %s272 = scalar_select %p271, %s25, 1
        %p273 = scmp.lt.s32.totalorder %s270, 1
        %s274 = scalar_select %p273, %s270, 1
        %s275 = smul.addr %s272, 2
        %s276 = sadd.s32 %s274, %s275
        %s277 = smul.addr %s276, 4
        %s278 = scalar_lea.vmem %s3, %s277
        %s279 = smul.u32 2, %s26
        %p280 = scmp.lt.s32.totalorder %s25, 1
        %s281 = scalar_select %p280, %s25, 1
        %p282 = scmp.lt.s32.totalorder %s26, 0
        %s283 = scalar_select %p282, %s26, 0
        %s284 = sadd.s32 %s283, %s281
        %s285 = smul.addr %s284, 8
        %s286 = scalar_lea.vmem %s4, %s285
        %s287 = smul.u32 %s26, 16
        %vm288 = vcmask 146432
        %289 = vst.msk [vmem:[#allocation3] sm:$0xff] %vm288, 0.0
        %290 = vst.msk [vmem:[#allocation3 + $0x8] sm:$0xff] %vm288, 0.0
        %vm291 = vcmask 140288
        %292 = vst.msk [vmem:[#allocation3 + $0x10] sm:$0x3] %vm291, 0.0
        %293 = vst.msk [vmem:[#allocation3 + $0x18] sm:$0xff] %vm288, 0.0
        %294 = vst.msk [vmem:[#allocation3 + $0x20] sm:$0xff] %vm288, 0.0
        %295 = vst.msk [vmem:[#allocation3 + $0x28] sm:$0x3] %vm291, 0.0
        %296 = vst.msk [vmem:[#allocation3 + $0x30] sm:$0xff] %vm288, 0.0
        %297 = vst.msk [vmem:[#allocation3 + $0x38] sm:$0xff] %vm288, 0.0
        %298 = vst.msk [vmem:[#allocation3 + $0x40] sm:$0x3] %vm291, 0.0
        %299 = vst.msk [vmem:[#allocation3 + $0x48] sm:$0xff] %vm288, 0.0
        %300 = vst.msk [vmem:[#allocation3 + $0x50] sm:$0xff] %vm288, 0.0
        %301 = vst.msk [vmem:[#allocation3 + $0x58] sm:$0x3] %vm291, 0.0
        %v302 = vld [vmem:[%s225] sm:$0xff]
        %v303 = vld [vmem:[%s225 + $0x8] sm:$0xff]
        %v304 = vld [vmem:[%s225 + $0x10] sm:$0xff]
        %v305 = vld [vmem:[%s225 + $0x18] sm:$0xff]
        %v306 = vld [vmem:[%s225 + $0x20] sm:$0xff]
        %v307 = vld [vmem:[%s225 + $0x28] sm:$0xff]
        %v308 = vld [vmem:[%s225 + $0x30] sm:$0xff]
        %v309 = vld [vmem:[%s225 + $0x38] sm:$0xff]
        %318 = vrot.lane.b32.xlu0 %v302, 1
        %v319 = vpop.permute.xlu0 %318
        %320 = vrot.lane.b32.xlu0 %v303, 1
        %v321 = vpop.permute.xlu0 %320
        %322 = vrot.lane.b32.xlu0 %v304, 1
        %v323 = vpop.permute.xlu0 %322
        %324 = vrot.lane.b32.xlu0 %v305, 1
        %v325 = vpop.permute.xlu0 %324
        %326 = vrot.lane.b32.xlu0 %v306, 1
        %v327 = vpop.permute.xlu0 %326
        %328 = vrot.lane.b32.xlu0 %v307, 1
        %v329 = vpop.permute.xlu0 %328
        %330 = vrot.lane.b32.xlu0 %v308, 1
        %v331 = vpop.permute.xlu0 %330
        %332 = vrot.lane.b32.xlu0 %v309, 1
        %v333 = vpop.permute.xlu0 %332
        %vm342 = vcmask 138248
        %343 = vst.msk [vmem:[#allocation3 + $0x1] sm:$0xff] %vm342, %v319
        %344 = vst.msk [vmem:[#allocation3 + $0x9] sm:$0xff] %vm342, %v321
        %345 = vst.msk [vmem:[#allocation3 + $0x19] sm:$0xff] %vm342, %v323
        %346 = vst.msk [vmem:[#allocation3 + $0x21] sm:$0xff] %vm342, %v325
        %347 = vst.msk [vmem:[#allocation3 + $0x31] sm:$0xff] %vm342, %v327
        %348 = vst.msk [vmem:[#allocation3 + $0x39] sm:$0xff] %vm342, %v329
        %349 = vst.msk [vmem:[#allocation3 + $0x49] sm:$0xff] %vm342, %v331
        %350 = vst.msk [vmem:[#allocation3 + $0x51] sm:$0xff] %vm342, %v333
        %s351 = scalar_lea.vmem [#allocation3], %s287
        %v352 = vld [vmem:[%s351] sm:$0xff]
        %v353 = vld [vmem:[%s351 + $0x8] sm:$0xff]
        %s354 = sld [smem:[#allocation7]]
        %v355 = vstv %s354
        %v356 = vmul.f32 %v352, %v355
        %v357 = vmul.f32 %v353, %v355
        %s358 = sld [smem:[#allocation7 + $0x1]]
        %v359 = vstv %s358
        %v360 = vmul.f32 %v352, %v359
        %v361 = vmul.f32 %v353, %v359
        %364 = vrot.lane.b32.xlu0 %v360, 127
        %v365 = vpop.permute.xlu0 %364
        %366 = vrot.lane.b32.xlu0 %v361, 127
        %v367 = vpop.permute.xlu0 %366
        %v370 = vadd.f32 %v356, %v365
        %v371 = vadd.f32 %v357, %v367
        %s372 = sld [smem:[#allocation7 + $0x2]]
        %v373 = vstv %s372
        %v374 = vmul.f32 %v352, %v373
        %v375 = vmul.f32 %v353, %v373
        %378 = vrot.lane.b32.xlu0 %v374, 126
        %v379 = vpop.permute.xlu0 %378
        %380 = vrot.lane.b32.xlu0 %v375, 126
        %v381 = vpop.permute.xlu0 %380
        %v384 = vadd.f32 %v370, %v379
        %v385 = vadd.f32 %v371, %v381
        %s386 = sadd.s32 %s287, 1
        %s387 = scalar_lea.vmem [#allocation3], %s386
        %v388 = vld [vmem:[%s387] sm:$0xff]
        %v389 = vld [vmem:[%s387 + $0x8] sm:$0xff]
        %s390 = sld [smem:[#allocation7 + $0x3]]
        %v391 = vstv %s390
        %v392 = vmul.f32 %v388, %v391
        %v393 = vmul.f32 %v389, %v391
        %v394 = vadd.f32 %v384, %v392
        %v395 = vadd.f32 %v385, %v393
        %s396 = sld [smem:[#allocation7 + $0x4]]
        %v397 = vstv %s396
        %v398 = vmul.f32 %v388, %v397
        %v399 = vmul.f32 %v389, %v397
        %402 = vrot.lane.b32.xlu0 %v398, 127
        %v403 = vpop.permute.xlu0 %402
        %404 = vrot.lane.b32.xlu0 %v399, 127
        %v405 = vpop.permute.xlu0 %404
        %v408 = vadd.f32 %v394, %v403
        %v409 = vadd.f32 %v395, %v405
        %s410 = sld [smem:[#allocation7 + $0x5]]
        %v411 = vstv %s410
        %v412 = vmul.f32 %v388, %v411
        %v413 = vmul.f32 %v389, %v411
        %416 = vrot.lane.b32.xlu0 %v412, 126
        %v417 = vpop.permute.xlu0 %416
        %418 = vrot.lane.b32.xlu0 %v413, 126
        %v419 = vpop.permute.xlu0 %418
        %v422 = vadd.f32 %v408, %v417
        %v423 = vadd.f32 %v409, %v419
        %s424 = sadd.s32 %s287, 2
        %s425 = scalar_lea.vmem [#allocation3], %s424
        %v426 = vld [vmem:[%s425] sm:$0xff]
        %v427 = vld [vmem:[%s425 + $0x8] sm:$0xff]
        %s428 = sld [smem:[#allocation7 + $0x6]]
        %v429 = vstv %s428
        %v430 = vmul.f32 %v426, %v429
        %v431 = vmul.f32 %v427, %v429
        %v432 = vadd.f32 %v422, %v430
        %v433 = vadd.f32 %v423, %v431
        %s434 = sld [smem:[#allocation7 + $0x7]]
        %v435 = vstv %s434
        %v436 = vmul.f32 %v426, %v435
        %v437 = vmul.f32 %v427, %v435
        %440 = vrot.lane.b32.xlu0 %v436, 127
        %v441 = vpop.permute.xlu0 %440
        %442 = vrot.lane.b32.xlu0 %v437, 127
        %v443 = vpop.permute.xlu0 %442
        %v446 = vadd.f32 %v432, %v441
        %v447 = vadd.f32 %v433, %v443
        %s448 = sld [smem:[#allocation7 + $0x8]]
        %v449 = vstv %s448
        %v450 = vmul.f32 %v426, %v449
        %v451 = vmul.f32 %v427, %v449
        %454 = vrot.lane.b32.xlu0 %v450, 126
        %v455 = vpop.permute.xlu0 %454
        %456 = vrot.lane.b32.xlu0 %v451, 126
        %v457 = vpop.permute.xlu0 %456
        %v460 = vadd.f32 %v446, %v455
        %v461 = vadd.f32 %v447, %v457
        %vm462 = vcmask 122880
        %463 = vst.msk [vmem:[#allocation2] sm:$0x1] %vm462, %v460
        %v465 = vrot.slane %v460, 5
        %v466 = vrot.slane %v465, 4
        %467 = vrot.lane.b32.xlu0 %v466, 16
        %v468 = vpop.permute.xlu0 %467
        %vm470 = vcmask 254080
        %471 = vst.msk [vmem:[#allocation2] sm:$0x1] %vm470, %v468
        %v472 = vrot.slane %v460, 6
        %v473 = vrot.slane %v472, 4
        %474 = vrot.lane.b32.xlu0 %v473, 32
        %v475 = vpop.permute.xlu0 %474
        %vm477 = vcmask 385280
        %478 = vst.msk [vmem:[#allocation2] sm:$0x1] %vm477, %v475
        %v479 = vrot.slane %v460, 7
        %v480 = vrot.slane %v479, 4
        %481 = vrot.lane.b32.xlu0 %v480, 48
        %v482 = vpop.permute.xlu0 %481
        %vm484 = vcmask 516480
        %485 = vst.msk [vmem:[#allocation2] sm:$0x1] %vm484, %v482
        %v486 = vcombine.high %v460, %v460
        %487 = vrot.lane.b32.xlu0 %v486, 64
        %v488 = vpop.permute.xlu0 %487
        %vm490 = vcmask 647680
        %491 = vst.msk [vmem:[#allocation2] sm:$0x1] %vm490, %v488
        %v492 = vrot.slane %v486, 5
        %v493 = vrot.slane %v492, 4
        %494 = vrot.lane.b32.xlu0 %v493, 80
        %v495 = vpop.permute.xlu0 %494
        %vm497 = vcmask 778880
        %498 = vst.msk [vmem:[#allocation2] sm:$0x1] %vm497, %v495
        %v499 = vrot.slane %v486, 6
        %v500 = vrot.slane %v499, 4
        %501 = vrot.lane.b32.xlu0 %v500, 96
        %v502 = vpop.permute.xlu0 %501
        %vm504 = vcmask 910080
        %505 = vst.msk [vmem:[#allocation2] sm:$0x1] %vm504, %v502
        %v506 = vrot.slane %v486, 7
        %v507 = vrot.slane %v506, 4
        %508 = vrot.lane.b32.xlu0 %v507, 112
        %v509 = vpop.permute.xlu0 %508
        %vm511 = vcmask 1041280
        %512 = vst.msk [vmem:[#allocation2] sm:$0x1] %vm511, %v509
        %513 = vst.msk [vmem:[#allocation2 + $0x4] sm:$0x1] %vm462, %v461
        %v515 = vrot.slane %v461, 5
        %v516 = vrot.slane %v515, 4
        %517 = vrot.lane.b32.xlu0 %v516, 16
        %v518 = vpop.permute.xlu0 %517
        %520 = vst.msk [vmem:[#allocation2 + $0x4] sm:$0x1] %vm470, %v518
        %v521 = vrot.slane %v461, 6
        %v522 = vrot.slane %v521, 4
        %523 = vrot.lane.b32.xlu0 %v522, 32
        %v524 = vpop.permute.xlu0 %523
        %526 = vst.msk [vmem:[#allocation2 + $0x4] sm:$0x1] %vm477, %v524
        %v527 = vrot.slane %v461, 7
        %v528 = vrot.slane %v527, 4
        %529 = vrot.lane.b32.xlu0 %v528, 48
        %v530 = vpop.permute.xlu0 %529
        %532 = vst.msk [vmem:[#allocation2 + $0x4] sm:$0x1] %vm484, %v530
        %v533 = vcombine.high %v461, %v461
        %534 = vrot.lane.b32.xlu0 %v533, 64
        %v535 = vpop.permute.xlu0 %534
        %537 = vst.msk [vmem:[#allocation2 + $0x4] sm:$0x1] %vm490, %v535
        %v538 = vrot.slane %v533, 5
        %v539 = vrot.slane %v538, 4
        %540 = vrot.lane.b32.xlu0 %v539, 80
        %v541 = vpop.permute.xlu0 %540
        %543 = vst.msk [vmem:[#allocation2 + $0x4] sm:$0x1] %vm497, %v541
        %v544 = vrot.slane %v533, 6
        %v545 = vrot.slane %v544, 4
        %546 = vrot.lane.b32.xlu0 %v545, 96
        %v547 = vpop.permute.xlu0 %546
        %549 = vst.msk [vmem:[#allocation2 + $0x4] sm:$0x1] %vm504, %v547
        %v550 = vrot.slane %v533, 7
        %v551 = vrot.slane %v550, 4
        %552 = vrot.lane.b32.xlu0 %v551, 112
        %v553 = vpop.permute.xlu0 %552
        %555 = vst.msk [vmem:[#allocation2 + $0x4] sm:$0x1] %vm511, %v553
        %s556 = sadd.s32 %s287, 24
        %s557 = scalar_lea.vmem [#allocation3], %s556
        %v558 = vld [vmem:[%s557] sm:$0xff]
        %v559 = vld [vmem:[%s557 + $0x8] sm:$0xff]
        %s560 = sld [smem:[#allocation7 + $0x9]]
        %v561 = vstv %s560
        %v562 = vmul.f32 %v558, %v561
        %v563 = vmul.f32 %v559, %v561
        %s564 = sld [smem:[#allocation7 + $0xa]]
        %v565 = vstv %s564
        %v566 = vmul.f32 %v558, %v565
        %v567 = vmul.f32 %v559, %v565
        %570 = vrot.lane.b32.xlu0 %v566, 127
        %v571 = vpop.permute.xlu0 %570
        %572 = vrot.lane.b32.xlu0 %v567, 127
        %v573 = vpop.permute.xlu0 %572
        %v576 = vadd.f32 %v562, %v571
        %v577 = vadd.f32 %v563, %v573
        %s578 = sld [smem:[#allocation7 + $0xb]]
        %v579 = vstv %s578
        %v580 = vmul.f32 %v558, %v579
        %v581 = vmul.f32 %v559, %v579
        %584 = vrot.lane.b32.xlu0 %v580, 126
        %v585 = vpop.permute.xlu0 %584
        %586 = vrot.lane.b32.xlu0 %v581, 126
        %v587 = vpop.permute.xlu0 %586
        %v590 = vadd.f32 %v576, %v585
        %v591 = vadd.f32 %v577, %v587
        %s592 = sadd.s32 %s386, 24
        %s593 = scalar_lea.vmem [#allocation3], %s592
        %v594 = vld [vmem:[%s593] sm:$0xff]
        %v595 = vld [vmem:[%s593 + $0x8] sm:$0xff]
        %s596 = sld [smem:[#allocation7 + $0xc]]
        %v597 = vstv %s596
        %v598 = vmul.f32 %v594, %v597
        %v599 = vmul.f32 %v595, %v597
        %v600 = vadd.f32 %v590, %v598
        %v601 = vadd.f32 %v591, %v599
        %s602 = sld [smem:[#allocation7 + $0xd]]
        %v603 = vstv %s602
        %v604 = vmul.f32 %v594, %v603
        %v605 = vmul.f32 %v595, %v603
        %608 = vrot.lane.b32.xlu0 %v604, 127
        %v609 = vpop.permute.xlu0 %608
        %610 = vrot.lane.b32.xlu0 %v605, 127
        %v611 = vpop.permute.xlu0 %610
        %v614 = vadd.f32 %v600, %v609
        %v615 = vadd.f32 %v601, %v611
        %s616 = sld [smem:[#allocation7 + $0xe]]
        %v617 = vstv %s616
        %v618 = vmul.f32 %v594, %v617
        %v619 = vmul.f32 %v595, %v617
        %622 = vrot.lane.b32.xlu0 %v618, 126
        %v623 = vpop.permute.xlu0 %622
        %624 = vrot.lane.b32.xlu0 %v619, 126
        %v625 = vpop.permute.xlu0 %624
        %v628 = vadd.f32 %v614, %v623
        %v629 = vadd.f32 %v615, %v625
        %s630 = sadd.s32 %s424, 24
        %s631 = scalar_lea.vmem [#allocation3], %s630
        %v632 = vld [vmem:[%s631] sm:$0xff]
        %v633 = vld [vmem:[%s631 + $0x8] sm:$0xff]
        %s634 = sld [smem:[#allocation7 + $0xf]]
        %v635 = vstv %s634
        %v636 = vmul.f32 %v632, %v635
        %v637 = vmul.f32 %v633, %v635
        %v638 = vadd.f32 %v628, %v636
        %v639 = vadd.f32 %v629, %v637
        %s640 = sld [smem:[#allocation7 + $0x10]]
        %v641 = vstv %s640
        %v642 = vmul.f32 %v632, %v641
        %v643 = vmul.f32 %v633, %v641
        %646 = vrot.lane.b32.xlu0 %v642, 127
        %v647 = vpop.permute.xlu0 %646
        %648 = vrot.lane.b32.xlu0 %v643, 127
        %v649 = vpop.permute.xlu0 %648
        %v652 = vadd.f32 %v638, %v647
        %v653 = vadd.f32 %v639, %v649
        %s654 = sld [smem:[#allocation7 + $0x11]]
        %v655 = vstv %s654
        %v656 = vmul.f32 %v632, %v655
        %v657 = vmul.f32 %v633, %v655
        %660 = vrot.lane.b32.xlu0 %v656, 126
        %v661 = vpop.permute.xlu0 %660
        %662 = vrot.lane.b32.xlu0 %v657, 126
        %v663 = vpop.permute.xlu0 %662
        %v666 = vadd.f32 %v652, %v661
        %v667 = vadd.f32 %v653, %v663
        %668 = vst.msk [vmem:[#allocation2 + $0x1] sm:$0x1] %vm462, %v666
        %v670 = vrot.slane %v666, 5
        %v671 = vrot.slane %v670, 4
        %672 = vrot.lane.b32.xlu0 %v671, 16
        %v673 = vpop.permute.xlu0 %672
        %675 = vst.msk [vmem:[#allocation2 + $0x1] sm:$0x1] %vm470, %v673
        %v676 = vrot.slane %v666, 6
        %v677 = vrot.slane %v676, 4
        %678 = vrot.lane.b32.xlu0 %v677, 32
        %v679 = vpop.permute.xlu0 %678
        %681 = vst.msk [vmem:[#allocation2 + $0x1] sm:$0x1] %vm477, %v679
        %v682 = vrot.slane %v666, 7
        %v683 = vrot.slane %v682, 4
        %684 = vrot.lane.b32.xlu0 %v683, 48
        %v685 = vpop.permute.xlu0 %684
        %687 = vst.msk [vmem:[#allocation2 + $0x1] sm:$0x1] %vm484, %v685
        %v688 = vcombine.high %v666, %v666
        %689 = vrot.lane.b32.xlu0 %v688, 64
        %v690 = vpop.permute.xlu0 %689
        %692 = vst.msk [vmem:[#allocation2 + $0x1] sm:$0x1] %vm490, %v690
        %v693 = vrot.slane %v688, 5
        %v694 = vrot.slane %v693, 4
        %695 = vrot.lane.b32.xlu0 %v694, 80
        %v696 = vpop.permute.xlu0 %695
        %698 = vst.msk [vmem:[#allocation2 + $0x1] sm:$0x1] %vm497, %v696
        %v699 = vrot.slane %v688, 6
        %v700 = vrot.slane %v699, 4
        %701 = vrot.lane.b32.xlu0 %v700, 96
        %v702 = vpop.permute.xlu0 %701
        %704 = vst.msk [vmem:[#allocation2 + $0x1] sm:$0x1] %vm504, %v702
        %v705 = vrot.slane %v688, 7
        %v706 = vrot.slane %v705, 4
        %707 = vrot.lane.b32.xlu0 %v706, 112
        %v708 = vpop.permute.xlu0 %707
        %710 = vst.msk [vmem:[#allocation2 + $0x1] sm:$0x1] %vm511, %v708
        %711 = vst.msk [vmem:[#allocation2 + $0x5] sm:$0x1] %vm462, %v667
        %v713 = vrot.slane %v667, 5
        %v714 = vrot.slane %v713, 4
        %715 = vrot.lane.b32.xlu0 %v714, 16
        %v716 = vpop.permute.xlu0 %715
        %718 = vst.msk [vmem:[#allocation2 + $0x5] sm:$0x1] %vm470, %v716
        %v719 = vrot.slane %v667, 6
        %v720 = vrot.slane %v719, 4
        %721 = vrot.lane.b32.xlu0 %v720, 32
        %v722 = vpop.permute.xlu0 %721
        %724 = vst.msk [vmem:[#allocation2 + $0x5] sm:$0x1] %vm477, %v722
        %v725 = vrot.slane %v667, 7
        %v726 = vrot.slane %v725, 4
        %727 = vrot.lane.b32.xlu0 %v726, 48
        %v728 = vpop.permute.xlu0 %727
        %730 = vst.msk [vmem:[#allocation2 + $0x5] sm:$0x1] %vm484, %v728
        %v731 = vcombine.high %v667, %v667
        %732 = vrot.lane.b32.xlu0 %v731, 64
        %v733 = vpop.permute.xlu0 %732
        %735 = vst.msk [vmem:[#allocation2 + $0x5] sm:$0x1] %vm490, %v733
        %v736 = vrot.slane %v731, 5
        %v737 = vrot.slane %v736, 4
        %738 = vrot.lane.b32.xlu0 %v737, 80
        %v739 = vpop.permute.xlu0 %738
        %741 = vst.msk [vmem:[#allocation2 + $0x5] sm:$0x1] %vm497, %v739
        %v742 = vrot.slane %v731, 6
        %v743 = vrot.slane %v742, 4
        %744 = vrot.lane.b32.xlu0 %v743, 96
        %v745 = vpop.permute.xlu0 %744
        %747 = vst.msk [vmem:[#allocation2 + $0x5] sm:$0x1] %vm504, %v745
        %v748 = vrot.slane %v731, 7
        %v749 = vrot.slane %v748, 4
        %750 = vrot.lane.b32.xlu0 %v749, 112
        %v751 = vpop.permute.xlu0 %750
        %753 = vst.msk [vmem:[#allocation2 + $0x5] sm:$0x1] %vm511, %v751
        %s754 = sadd.s32 %s287, 48
        %s755 = scalar_lea.vmem [#allocation3], %s754
        %v756 = vld [vmem:[%s755] sm:$0xff]
        %v757 = vld [vmem:[%s755 + $0x8] sm:$0xff]
        %s758 = sld [smem:[#allocation7 + $0x12]]
        %v759 = vstv %s758
        %v760 = vmul.f32 %v756, %v759
        %v761 = vmul.f32 %v757, %v759
        %s762 = sld [smem:[#allocation7 + $0x13]]
        %v763 = vstv %s762
        %v764 = vmul.f32 %v756, %v763
        %v765 = vmul.f32 %v757, %v763
        %768 = vrot.lane.b32.xlu0 %v764, 127
        %v769 = vpop.permute.xlu0 %768
        %770 = vrot.lane.b32.xlu0 %v765, 127
        %v771 = vpop.permute.xlu0 %770
        %v774 = vadd.f32 %v760, %v769
        %v775 = vadd.f32 %v761, %v771
        %s776 = sld [smem:[#allocation7 + $0x14]]
        %v777 = vstv %s776
        %v778 = vmul.f32 %v756, %v777
        %v779 = vmul.f32 %v757, %v777
        %782 = vrot.lane.b32.xlu0 %v778, 126
        %v783 = vpop.permute.xlu0 %782
        %784 = vrot.lane.b32.xlu0 %v779, 126
        %v785 = vpop.permute.xlu0 %784
        %v788 = vadd.f32 %v774, %v783
        %v789 = vadd.f32 %v775, %v785
        %s790 = sadd.s32 %s386, 48
        %s791 = scalar_lea.vmem [#allocation3], %s790
        %v792 = vld [vmem:[%s791] sm:$0xff]
        %v793 = vld [vmem:[%s791 + $0x8] sm:$0xff]
        %s794 = sld [smem:[#allocation7 + $0x15]]
        %v795 = vstv %s794
        %v796 = vmul.f32 %v792, %v795
        %v797 = vmul.f32 %v793, %v795
        %v798 = vadd.f32 %v788, %v796
        %v799 = vadd.f32 %v789, %v797
        %s800 = sld [smem:[#allocation7 + $0x16]]
        %v801 = vstv %s800
        %v802 = vmul.f32 %v792, %v801
        %v803 = vmul.f32 %v793, %v801
        %806 = vrot.lane.b32.xlu0 %v802, 127
        %v807 = vpop.permute.xlu0 %806
        %808 = vrot.lane.b32.xlu0 %v803, 127
        %v809 = vpop.permute.xlu0 %808
        %v812 = vadd.f32 %v798, %v807
        %v813 = vadd.f32 %v799, %v809
        %s814 = sld [smem:[#allocation7 + $0x17]]
        %v815 = vstv %s814
        %v816 = vmul.f32 %v792, %v815
        %v817 = vmul.f32 %v793, %v815
        %820 = vrot.lane.b32.xlu0 %v816, 126
        %v821 = vpop.permute.xlu0 %820
        %822 = vrot.lane.b32.xlu0 %v817, 126
        %v823 = vpop.permute.xlu0 %822
        %v826 = vadd.f32 %v812, %v821
        %v827 = vadd.f32 %v813, %v823
        %s828 = sadd.s32 %s424, 48
        %s829 = scalar_lea.vmem [#allocation3], %s828
        %v830 = vld [vmem:[%s829] sm:$0xff]
        %v831 = vld [vmem:[%s829 + $0x8] sm:$0xff]
        %s832 = sld [smem:[#allocation7 + $0x18]]
        %v833 = vstv %s832
        %v834 = vmul.f32 %v830, %v833
        %v835 = vmul.f32 %v831, %v833
        %v836 = vadd.f32 %v826, %v834
        %v837 = vadd.f32 %v827, %v835
        %s838 = sld [smem:[#allocation7 + $0x19]]
        %v839 = vstv %s838
        %v840 = vmul.f32 %v830, %v839
        %v841 = vmul.f32 %v831, %v839
        %844 = vrot.lane.b32.xlu0 %v840, 127
        %v845 = vpop.permute.xlu0 %844
        %846 = vrot.lane.b32.xlu0 %v841, 127
        %v847 = vpop.permute.xlu0 %846
        %v850 = vadd.f32 %v836, %v845
        %v851 = vadd.f32 %v837, %v847
        %s852 = sld [smem:[#allocation7 + $0x1a]]
        %v853 = vstv %s852
        %v854 = vmul.f32 %v830, %v853
        %v855 = vmul.f32 %v831, %v853
        %858 = vrot.lane.b32.xlu0 %v854, 126
        %v859 = vpop.permute.xlu0 %858
        %860 = vrot.lane.b32.xlu0 %v855, 126
        %v861 = vpop.permute.xlu0 %860
        %v864 = vadd.f32 %v850, %v859
        %v865 = vadd.f32 %v851, %v861
        %866 = vst.msk [vmem:[#allocation2 + $0x2] sm:$0x1] %vm462, %v864
        %v868 = vrot.slane %v864, 5
        %v869 = vrot.slane %v868, 4
        %870 = vrot.lane.b32.xlu0 %v869, 16
        %v871 = vpop.permute.xlu0 %870
        %873 = vst.msk [vmem:[#allocation2 + $0x2] sm:$0x1] %vm470, %v871
        %v874 = vrot.slane %v864, 6
        %v875 = vrot.slane %v874, 4
        %876 = vrot.lane.b32.xlu0 %v875, 32
        %v877 = vpop.permute.xlu0 %876
        %879 = vst.msk [vmem:[#allocation2 + $0x2] sm:$0x1] %vm477, %v877
        %v880 = vrot.slane %v864, 7
        %v881 = vrot.slane %v880, 4
        %882 = vrot.lane.b32.xlu0 %v881, 48
        %v883 = vpop.permute.xlu0 %882
        %885 = vst.msk [vmem:[#allocation2 + $0x2] sm:$0x1] %vm484, %v883
        %v886 = vcombine.high %v864, %v864
        %887 = vrot.lane.b32.xlu0 %v886, 64
        %v888 = vpop.permute.xlu0 %887
        %890 = vst.msk [vmem:[#allocation2 + $0x2] sm:$0x1] %vm490, %v888
        %v891 = vrot.slane %v886, 5
        %v892 = vrot.slane %v891, 4
        %893 = vrot.lane.b32.xlu0 %v892, 80
        %v894 = vpop.permute.xlu0 %893
        %896 = vst.msk [vmem:[#allocation2 + $0x2] sm:$0x1] %vm497, %v894
        %v897 = vrot.slane %v886, 6
        %v898 = vrot.slane %v897, 4
        %899 = vrot.lane.b32.xlu0 %v898, 96
        %v900 = vpop.permute.xlu0 %899
        %902 = vst.msk [vmem:[#allocation2 + $0x2] sm:$0x1] %vm504, %v900
        %v903 = vrot.slane %v886, 7
        %v904 = vrot.slane %v903, 4
        %905 = vrot.lane.b32.xlu0 %v904, 112
        %v906 = vpop.permute.xlu0 %905
        %908 = vst.msk [vmem:[#allocation2 + $0x2] sm:$0x1] %vm511, %v906
        %909 = vst.msk [vmem:[#allocation2 + $0x6] sm:$0x1] %vm462, %v865
        %v911 = vrot.slane %v865, 5
        %v912 = vrot.slane %v911, 4
        %913 = vrot.lane.b32.xlu0 %v912, 16
        %v914 = vpop.permute.xlu0 %913
        %916 = vst.msk [vmem:[#allocation2 + $0x6] sm:$0x1] %vm470, %v914
        %v917 = vrot.slane %v865, 6
        %v918 = vrot.slane %v917, 4
        %919 = vrot.lane.b32.xlu0 %v918, 32
        %v920 = vpop.permute.xlu0 %919
        %922 = vst.msk [vmem:[#allocation2 + $0x6] sm:$0x1] %vm477, %v920
        %v923 = vrot.slane %v865, 7
        %v924 = vrot.slane %v923, 4
        %925 = vrot.lane.b32.xlu0 %v924, 48
        %v926 = vpop.permute.xlu0 %925
        %928 = vst.msk [vmem:[#allocation2 + $0x6] sm:$0x1] %vm484, %v926
        %v929 = vcombine.high %v865, %v865
        %930 = vrot.lane.b32.xlu0 %v929, 64
        %v931 = vpop.permute.xlu0 %930
        %933 = vst.msk [vmem:[#allocation2 + $0x6] sm:$0x1] %vm490, %v931
        %v934 = vrot.slane %v929, 5
        %v935 = vrot.slane %v934, 4
        %936 = vrot.lane.b32.xlu0 %v935, 80
        %v937 = vpop.permute.xlu0 %936
        %939 = vst.msk [vmem:[#allocation2 + $0x6] sm:$0x1] %vm497, %v937
        %v940 = vrot.slane %v929, 6
        %v941 = vrot.slane %v940, 4
        %942 = vrot.lane.b32.xlu0 %v941, 96
        %v943 = vpop.permute.xlu0 %942
        %945 = vst.msk [vmem:[#allocation2 + $0x6] sm:$0x1] %vm504, %v943
        %v946 = vrot.slane %v929, 7
        %v947 = vrot.slane %v946, 4
        %948 = vrot.lane.b32.xlu0 %v947, 112
        %v949 = vpop.permute.xlu0 %948
        %951 = vst.msk [vmem:[#allocation2 + $0x6] sm:$0x1] %vm511, %v949
        %s952 = sadd.s32 %s287, 72
        %s953 = scalar_lea.vmem [#allocation3], %s952
        %v954 = vld [vmem:[%s953] sm:$0xff]
        %v955 = vld [vmem:[%s953 + $0x8] sm:$0xff]
        %s956 = sld [smem:[#allocation7 + $0x1b]]
        %v957 = vstv %s956
        %v958 = vmul.f32 %v954, %v957
        %v959 = vmul.f32 %v955, %v957
        %s960 = sld [smem:[#allocation7 + $0x1c]]
        %v961 = vstv %s960
        %v962 = vmul.f32 %v954, %v961
        %v963 = vmul.f32 %v955, %v961
        %966 = vrot.lane.b32.xlu0 %v962, 127
        %v967 = vpop.permute.xlu0 %966
        %968 = vrot.lane.b32.xlu0 %v963, 127
        %v969 = vpop.permute.xlu0 %968
        %v972 = vadd.f32 %v958, %v967
        %v973 = vadd.f32 %v959, %v969
        %s974 = sld [smem:[#allocation7 + $0x1d]]
        %v975 = vstv %s974
        %v976 = vmul.f32 %v954, %v975
        %v977 = vmul.f32 %v955, %v975
        %980 = vrot.lane.b32.xlu0 %v976, 126
        %v981 = vpop.permute.xlu0 %980
        %982 = vrot.lane.b32.xlu0 %v977, 126
        %v983 = vpop.permute.xlu0 %982
        %v986 = vadd.f32 %v972, %v981
        %v987 = vadd.f32 %v973, %v983
        %s988 = sadd.s32 %s386, 72
        %s989 = scalar_lea.vmem [#allocation3], %s988
        %v990 = vld [vmem:[%s989] sm:$0xff]
        %v991 = vld [vmem:[%s989 + $0x8] sm:$0xff]
        %s992 = sld [smem:[#allocation7 + $0x1e]]
        %v993 = vstv %s992
        %v994 = vmul.f32 %v990, %v993
        %v995 = vmul.f32 %v991, %v993
        %v996 = vadd.f32 %v986, %v994
        %v997 = vadd.f32 %v987, %v995
        %s998 = sld [smem:[#allocation7 + $0x1f]]
        %v999 = vstv %s998
        %v1000 = vmul.f32 %v990, %v999
        %v1001 = vmul.f32 %v991, %v999
        %1004 = vrot.lane.b32.xlu0 %v1000, 127
        %v1005 = vpop.permute.xlu0 %1004
        %1006 = vrot.lane.b32.xlu0 %v1001, 127
        %v1007 = vpop.permute.xlu0 %1006
        %v1010 = vadd.f32 %v996, %v1005
        %v1011 = vadd.f32 %v997, %v1007
        %s1012 = sld [smem:[#allocation7 + $0x20]]
        %v1013 = vstv %s1012
        %v1014 = vmul.f32 %v990, %v1013
        %v1015 = vmul.f32 %v991, %v1013
        %1018 = vrot.lane.b32.xlu0 %v1014, 126
        %v1019 = vpop.permute.xlu0 %1018
        %1020 = vrot.lane.b32.xlu0 %v1015, 126
        %v1021 = vpop.permute.xlu0 %1020
        %v1024 = vadd.f32 %v1010, %v1019
        %v1025 = vadd.f32 %v1011, %v1021
        %s1026 = sadd.s32 %s424, 72
        %s1027 = scalar_lea.vmem [#allocation3], %s1026
        %v1028 = vld [vmem:[%s1027] sm:$0xff]
        %v1029 = vld [vmem:[%s1027 + $0x8] sm:$0xff]
        %s1030 = sld [smem:[#allocation7 + $0x21]]
        %v1031 = vstv %s1030
        %v1032 = vmul.f32 %v1028, %v1031
        %v1033 = vmul.f32 %v1029, %v1031
        %v1034 = vadd.f32 %v1024, %v1032
        %v1035 = vadd.f32 %v1025, %v1033
        %s1036 = sld [smem:[#allocation7 + $0x22]]
        %v1037 = vstv %s1036
        %v1038 = vmul.f32 %v1028, %v1037
        %v1039 = vmul.f32 %v1029, %v1037
        %1042 = vrot.lane.b32.xlu0 %v1038, 127
        %v1043 = vpop.permute.xlu0 %1042
        %1044 = vrot.lane.b32.xlu0 %v1039, 127
        %v1045 = vpop.permute.xlu0 %1044
        %v1048 = vadd.f32 %v1034, %v1043
        %v1049 = vadd.f32 %v1035, %v1045
        %s1050 = sld [smem:[#allocation7 + $0x23]]
        %v1051 = vstv %s1050
        %v1052 = vmul.f32 %v1028, %v1051
        %v1053 = vmul.f32 %v1029, %v1051
        %1056 = vrot.lane.b32.xlu0 %v1052, 126
        %v1057 = vpop.permute.xlu0 %1056
        %1058 = vrot.lane.b32.xlu0 %v1053, 126
        %v1059 = vpop.permute.xlu0 %1058
        %v1062 = vadd.f32 %v1048, %v1057
        %v1063 = vadd.f32 %v1049, %v1059
        %1064 = vst.msk [vmem:[#allocation2 + $0x3] sm:$0x1] %vm462, %v1062
        %v1066 = vrot.slane %v1062, 5
        %v1067 = vrot.slane %v1066, 4
        %1068 = vrot.lane.b32.xlu0 %v1067, 16
        %v1069 = vpop.permute.xlu0 %1068
        %1071 = vst.msk [vmem:[#allocation2 + $0x3] sm:$0x1] %vm470, %v1069
        %v1072 = vrot.slane %v1062, 6
        %v1073 = vrot.slane %v1072, 4
        %1074 = vrot.lane.b32.xlu0 %v1073, 32
        %v1075 = vpop.permute.xlu0 %1074
        %1077 = vst.msk [vmem:[#allocation2 + $0x3] sm:$0x1] %vm477, %v1075
        %v1078 = vrot.slane %v1062, 7
        %v1079 = vrot.slane %v1078, 4
        %1080 = vrot.lane.b32.xlu0 %v1079, 48
        %v1081 = vpop.permute.xlu0 %1080
        %1083 = vst.msk [vmem:[#allocation2 + $0x3] sm:$0x1] %vm484, %v1081
        %v1084 = vcombine.high %v1062, %v1062
        %1085 = vrot.lane.b32.xlu0 %v1084, 64
        %v1086 = vpop.permute.xlu0 %1085
        %1088 = vst.msk [vmem:[#allocation2 + $0x3] sm:$0x1] %vm490, %v1086
        %v1089 = vrot.slane %v1084, 5
        %v1090 = vrot.slane %v1089, 4
        %1091 = vrot.lane.b32.xlu0 %v1090, 80
        %v1092 = vpop.permute.xlu0 %1091
        %1094 = vst.msk [vmem:[#allocation2 + $0x3] sm:$0x1] %vm497, %v1092
        %v1095 = vrot.slane %v1084, 6
        %v1096 = vrot.slane %v1095, 4
        %1097 = vrot.lane.b32.xlu0 %v1096, 96
        %v1098 = vpop.permute.xlu0 %1097
        %1100 = vst.msk [vmem:[#allocation2 + $0x3] sm:$0x1] %vm504, %v1098
        %v1101 = vrot.slane %v1084, 7
        %v1102 = vrot.slane %v1101, 4
        %1103 = vrot.lane.b32.xlu0 %v1102, 112
        %v1104 = vpop.permute.xlu0 %1103
        %1106 = vst.msk [vmem:[#allocation2 + $0x3] sm:$0x1] %vm511, %v1104
        %1107 = vst.msk [vmem:[#allocation2 + $0x7] sm:$0x1] %vm462, %v1063
        %v1109 = vrot.slane %v1063, 5
        %v1110 = vrot.slane %v1109, 4
        %1111 = vrot.lane.b32.xlu0 %v1110, 16
        %v1112 = vpop.permute.xlu0 %1111
        %1114 = vst.msk [vmem:[#allocation2 + $0x7] sm:$0x1] %vm470, %v1112
        %v1115 = vrot.slane %v1063, 6
        %v1116 = vrot.slane %v1115, 4
        %1117 = vrot.lane.b32.xlu0 %v1116, 32
        %v1118 = vpop.permute.xlu0 %1117
        %1120 = vst.msk [vmem:[#allocation2 + $0x7] sm:$0x1] %vm477, %v1118
        %v1121 = vrot.slane %v1063, 7
        %v1122 = vrot.slane %v1121, 4
        %1123 = vrot.lane.b32.xlu0 %v1122, 48
        %v1124 = vpop.permute.xlu0 %1123
        %1126 = vst.msk [vmem:[#allocation2 + $0x7] sm:$0x1] %vm484, %v1124
        %v1127 = vcombine.high %v1063, %v1063
        %1128 = vrot.lane.b32.xlu0 %v1127, 64
        %v1129 = vpop.permute.xlu0 %1128
        %1131 = vst.msk [vmem:[#allocation2 + $0x7] sm:$0x1] %vm490, %v1129
        %v1132 = vrot.slane %v1127, 5
        %v1133 = vrot.slane %v1132, 4
        %1134 = vrot.lane.b32.xlu0 %v1133, 80
        %v1135 = vpop.permute.xlu0 %1134
        %1137 = vst.msk [vmem:[#allocation2 + $0x7] sm:$0x1] %vm497, %v1135
        %v1138 = vrot.slane %v1127, 6
        %v1139 = vrot.slane %v1138, 4
        %1140 = vrot.lane.b32.xlu0 %v1139, 96
        %v1141 = vpop.permute.xlu0 %1140
        %1143 = vst.msk [vmem:[#allocation2 + $0x7] sm:$0x1] %vm504, %v1141
        %v1144 = vrot.slane %v1127, 7
        %v1145 = vrot.slane %v1144, 4
        %1146 = vrot.lane.b32.xlu0 %v1145, 112
        %v1147 = vpop.permute.xlu0 %1146
        %1149 = vst.msk [vmem:[#allocation2 + $0x7] sm:$0x1] %vm511, %v1147
        %v1150 = vld [vmem:[#allocation2] ss:$4 sm:$0x3]
        %s1151 = scalar_lea.vmem [#allocation2], 1
        %v1152 = vld [vmem:[%s1151] ss:$4 sm:$0x3]
        %s1153 = scalar_lea.vmem [#allocation2], 2
        %v1154 = vld [vmem:[%s1153] ss:$4 sm:$0x3]
        %s1155 = scalar_lea.vmem [#allocation2], 3
        %v1156 = vld [vmem:[%s1155] ss:$4 sm:$0x3]
        %s1157 = sld [smem:[#allocation8]]
        %v1158 = vstv %s1157
        %v1159 = vmul.f32 %v1150, %v1158
        %s1160 = sld [smem:[#allocation8 + $0x1]]
        %v1161 = vstv %s1160
        %v1162 = vmul.f32 %v1152, %v1161
        %v1163 = vadd.f32 %v1159, %v1162
        %s1164 = sld [smem:[#allocation8 + $0x2]]
        %v1165 = vstv %s1164
        %v1166 = vmul.f32 %v1154, %v1165
        %v1167 = vadd.f32 %v1163, %v1166
        %s1168 = sld [smem:[#allocation8 + $0x3]]
        %v1169 = vstv %s1168
        %v1170 = vmul.f32 %v1156, %v1169
        %v1171 = vadd.f32 %v1167, %v1170
        %v1173 = vlaneseq
        %v1174 = vshrl.u32 %v1173, 7
        %v1175 = vsub.s32 0, %v1174
        %v1176 = vrot.slane %v1171, %v1175
        %v1177 = vlaneseq
        %v1178 = vshrl.u32 %v1177, 7
        %v1179 = vsub.s32 1, %v1178
        %v1180 = vrot.slane %v1171, %v1179
        %vm1183 = vcmask 1040384
        %v1184 = vsel %vm1183, %v1176, 0.0
        %v1185 = vsel %vm1183, %v1180, 0.0
        %v1186 = vadd.f32 %v1184, %v1185
        %1187 = vadd.xlane.f32.xlu0 %v1186
        %v1188 = vpop.xlane.xlu0 %1187
        %v1189 = vmul.f32 %v1188, 0.00390625
        %v1191 = vlaneseq
        %v1192 = vshrl.u32 %v1191, 7
        %v1193 = vsub.s32 0, %v1192
        %v1194 = vrot.slane %v1189, %v1193
        %v1196 = vsub.f32 %v1171, %v1194
        %v1197 = vmul.f32 %v1196, %v1196
        %v1199 = vlaneseq
        %v1200 = vshrl.u32 %v1199, 7
        %v1201 = vsub.s32 0, %v1200
        %v1202 = vrot.slane %v1197, %v1201
        %v1203 = vlaneseq
        %v1204 = vshrl.u32 %v1203, 7
        %v1205 = vsub.s32 1, %v1204
        %v1206 = vrot.slane %v1197, %v1205
        %v1209 = vsel %vm1183, %v1202, 0.0
        %v1210 = vsel %vm1183, %v1206, 0.0
        %v1211 = vadd.f32 %v1209, %v1210
        %1212 = vadd.xlane.f32.xlu0 %v1211
        %v1213 = vpop.xlane.xlu0 %1212
        %vm1214 = vcmask 0
        %1215 = vst.msk [vmem:[%s286] sm:$0x1] %vm1214, %v1188
        %vm1216 = vcmask 8200
        %1217 = vst.msk [vmem:[%s286] sm:$0x1] %vm1216, %v1213
        %v1218 = vpack.c.bf16 %v1176, %v1176
        %v1219 = vpack.c.bf16 %v1180, %v1180
        %v1222 = vunpack.c.l.b16 %v1218
        %v1223 = vunpack.c.l.b16 %v1219
        %v1224 = vpack.c.b16 %v1223, %v1222
        %vm1226 = vcmask 1040384
        %vm1227 = vsmask.f32 256
        %vm1228 = vmand %vm1226, %vm1227
        %vm1229 = vcmask 1044484
        %vm1230 = vsmask.f32 4352
        %vm1231 = vmand %vm1229, %vm1230
        %vm1232 = vmor %vm1231, %vm1228
        %v1233 = vld [vmem:[%s278] sm:$0x11]
        %v1234 = vsel %vm1232, %v1224, %v1233
        %1235 = vst [vmem:[%s278] sm:$0x11] %v1234
        %s1236 = sld [smem:[#allocation8 + $0x4]]
        %v1237 = vstv %s1236
        %v1238 = vmul.f32 %v1150, %v1237
        %s1239 = sld [smem:[#allocation8 + $0x5]]
        %v1240 = vstv %s1239
        %v1241 = vmul.f32 %v1152, %v1240
        %v1242 = vadd.f32 %v1238, %v1241
        %s1243 = sld [smem:[#allocation8 + $0x6]]
        %v1244 = vstv %s1243
        %v1245 = vmul.f32 %v1154, %v1244
        %v1246 = vadd.f32 %v1242, %v1245
        %s1247 = sld [smem:[#allocation8 + $0x7]]
        %v1248 = vstv %s1247
        %v1249 = vmul.f32 %v1156, %v1248
        %v1250 = vadd.f32 %v1246, %v1249
        %v1252 = vlaneseq
        %v1253 = vshrl.u32 %v1252, 7
        %v1254 = vsub.s32 0, %v1253
        %v1255 = vrot.slane %v1250, %v1254
        %v1256 = vlaneseq
        %v1257 = vshrl.u32 %v1256, 7
        %v1258 = vsub.s32 1, %v1257
        %v1259 = vrot.slane %v1250, %v1258
        %v1262 = vsel %vm1183, %v1255, 0.0
        %v1263 = vsel %vm1183, %v1259, 0.0
        %v1264 = vadd.f32 %v1262, %v1263
        %1265 = vadd.xlane.f32.xlu0 %v1264
        %v1266 = vpop.xlane.xlu0 %1265
        %v1267 = vmul.f32 %v1266, 0.00390625
        %v1269 = vlaneseq
        %v1270 = vshrl.u32 %v1269, 7
        %v1271 = vsub.s32 0, %v1270
        %v1272 = vrot.slane %v1267, %v1271
        %v1274 = vsub.f32 %v1250, %v1272
        %v1275 = vmul.f32 %v1274, %v1274
        %v1277 = vlaneseq
        %v1278 = vshrl.u32 %v1277, 7
        %v1279 = vsub.s32 0, %v1278
        %v1280 = vrot.slane %v1275, %v1279
        %v1281 = vlaneseq
        %v1282 = vshrl.u32 %v1281, 7
        %v1283 = vsub.s32 1, %v1282
        %v1284 = vrot.slane %v1275, %v1283
        %v1287 = vsel %vm1183, %v1280, 0.0
        %v1288 = vsel %vm1183, %v1284, 0.0
        %v1289 = vadd.f32 %v1287, %v1288
        %1290 = vadd.xlane.f32.xlu0 %v1289
        %v1291 = vpop.xlane.xlu0 %1290
        %1292 = vst.msk [vmem:[%s286 + $0x1] sm:$0x1] %vm1214, %v1266
        %1293 = vst.msk [vmem:[%s286 + $0x1] sm:$0x1] %vm1216, %v1291
        %v1294 = vpack.c.bf16 %v1255, %v1255
        %v1295 = vpack.c.bf16 %v1259, %v1259
        %v1298 = vunpack.c.l.b16 %v1294
        %v1299 = vunpack.c.l.b16 %v1295
        %v1300 = vpack.c.b16 %v1299, %v1298
        %v1302 = vshll.u32 %v1300, 16
        %vm1305 = vsmask.f32 7938
        %vm1306 = vmand %vm1226, %vm1305
        %vm1307 = vsmask.f32 7954
        %vm1308 = vmand %vm1229, %vm1307
        %vm1309 = vmor %vm1308, %vm1306
        %v1310 = vld [vmem:[%s278] sm:$0x11]
        %v1311 = vsel %vm1309, %v1302, %v1310
        %1312 = vst [vmem:[%s278] sm:$0x11] %v1311
        %s1313 = sld [smem:[#allocation8 + $0x8]]
        %v1314 = vstv %s1313
        %v1315 = vmul.f32 %v1150, %v1314
        %s1316 = sld [smem:[#allocation8 + $0x9]]
        %v1317 = vstv %s1316
        %v1318 = vmul.f32 %v1152, %v1317
        %v1319 = vadd.f32 %v1315, %v1318
        %s1320 = sld [smem:[#allocation8 + $0xa]]
        %v1321 = vstv %s1320
        %v1322 = vmul.f32 %v1154, %v1321
        %v1323 = vadd.f32 %v1319, %v1322
        %s1324 = sld [smem:[#allocation8 + $0xb]]
        %v1325 = vstv %s1324
        %v1326 = vmul.f32 %v1156, %v1325
        %v1327 = vadd.f32 %v1323, %v1326
        %v1329 = vlaneseq
        %v1330 = vshrl.u32 %v1329, 7
        %v1331 = vsub.s32 0, %v1330
        %v1332 = vrot.slane %v1327, %v1331
        %v1333 = vlaneseq
        %v1334 = vshrl.u32 %v1333, 7
        %v1335 = vsub.s32 1, %v1334
        %v1336 = vrot.slane %v1327, %v1335
        %v1339 = vsel %vm1183, %v1332, 0.0
        %v1340 = vsel %vm1183, %v1336, 0.0
        %v1341 = vadd.f32 %v1339, %v1340
        %1342 = vadd.xlane.f32.xlu0 %v1341
        %v1343 = vpop.xlane.xlu0 %1342
        %v1344 = vmul.f32 %v1343, 0.00390625
        %v1346 = vlaneseq
        %v1347 = vshrl.u32 %v1346, 7
        %v1348 = vsub.s32 0, %v1347
        %v1349 = vrot.slane %v1344, %v1348
        %v1351 = vsub.f32 %v1327, %v1349
        %v1352 = vmul.f32 %v1351, %v1351
        %v1354 = vlaneseq
        %v1355 = vshrl.u32 %v1354, 7
        %v1356 = vsub.s32 0, %v1355
        %v1357 = vrot.slane %v1352, %v1356
        %v1358 = vlaneseq
        %v1359 = vshrl.u32 %v1358, 7
        %v1360 = vsub.s32 1, %v1359
        %v1361 = vrot.slane %v1352, %v1360
        %v1364 = vsel %vm1183, %v1357, 0.0
        %v1365 = vsel %vm1183, %v1361, 0.0
        %v1366 = vadd.f32 %v1364, %v1365
        %1367 = vadd.xlane.f32.xlu0 %v1366
        %v1368 = vpop.xlane.xlu0 %1367
        %1369 = vst.msk [vmem:[%s286 + $0x2] sm:$0x1] %vm1214, %v1343
        %1370 = vst.msk [vmem:[%s286 + $0x2] sm:$0x1] %vm1216, %v1368
        %v1371 = vpack.c.bf16 %v1332, %v1332
        %v1372 = vpack.c.bf16 %v1336, %v1336
        %v1375 = vunpack.c.l.b16 %v1371
        %v1376 = vunpack.c.l.b16 %v1372
        %v1377 = vpack.c.b16 %v1376, %v1375
        %v1378 = vrot.slane %v1377, 7
        %vm1380 = vcmask 1041409
        %vm1381 = vsmask.f32 1280
        %vm1382 = vmand %vm1380, %vm1381
        %vm1383 = vcmask 1045509
        %vm1384 = vsmask.f32 5376
        %vm1385 = vmand %vm1383, %vm1384
        %vm1386 = vmor %vm1385, %vm1382
        %v1387 = vld [vmem:[%s278] sm:$0x22]
        %v1388 = vsel %vm1386, %v1378, %v1387
        %1389 = vst [vmem:[%s278] sm:$0x22] %v1388
        %s1390 = sld [smem:[#allocation8 + $0xc]]
        %v1391 = vstv %s1390
        %v1392 = vmul.f32 %v1150, %v1391
        %s1393 = sld [smem:[#allocation8 + $0xd]]
        %v1394 = vstv %s1393
        %v1395 = vmul.f32 %v1152, %v1394
        %v1396 = vadd.f32 %v1392, %v1395
        %s1397 = sld [smem:[#allocation8 + $0xe]]
        %v1398 = vstv %s1397
        %v1399 = vmul.f32 %v1154, %v1398
        %v1400 = vadd.f32 %v1396, %v1399
        %s1401 = sld [smem:[#allocation8 + $0xf]]
        %v1402 = vstv %s1401
        %v1403 = vmul.f32 %v1156, %v1402
        %v1404 = vadd.f32 %v1400, %v1403
        %v1406 = vlaneseq
        %v1407 = vshrl.u32 %v1406, 7
        %v1408 = vsub.s32 0, %v1407
        %v1409 = vrot.slane %v1404, %v1408
        %v1410 = vlaneseq
        %v1411 = vshrl.u32 %v1410, 7
        %v1412 = vsub.s32 1, %v1411
        %v1413 = vrot.slane %v1404, %v1412
        %v1416 = vsel %vm1183, %v1409, 0.0
        %v1417 = vsel %vm1183, %v1413, 0.0
        %v1418 = vadd.f32 %v1416, %v1417
        %1419 = vadd.xlane.f32.xlu0 %v1418
        %v1420 = vpop.xlane.xlu0 %1419
        %v1421 = vmul.f32 %v1420, 0.00390625
        %v1423 = vlaneseq
        %v1424 = vshrl.u32 %v1423, 7
        %v1425 = vsub.s32 0, %v1424
        %v1426 = vrot.slane %v1421, %v1425
        %v1428 = vsub.f32 %v1404, %v1426
        %v1429 = vmul.f32 %v1428, %v1428
        %v1431 = vlaneseq
        %v1432 = vshrl.u32 %v1431, 7
        %v1433 = vsub.s32 0, %v1432
        %v1434 = vrot.slane %v1429, %v1433
        %v1435 = vlaneseq
        %v1436 = vshrl.u32 %v1435, 7
        %v1437 = vsub.s32 1, %v1436
        %v1438 = vrot.slane %v1429, %v1437
        %v1441 = vsel %vm1183, %v1434, 0.0
        %v1442 = vsel %vm1183, %v1438, 0.0
        %v1443 = vadd.f32 %v1441, %v1442
        %1444 = vadd.xlane.f32.xlu0 %v1443
        %v1445 = vpop.xlane.xlu0 %1444
        %1446 = vst.msk [vmem:[%s286 + $0x3] sm:$0x1] %vm1214, %v1420
        %1447 = vst.msk [vmem:[%s286 + $0x3] sm:$0x1] %vm1216, %v1445
        %v1448 = vpack.c.bf16 %v1409, %v1409
        %v1449 = vpack.c.bf16 %v1413, %v1413
        %v1452 = vunpack.c.l.b16 %v1448
        %v1453 = vunpack.c.l.b16 %v1449
        %v1454 = vpack.c.b16 %v1453, %v1452
        %v1456 = vshll.u32 %v1454, 16
        %v1458 = vrot.slane %v1456, 7
        %vm1460 = vsmask.f32 7942
        %vm1461 = vmand %vm1380, %vm1460
        %vm1462 = vsmask.f32 7958
        %vm1463 = vmand %vm1383, %vm1462
        %vm1464 = vmor %vm1463, %vm1461
        %v1465 = vld [vmem:[%s278] sm:$0x22]
        %v1466 = vsel %vm1464, %v1458, %v1465
        %1467 = vst [vmem:[%s278] sm:$0x22] %v1466
        %s1468 = sld [smem:[#allocation8 + $0x10]]
        %v1469 = vstv %s1468
        %v1470 = vmul.f32 %v1150, %v1469
        %s1471 = sld [smem:[#allocation8 + $0x11]]
        %v1472 = vstv %s1471
        %v1473 = vmul.f32 %v1152, %v1472
        %v1474 = vadd.f32 %v1470, %v1473
        %s1475 = sld [smem:[#allocation8 + $0x12]]
        %v1476 = vstv %s1475
        %v1477 = vmul.f32 %v1154, %v1476
        %v1478 = vadd.f32 %v1474, %v1477
        %s1479 = sld [smem:[#allocation8 + $0x13]]
        %v1480 = vstv %s1479
        %v1481 = vmul.f32 %v1156, %v1480
        %v1482 = vadd.f32 %v1478, %v1481
        %v1484 = vlaneseq
        %v1485 = vshrl.u32 %v1484, 7
        %v1486 = vsub.s32 0, %v1485
        %v1487 = vrot.slane %v1482, %v1486
        %v1488 = vlaneseq
        %v1489 = vshrl.u32 %v1488, 7
        %v1490 = vsub.s32 1, %v1489
        %v1491 = vrot.slane %v1482, %v1490
        %v1494 = vsel %vm1183, %v1487, 0.0
        %v1495 = vsel %vm1183, %v1491, 0.0
        %v1496 = vadd.f32 %v1494, %v1495
        %1497 = vadd.xlane.f32.xlu0 %v1496
        %v1498 = vpop.xlane.xlu0 %1497
        %v1499 = vmul.f32 %v1498, 0.00390625
        %v1501 = vlaneseq
        %v1502 = vshrl.u32 %v1501, 7
        %v1503 = vsub.s32 0, %v1502
        %v1504 = vrot.slane %v1499, %v1503
        %v1506 = vsub.f32 %v1482, %v1504
        %v1507 = vmul.f32 %v1506, %v1506
        %v1509 = vlaneseq
        %v1510 = vshrl.u32 %v1509, 7
        %v1511 = vsub.s32 0, %v1510
        %v1512 = vrot.slane %v1507, %v1511
        %v1513 = vlaneseq
        %v1514 = vshrl.u32 %v1513, 7
        %v1515 = vsub.s32 1, %v1514
        %v1516 = vrot.slane %v1507, %v1515
        %v1519 = vsel %vm1183, %v1512, 0.0
        %v1520 = vsel %vm1183, %v1516, 0.0
        %v1521 = vadd.f32 %v1519, %v1520
        %1522 = vadd.xlane.f32.xlu0 %v1521
        %v1523 = vpop.xlane.xlu0 %1522
        %1524 = vst.msk [vmem:[%s286 + $0x4] sm:$0x1] %vm1214, %v1498
        %1525 = vst.msk [vmem:[%s286 + $0x4] sm:$0x1] %vm1216, %v1523
        %v1526 = vpack.c.bf16 %v1487, %v1487
        %v1527 = vpack.c.bf16 %v1491, %v1491
        %v1530 = vunpack.c.l.b16 %v1526
        %v1531 = vunpack.c.l.b16 %v1527
        %v1532 = vpack.c.b16 %v1531, %v1530
        %v1533 = vrot.slane %v1532, 6
        %vm1535 = vcmask 1042434
        %vm1536 = vsmask.f32 2304
        %vm1537 = vmand %vm1535, %vm1536
        %vm1538 = vcmask 1046534
        %vm1539 = vsmask.f32 6400
        %vm1540 = vmand %vm1538, %vm1539
        %vm1541 = vmor %vm1540, %vm1537
        %v1542 = vld [vmem:[%s278] sm:$0x44]
        %v1543 = vsel %vm1541, %v1533, %v1542
        %1544 = vst [vmem:[%s278] sm:$0x44] %v1543
        %s1545 = sld [smem:[#allocation8 + $0x14]]
        %v1546 = vstv %s1545
        %v1547 = vmul.f32 %v1150, %v1546
        %s1548 = sld [smem:[#allocation8 + $0x15]]
        %v1549 = vstv %s1548
        %v1550 = vmul.f32 %v1152, %v1549
        %v1551 = vadd.f32 %v1547, %v1550
        %s1552 = sld [smem:[#allocation8 + $0x16]]
        %v1553 = vstv %s1552
        %v1554 = vmul.f32 %v1154, %v1553
        %v1555 = vadd.f32 %v1551, %v1554
        %s1556 = sld [smem:[#allocation8 + $0x17]]
        %v1557 = vstv %s1556
        %v1558 = vmul.f32 %v1156, %v1557
        %v1559 = vadd.f32 %v1555, %v1558
        %v1561 = vlaneseq
        %v1562 = vshrl.u32 %v1561, 7
        %v1563 = vsub.s32 0, %v1562
        %v1564 = vrot.slane %v1559, %v1563
        %v1565 = vlaneseq
        %v1566 = vshrl.u32 %v1565, 7
        %v1567 = vsub.s32 1, %v1566
        %v1568 = vrot.slane %v1559, %v1567
        %v1571 = vsel %vm1183, %v1564, 0.0
        %v1572 = vsel %vm1183, %v1568, 0.0
        %v1573 = vadd.f32 %v1571, %v1572
        %1574 = vadd.xlane.f32.xlu0 %v1573
        %v1575 = vpop.xlane.xlu0 %1574
        %v1576 = vmul.f32 %v1575, 0.00390625
        %v1578 = vlaneseq
        %v1579 = vshrl.u32 %v1578, 7
        %v1580 = vsub.s32 0, %v1579
        %v1581 = vrot.slane %v1576, %v1580
        %v1583 = vsub.f32 %v1559, %v1581
        %v1584 = vmul.f32 %v1583, %v1583
        %v1586 = vlaneseq
        %v1587 = vshrl.u32 %v1586, 7
        %v1588 = vsub.s32 0, %v1587
        %v1589 = vrot.slane %v1584, %v1588
        %v1590 = vlaneseq
        %v1591 = vshrl.u32 %v1590, 7
        %v1592 = vsub.s32 1, %v1591
        %v1593 = vrot.slane %v1584, %v1592
        %v1596 = vsel %vm1183, %v1589, 0.0
        %v1597 = vsel %vm1183, %v1593, 0.0
        %v1598 = vadd.f32 %v1596, %v1597
        %1599 = vadd.xlane.f32.xlu0 %v1598
        %v1600 = vpop.xlane.xlu0 %1599
        %1601 = vst.msk [vmem:[%s286 + $0x5] sm:$0x1] %vm1214, %v1575
        %1602 = vst.msk [vmem:[%s286 + $0x5] sm:$0x1] %vm1216, %v1600
        %v1603 = vpack.c.bf16 %v1564, %v1564
        %v1604 = vpack.c.bf16 %v1568, %v1568
        %v1607 = vunpack.c.l.b16 %v1603
        %v1608 = vunpack.c.l.b16 %v1604
        %v1609 = vpack.c.b16 %v1608, %v1607
        %v1611 = vshll.u32 %v1609, 16
        %v1613 = vrot.slane %v1611, 6
        %vm1615 = vsmask.f32 7946
        %vm1616 = vmand %vm1535, %vm1615
        %vm1617 = vsmask.f32 7962
        %vm1618 = vmand %vm1538, %vm1617
        %vm1619 = vmor %vm1618, %vm1616
        %v1620 = vld [vmem:[%s278] sm:$0x44]
        %v1621 = vsel %vm1619, %v1613, %v1620
        %1622 = vst [vmem:[%s278] sm:$0x44] %v1621
        %s1623 = sld [smem:[#allocation8 + $0x18]]
        %v1624 = vstv %s1623
        %v1625 = vmul.f32 %v1150, %v1624
        %s1626 = sld [smem:[#allocation8 + $0x19]]
        %v1627 = vstv %s1626
        %v1628 = vmul.f32 %v1152, %v1627
        %v1629 = vadd.f32 %v1625, %v1628
        %s1630 = sld [smem:[#allocation8 + $0x1a]]
        %v1631 = vstv %s1630
        %v1632 = vmul.f32 %v1154, %v1631
        %v1633 = vadd.f32 %v1629, %v1632
        %s1634 = sld [smem:[#allocation8 + $0x1b]]
        %v1635 = vstv %s1634
        %v1636 = vmul.f32 %v1156, %v1635
        %v1637 = vadd.f32 %v1633, %v1636
        %v1639 = vlaneseq
        %v1640 = vshrl.u32 %v1639, 7
        %v1641 = vsub.s32 0, %v1640
        %v1642 = vrot.slane %v1637, %v1641
        %v1643 = vlaneseq
        %v1644 = vshrl.u32 %v1643, 7
        %v1645 = vsub.s32 1, %v1644
        %v1646 = vrot.slane %v1637, %v1645
        %v1649 = vsel %vm1183, %v1642, 0.0
        %v1650 = vsel %vm1183, %v1646, 0.0
        %v1651 = vadd.f32 %v1649, %v1650
        %1652 = vadd.xlane.f32.xlu0 %v1651
        %v1653 = vpop.xlane.xlu0 %1652
        %v1654 = vmul.f32 %v1653, 0.00390625
        %v1656 = vlaneseq
        %v1657 = vshrl.u32 %v1656, 7
        %v1658 = vsub.s32 0, %v1657
        %v1659 = vrot.slane %v1654, %v1658
        %v1661 = vsub.f32 %v1637, %v1659
        %v1662 = vmul.f32 %v1661, %v1661
        %v1664 = vlaneseq
        %v1665 = vshrl.u32 %v1664, 7
        %v1666 = vsub.s32 0, %v1665
        %v1667 = vrot.slane %v1662, %v1666
        %v1668 = vlaneseq
        %v1669 = vshrl.u32 %v1668, 7
        %v1670 = vsub.s32 1, %v1669
        %v1671 = vrot.slane %v1662, %v1670
        %v1674 = vsel %vm1183, %v1667, 0.0
        %v1675 = vsel %vm1183, %v1671, 0.0
        %v1676 = vadd.f32 %v1674, %v1675
        %1677 = vadd.xlane.f32.xlu0 %v1676
        %v1678 = vpop.xlane.xlu0 %1677
        %1679 = vst.msk [vmem:[%s286 + $0x6] sm:$0x1] %vm1214, %v1653
        %1680 = vst.msk [vmem:[%s286 + $0x6] sm:$0x1] %vm1216, %v1678
        %v1681 = vpack.c.bf16 %v1642, %v1642
        %v1682 = vpack.c.bf16 %v1646, %v1646
        %v1685 = vunpack.c.l.b16 %v1681
        %v1686 = vunpack.c.l.b16 %v1682
        %v1687 = vpack.c.b16 %v1686, %v1685
        %v1688 = vrot.slane %v1687, 5
        %vm1690 = vcmask 1043459
        %vm1691 = vsmask.f32 3328
        %vm1692 = vmand %vm1690, %vm1691
        %vm1693 = vcmask 1047559
        %vm1694 = vsmask.f32 7424
        %vm1695 = vmand %vm1693, %vm1694
        %vm1696 = vmor %vm1695, %vm1692
        %v1697 = vld [vmem:[%s278] sm:$0x88]
        %v1698 = vsel %vm1696, %v1688, %v1697
        %1699 = vst [vmem:[%s278] sm:$0x88] %v1698
        %s1700 = sld [smem:[#allocation8 + $0x1c]]
        %v1701 = vstv %s1700
        %v1702 = vmul.f32 %v1150, %v1701
        %s1703 = sld [smem:[#allocation8 + $0x1d]]
        %v1704 = vstv %s1703
        %v1705 = vmul.f32 %v1152, %v1704
        %v1706 = vadd.f32 %v1702, %v1705
        %s1707 = sld [smem:[#allocation8 + $0x1e]]
        %v1708 = vstv %s1707
        %v1709 = vmul.f32 %v1154, %v1708
        %v1710 = vadd.f32 %v1706, %v1709
        %s1711 = sld [smem:[#allocation8 + $0x1f]]
        %v1712 = vstv %s1711
        %v1713 = vmul.f32 %v1156, %v1712
        %v1714 = vadd.f32 %v1710, %v1713
        %v1716 = vlaneseq
        %v1717 = vshrl.u32 %v1716, 7
        %v1718 = vsub.s32 0, %v1717
        %v1719 = vrot.slane %v1714, %v1718
        %v1720 = vlaneseq
        %v1721 = vshrl.u32 %v1720, 7
        %v1722 = vsub.s32 1, %v1721
        %v1723 = vrot.slane %v1714, %v1722
        %v1726 = vsel %vm1183, %v1719, 0.0
        %v1727 = vsel %vm1183, %v1723, 0.0
        %v1728 = vadd.f32 %v1726, %v1727
        %1729 = vadd.xlane.f32.xlu0 %v1728
        %v1730 = vpop.xlane.xlu0 %1729
        %v1731 = vmul.f32 %v1730, 0.00390625
        %v1733 = vlaneseq
        %v1734 = vshrl.u32 %v1733, 7
        %v1735 = vsub.s32 0, %v1734
        %v1736 = vrot.slane %v1731, %v1735
        %v1738 = vsub.f32 %v1714, %v1736
        %v1739 = vmul.f32 %v1738, %v1738
        %v1741 = vlaneseq
        %v1742 = vshrl.u32 %v1741, 7
        %v1743 = vsub.s32 0, %v1742
        %v1744 = vrot.slane %v1739, %v1743
        %v1745 = vlaneseq
        %v1746 = vshrl.u32 %v1745, 7
        %v1747 = vsub.s32 1, %v1746
        %v1748 = vrot.slane %v1739, %v1747
        %v1751 = vsel %vm1183, %v1744, 0.0
        %v1752 = vsel %vm1183, %v1748, 0.0
        %v1753 = vadd.f32 %v1751, %v1752
        %1754 = vadd.xlane.f32.xlu0 %v1753
        %v1755 = vpop.xlane.xlu0 %1754
        %1756 = vst.msk [vmem:[%s286 + $0x7] sm:$0x1] %vm1214, %v1730
        %1757 = vst.msk [vmem:[%s286 + $0x7] sm:$0x1] %vm1216, %v1755
        %v1758 = vpack.c.bf16 %v1719, %v1719
        %v1759 = vpack.c.bf16 %v1723, %v1723
        %v1762 = vunpack.c.l.b16 %v1758
        %v1763 = vunpack.c.l.b16 %v1759
        %v1764 = vpack.c.b16 %v1763, %v1762
        %v1766 = vshll.u32 %v1764, 16
        %v1768 = vrot.slane %v1766, 5
        %vm1770 = vsmask.f32 7950
        %vm1771 = vmand %vm1690, %vm1770
        %vm1772 = vsmask.f32 7966
        %vm1773 = vmand %vm1693, %vm1772
        %vm1774 = vmor %vm1773, %vm1771
        %v1775 = vld [vmem:[%s278] sm:$0x88]
        %v1776 = vsel %vm1774, %v1768, %v1775
        %1777 = vst [vmem:[%s278] sm:$0x88] %v1776
        %s1778 = smul.u32 2, %s26
        %p1779 = scmp.lt.s32.totalorder %s25, 1
        %s1780 = scalar_select %p1779, %s25, 1
        %p1781 = scmp.lt.s32.totalorder %s1778, 1
        %s1782 = scalar_select %p1781, %s1778, 1
        %s1783 = smul.addr %s1780, 2
        %s1784 = sadd.s32 %s1782, %s1783
        %s1785 = smul.addr %s1784, 4
        %s1786 = scalar_lea.vmem %s3, %s1785
        %p1787 = scmp.lt.s32.totalorder %s25, 1
        %s1788 = scalar_select %p1787, %s25, 1
        %p1789 = scmp.lt.s32.totalorder %s26, 0
        %s1790 = scalar_select %p1789, %s26, 0
        %s1791 = sadd.s32 %s1790, %s1788
        %s1792 = smul.addr %s1791, 8
        %s1793 = scalar_lea.vmem %s4, %s1792
        // Predicated region
        $region45: #{depthwise_separable_conv2d.2} parent=31 // pred_check
          %p1794 = pneg %p121
        $region46: #{depthwise_separable_conv2d.2} parent=31 // pred_check_branch
          %1796 = sbr.rel (%p1794) target = $region48
        $region47: #{depthwise_separable_conv2d.2} parent=31 // pred_region
          %s1797 = smul.u32 2, %s26
        $region48: #{depthwise_separable_conv2d.2} parent=31 // pred_fallthru
          _
        // Predicated region
        $region49: #{depthwise_separable_conv2d.2} parent=31 // pred_check
          %p1798 = pneg %p149
        $region50: #{depthwise_separable_conv2d.2} parent=31 // pred_check_branch
          %1800 = sbr.rel (%p1798) target = $region52
        $region51: #{depthwise_separable_conv2d.2} parent=31 // pred_region
          _
        $region52: #{depthwise_separable_conv2d.2} parent=31 // pred_fallthru
          _
      $region32: #{depthwise_separable_conv2d.2} parent=5 // pred_fallthru
        _
      %p1801 = scmp.le.s32.totalorder 2, %s16
      // Predicated region
      $region53: #{depthwise_separable_conv2d.2} parent=5 // pred_check
        %p1802 = pneg %p1801
      $region54: #{depthwise_separable_conv2d.2} parent=5 // pred_check_branch
        %1804 = sbr.rel (%p1802) target = $region56
      $region55: #{depthwise_separable_conv2d.2} parent=5 // pred_region
        %s1805 = ssub.s32 %s16, 2
        // Predicated region
        $region57: #{depthwise_separable_conv2d.2} parent=55 // pred_check
          %p1806 = pneg %p127
        $region58: #{depthwise_separable_conv2d.2} parent=55 // pred_check_branch
          %1808 = sbr.rel (%p1806) target = $region60
        $region59: #{depthwise_separable_conv2d.2} parent=55 // pred_region
          %s1809 = smul.u32 2, %s28
          %p1810 = scmp.lt.s32.totalorder %s27, 1
          %s1811 = scalar_select %p1810, %s27, 1
          %p1812 = scmp.lt.s32.totalorder %s1809, 1
          %s1813 = scalar_select %p1812, %s1809, 1
          %s1814 = smul.addr %s1811, 2
          %s1815 = sadd.s32 %s1813, %s1814
          %s1816 = smul.addr %s1815, 4
          %s1817 = scalar_lea.vmem %s3, %s1816
        $region60: #{depthwise_separable_conv2d.2} parent=55 // pred_fallthru
          _
        // Predicated region
        $region61: #{depthwise_separable_conv2d.2} parent=55 // pred_check
          %p1818 = pneg %p155
        $region62: #{depthwise_separable_conv2d.2} parent=55 // pred_check_branch
          %1820 = sbr.rel (%p1818) target = $region64
        $region63: #{depthwise_separable_conv2d.2} parent=55 // pred_region
          %p1821 = scmp.lt.s32.totalorder %s27, 1
          %s1822 = scalar_select %p1821, %s27, 1
          %p1823 = scmp.lt.s32.totalorder %s28, 0
          %s1824 = scalar_select %p1823, %s28, 0
          %s1825 = sadd.s32 %s1824, %s1822
          %s1826 = smul.addr %s1825, 8
          %s1827 = scalar_lea.vmem %s4, %s1826
        $region64: #{depthwise_separable_conv2d.2} parent=55 // pred_fallthru
          _
      $region56: #{depthwise_separable_conv2d.2} parent=5 // pred_fallthru
        _
    $region6: #{depthwise_separable_conv2d.2} parent=1 // loop_footer
      %s20 = sadd.s32 1, %s16
    $region7: #{depthwise_separable_conv2d.2} parent=1 // loop_footer_branch
      %15 = sbr.rel target = $region3
    $region8: #{depthwise_separable_conv2d.2} parent=1 // loop_exit
      _
    %1828 = vsyncpa [#allocation5], 1
    %s1829 = scalar_lea.sflag [#allocation5], 1
    %1830 = vsyncpa %s1829, 1
    %1831 = vsyncpa [#allocation6], 1
    %s1832 = scalar_lea.sflag [#allocation6], 1
    %1833 = vsyncpa %s1832, 1
    %1834 = vsyncpa [#allocation9], 1

</llo_original>
